<compile_context>
chip_gen: v5e
topology: v5e:2x2
jax: 0.10.0
libtpu: 0.0.40
codegen_flags: <defaults>
</compile_context>

<pallas_src>
import functools

import jax
import jax.numpy as jnp
import numpy as np
from jax.experimental import pallas as pl
from jax.experimental.pallas import tpu as pltpu


NEG_LARGE = -1e30  # effectively -inf for the sparsemax key mask (avoids inf arithmetic)


def _hspa_kernel(x_ref, w_ref, b_ref, slope_ref, o_ref, emb_ref, *,
                 cr, hw, hw_pad, tq, res_scale, n_bisect, n_refine, mm_dtype):
    """One grid step = one batch element x one TQ-row slab of the (HW, HW) score.

    x_ref    : (C, HW_pad)     input block (resident across the q axis)
    w_ref    : (Ctot, C)       fused 1x1-conv weights [w_match1; w_match2; w_assembly]
    b_ref    : (Ctot, 1)       fused biases
    slope_ref: (Ctot, 1)       per-output-row PReLU slopes
    o_ref    : (C, TQ)         output slab (spatial columns q0:q0+TQ)
    emb_ref  : (Ctot, HW_pad)  VMEM scratch: fused embeddings for this batch element
    """
    qi = pl.program_id(1)

    # ---- fused 1x1 convs + per-row PReLU, once per batch element ----------------
    @pl.when(qi == 0)
    def _():
        v = jax.lax.dot_general(w_ref[...], x_ref[...],
                                (((1,), (0,)), ((), ())),
                                preferred_element_type=jnp.float32) + b_ref[...]
        emb_ref[...] = jnp.where(v >= 0.0, v, slope_ref[...] * v)

    q0 = pl.multiple_of(qi * tq, tq)
    e1 = emb_ref[:cr, pl.ds(q0, tq)]           # (Cr, TQ)      conv_match1, this slab
    e2 = emb_ref[cr:2 * cr, :]                 # (Cr, HW_pad)  conv_match2
    asm = emb_ref[2 * cr:, :]                  # (C,  HW_pad)  conv_assembly

    # score[q, k] = <e1[:, q], e2[:, k]>  -> (TQ, HW_pad)
    score = jax.lax.dot_general(e1.astype(mm_dtype), e2.astype(mm_dtype),
                                (((0,), (0,)), ((), ())),
                                preferred_element_type=jnp.float32)
    if hw < hw_pad:
        # mask the padded key columns out of the sparsemax
        col = jax.lax.broadcasted_iota(jnp.int32, (tq, hw_pad), 1)
        score = jnp.where(col < hw, score, NEG_LARGE)

    # ---- sparsemax along the key axis (SoftThresholdingOperation, topk >= HW) ----
    s = score - jnp.max(score, axis=-1, keepdims=True)        # row max -> 0
    # tau* solves sum_k relu(s_k - tau) = 1 and lies in [-1, 0): coarse bisection ...
    lo = jnp.full((tq, 1), -1.0, jnp.float32)
    hi = jnp.zeros((tq, 1), jnp.float32)
    for _ in range(n_bisect):                                  # static; tiny carries
        mid = 0.5 * (lo + hi)
        g = jnp.sum(jnp.maximum(s - mid, 0.0), axis=-1, keepdims=True)
        go_right = g > 1.0                                     # tau* > mid
        lo = jnp.where(go_right, mid, lo)
        hi = jnp.where(go_right, hi, mid)
    # ... then exact refinement on the identified support (Michelot / Newton step):
    #   tau <- tau + (sum relu(s - tau) - 1) / |{s > tau}|
    # (|{s > tau}| >= 1 always, since the row max 0 > tau < 0  ->  no div-by-zero)
    tau = 0.5 * (lo + hi)
    for _ in range(n_refine):
        g = jnp.sum(jnp.maximum(s - tau, 0.0), axis=-1, keepdims=True)
        cnt = jnp.sum(jnp.where(s > tau, 1.0, 0.0), axis=-1, keepdims=True)
        tau = tau + (g - 1.0) / cnt
    p = jnp.maximum(s - tau, 0.0)                              # (TQ, HW_pad)

    # ---- aggregation + residual: out[c, q] = rs * sum_k p[q, k]*asm[c, k] + x[c, q]
    agg = jax.lax.dot_general(asm.astype(mm_dtype), p.astype(mm_dtype),
                              (((1,), (1,)), ((), ())),
                              preferred_element_type=jnp.float32)        # (C, TQ)
    o_ref[...] = res_scale * agg + x_ref[:, pl.ds(q0, tq)]


def _round_up(x, m):
    return (x + m - 1) // m * m


def _vmem_capacity_bytes():
    """Generation-aware VMEM capacity (v5e/v6e: 128 MiB, v7x: 64 MiB)."""
    try:
        cap = int(pltpu.get_tpu_info().vmem_capacity_bytes)
        if cap > 0:
            return cap
    except Exception:
        pass
    return 128 * 1024 * 1024


def _pick_q_tile(hw_pad, c, ctot, budget_bytes):
    """Largest lane-dense q-tile whose per-step VMEM footprint fits the budget."""
    for tq in (512, 256, 128):
        if hw_pad % tq:
            continue
        fp = 4 * (4 * tq * hw_pad      # score/s, p + ~2 streaming temporaries
                  + ctot * hw_pad      # embedding scratch
                  + 2 * c * hw_pad     # double-buffered x block
                  + 2 * c * tq)        # double-buffered output block
        if fp <= budget_bytes:
            return tq
    return 128


@functools.partial(jax.jit,
                   static_argnames=("res_scale", "use_bf16", "n_bisect", "n_refine"))
def hspa_forward(x_nchw, params, res_scale=1.0, *, use_bf16=False,
                 n_bisect=13, n_refine=2):
    """Pallas HSPA forward.  x_nchw: (N, C, H, W) f32 -> (N, C, H, W) f32."""
    w1, b1, w2, b2, wa, ba, prelu_a = params
    N, C, H, W = x_nchw.shape
    HW = H * W
    HW_pad = max(_round_up(HW, 128), 128)
    Cr = w1.shape[0]
    Ctot = 2 * Cr + C

    # Fuse the three 1x1 convolutions ((out, in) weights) and the PReLU slopes.
    w_cat = jnp.concatenate([w1, w2, wa], axis=0).astype(jnp.float32)          # (Ctot, C)
    b_cat = jnp.concatenate([b1, b2, ba], axis=0).astype(jnp.float32)[:, None]  # (Ctot, 1)
    slope = jnp.concatenate([
        jnp.full((Cr,), prelu_a[0], jnp.float32),
        jnp.full((Cr,), prelu_a[1], jnp.float32),
        jnp.full((C,),  prelu_a[2], jnp.float32)], axis=0)[:, None]             # (Ctot, 1)

    # Channels -> sublanes, flattened spatial -> lanes; pad the spatial axis to a
    # multiple of 128 so the (.,HW) compute tiles and output stores are lane-dense.
    x = x_nchw.reshape(N, C, HW).astype(jnp.float32)
    if HW_pad != HW:
        x = jnp.pad(x, ((0, 0), (0, 0), (0, HW_pad - HW)))

    vmem_cap = _vmem_capacity_bytes()
    vmem_limit = min(vmem_cap, max(32 * 1024 * 1024, int(0.6 * vmem_cap)))
    tq = _pick_q_tile(HW_pad, C, Ctot, budget_bytes=int(0.8 * vmem_limit))

    grid = (N, HW_pad // tq)

    kernel = functools.partial(
        _hspa_kernel, cr=Cr, hw=HW, hw_pad=HW_pad, tq=tq,
        res_scale=float(res_scale), n_bisect=n_bisect, n_refine=n_refine,
        mm_dtype=jnp.bfloat16 if use_bf16 else jnp.float32)

    out = pl.pallas_call(
        kernel,
        out_shape=jax.ShapeDtypeStruct((N, C, HW_pad), jnp.float32),
        grid_spec=pltpu.PrefetchScalarGridSpec(
            num_scalar_prefetch=0,
            grid=grid,
            in_specs=[
                pl.BlockSpec((None, C, HW_pad), lambda n, q: (n, 0, 0)),  # x (resident over q)
                pl.BlockSpec((Ctot, C), lambda n, q: (0, 0)),             # fused weights
                pl.BlockSpec((Ctot, 1), lambda n, q: (0, 0)),             # fused biases
                pl.BlockSpec((Ctot, 1), lambda n, q: (0, 0)),             # PReLU slopes
            ],
            out_specs=pl.BlockSpec((None, C, tq), lambda n, q: (n, 0, q)),
            scratch_shapes=[pltpu.VMEM((Ctot, HW_pad), jnp.float32)],
        ),
        # x[n] is fully resident in VMEM before any out[n, :, tile] is written back,
        # so reusing the input HBM buffer for the output is safe.
        input_output_aliases={0: 0},
        compiler_params=pltpu.CompilerParams(
            dimension_semantics=("parallel", "arbitrary"),
            vmem_limit_bytes=vmem_limit,
        ),
    )(x, w_cat, b_cat, slope)

    return out[:, :, :HW].reshape(N, C, H, W)


# ---------------------- pure-JAX reference (for validation) ----------------------
def _sparsemax_ref(s, axis=-1):
    s = s - jnp.max(s, axis=axis, keepdims=True)
    z = jnp.flip(jnp.sort(s, axis=axis), axis=axis)          # descending
    c = jnp.cumsum(z, axis=axis) - 1.0
    L = s.shape[axis]
    shape = [1] * s.ndim
    shape[axis] = L
    r = jnp.arange(1, L + 1, dtype=s.dtype).reshape(shape)
    support = r * z > c
    k = jnp.sum(support, axis=axis, keepdims=True)
    tau = jnp.take_along_axis(c, k.astype(jnp.int32) - 1, axis=axis) / k.astype(s.dtype)
    return jnp.maximum(s - tau, 0.0)


def hspa_ref(x_nchw, params, res_scale=1.0):
    w1, b1, w2, b2, wa, ba, prelu_a = params
    N, C, H, W = x_nchw.shape
    x = x_nchw.reshape(N, C, H * W)

    def prelu(v, a):
        return jnp.where(v >= 0, v, a * v)

    e1 = prelu(jnp.einsum('rc,ncq->nrq', w1, x) + b1[None, :, None], prelu_a[0])
    e2 = prelu(jnp.einsum('rc,ncq->nrq', w2, x) + b2[None, :, None], prelu_a[1])
    asm = prelu(jnp.einsum('oc,ncq->noq', wa, x) + ba[None, :, None], prelu_a[2])
    score = jnp.einsum('nrq,nrk->nqk', e1, e2)
    p = _sparsemax_ref(score, axis=-1)
    out = jnp.einsum('nqk,nok->noq', p, asm)
    y = res_scale * out + x
    return y.reshape(N, C, H, W)


if __name__ == "__main__":
    # Small shapes consistent with the module: channel=16, reduction=2, H=W=8
    # (HW = 64 <= topk = 128, so the PyTorch reference takes the full-sort sparsemax path;
    #  for topk < HW its recursive escalation converges to the same full sparsemax anyway).
    N, C, H, W = 2, 16, 8, 8
    reduction = 2
    Cr = C // reduction
    res_scale = 1.0

    key = jax.random.PRNGKey(0)
    kx, k1, kb1, k2, kb2, ka, kba = jax.random.split(key, 7)

    x = jax.random.normal(kx, (N, C, H, W), dtype=jnp.float32)

    bound = 1.0 / np.sqrt(C)  # PyTorch Conv2d default init range (fan_in = C for 1x1)
    w1 = jax.random.uniform(k1, (Cr, C), jnp.float32, -bound, bound)
    b1 = jax.random.uniform(kb1, (Cr,), jnp.float32, -bound, bound)
    w2 = jax.random.uniform(k2, (Cr, C), jnp.float32, -bound, bound)
    b2 = jax.random.uniform(kb2, (Cr,), jnp.float32, -bound, bound)
    wa = jax.random.uniform(ka, (C, C), jnp.float32, -bound, bound)
    ba = jax.random.uniform(kba, (C,), jnp.float32, -bound, bound)
    prelu_a = jnp.array([0.25, 0.25, 0.25], dtype=jnp.float32)  # nn.PReLU() default

    params = (w1, b1, w2, b2, wa, ba, prelu_a)

    y = jax.block_until_ready(hspa_forward(x, params, res_scale=res_scale))
    y_ref = jax.block_until_ready(hspa_ref(x, params, res_scale=res_scale))
    np.testing.assert_allclose(np.asarray(y), np.asarray(y_ref), rtol=1e-3, atol=1e-3)

    print("KERNEL_OK")
</pallas_src>

<mosaic_0001>
module attributes {stable_mosaic.version = 11 : i64} {
  func.func @_hspa_kernel(%arg0: i32, %arg1: i32, %arg2: memref<1x16x128xf32, #tpu.memory_space<vmem>>, %arg3: memref<32x16xf32, #tpu.memory_space<vmem>>, %arg4: memref<32x1xf32, #tpu.memory_space<vmem>>, %arg5: memref<32x1xf32, #tpu.memory_space<vmem>>, %arg6: memref<1x16x128xf32, #tpu.memory_space<vmem>>, %arg7: memref<32x128xf32, #tpu.memory_space<vmem>>) attributes {dimension_semantics = [#tpu.dimension_semantics<parallel>, #tpu.dimension_semantics<arbitrary>], iteration_bounds = array<i64: 2, 1>, scalar_prefetch = 0 : i64, scratch_operands = 1 : i64, tpu.core_type = #tpu.core_type<tc>, window_params = [{transform_indices = @transform_0, window_bounds = array<i64: 1, 16, 128>}, {pipeline_mode = #tpu.pipeline_mode<synchronous>, transform_indices = @transform_1, window_bounds = array<i64: 32, 16>}, {pipeline_mode = #tpu.pipeline_mode<synchronous>, transform_indices = @transform_2, window_bounds = array<i64: 32, 1>}, {pipeline_mode = #tpu.pipeline_mode<synchronous>, transform_indices = @transform_3, window_bounds = array<i64: 32, 1>}, {transform_indices = @transform_4, window_bounds = array<i64: 1, 16, 128>}]} {
    %c0_i32 = arith.constant 0 : i32
    %0 = arith.cmpi eq, %arg1, %c0_i32 : i32
    %1 = arith.extui %0 : i1 to i32
    %c0_i32_0 = arith.constant 0 : i32
    %2 = arith.cmpi ne, %1, %c0_i32_0 : i32
    scf.if %2 {
      %c0_80 = arith.constant 0 : index
      %c0_81 = arith.constant 0 : index
      %241 = vector.load %arg3[%c0_80, %c0_81] : memref<32x16xf32, #tpu.memory_space<vmem>>, vector<32x16xf32>
      %c0_82 = arith.constant 0 : index
      %c0_83 = arith.constant 0 : index
      %c0_84 = arith.constant 0 : index
      %242 = vector.load %arg2[%c0_82, %c0_83, %c0_84] : memref<1x16x128xf32, #tpu.memory_space<vmem>>, vector<1x16x128xf32>
      %243 = vector.shape_cast %242 : vector<1x16x128xf32> to vector<16x128xf32>
      %cst_85 = arith.constant dense<0.000000e+00> : vector<32x128xf32>
      %244 = tpu.matmul %241, %243, %cst_85 {dimension_numbers = #tpu.dot_dimension_numbers<[1], [0], [0], [1], [0, 0, 1, 1], [], []>} : vector<32x16xf32>, vector<16x128xf32>, vector<32x128xf32> -> vector<32x128xf32>
      %c0_86 = arith.constant 0 : index
      %c0_87 = arith.constant 0 : index
      %245 = vector.load %arg4[%c0_86, %c0_87] : memref<32x1xf32, #tpu.memory_space<vmem>>, vector<32x1xf32>
      %246 = vector.broadcast %245 : vector<32x1xf32> to vector<32x128xf32>
      %247 = arith.addf %244, %246 : vector<32x128xf32>
      %cst_88 = arith.constant 0.000000e+00 : f32
      %248 = vector.broadcast %cst_88 : f32 to vector<32x128xf32>
      %249 = arith.cmpf oge, %247, %248 : vector<32x128xf32>
      %c0_89 = arith.constant 0 : index
      %c0_90 = arith.constant 0 : index
      %250 = vector.load %arg5[%c0_89, %c0_90] : memref<32x1xf32, #tpu.memory_space<vmem>>, vector<32x1xf32>
      %251 = vector.broadcast %250 : vector<32x1xf32> to vector<32x128xf32>
      %252 = arith.mulf %251, %247 : vector<32x128xf32>
      %253 = arith.select %249, %247, %252 : vector<32x128xi1>, vector<32x128xf32>
      %c0_91 = arith.constant 0 : index
      %c0_92 = arith.constant 0 : index
      %254 = vector.load %arg7[%c0_91, %c0_92] : memref<32x128xf32, #tpu.memory_space<vmem>>, vector<32x128xf32>
      tpu.vector_store %arg7[%c0_91, %c0_92], %253 {strides = array<i32>} : memref<32x128xf32, #tpu.memory_space<vmem>>, vector<32x128xf32>,
    } else {
    }
    %c128_i32 = arith.constant 128 : i32
    %3 = arith.muli %arg1, %c128_i32 : i32
    %4 = tpu.assume_multiple %3, 128 : i32
    %c0 = arith.constant 0 : index
    %5 = arith.index_cast %4 : i32 to index
    %6 = vector.load %arg7[%c0, %5] : memref<32x128xf32, #tpu.memory_space<vmem>>, vector<8x128xf32>
    %c8 = arith.constant 8 : index
    %c0_1 = arith.constant 0 : index
    %7 = vector.load %arg7[%c8, %c0_1] : memref<32x128xf32, #tpu.memory_space<vmem>>, vector<8x128xf32>
    %c16 = arith.constant 16 : index
    %c0_2 = arith.constant 0 : index
    %8 = vector.load %arg7[%c16, %c0_2] : memref<32x128xf32, #tpu.memory_space<vmem>>, vector<16x128xf32>
    %cst = arith.constant dense<0.000000e+00> : vector<128x128xf32>
    %9 = tpu.matmul %6, %7, %cst {dimension_numbers = #tpu.dot_dimension_numbers<[0], [0], [1], [1], [0, 1, 1, 1], [], []>} : vector<8x128xf32>, vector<8x128xf32>, vector<128x128xf32> -> vector<128x128xf32>
    %10 = tpu.iota {dimensions = array<i32: 1>} : vector<128x128xi32>
    %c64_i32 = arith.constant 64 : i32
    %11 = vector.broadcast %c64_i32 : i32 to vector<128x128xi32>
    %12 = arith.cmpi slt, %10, %11 : vector<128x128xi32>
    %cst_3 = arith.constant -1.000000e+30 : f32
    %13 = vector.broadcast %cst_3 : f32 to vector<128x128xf32>
    %14 = arith.select %12, %9, %13 : vector<128x128xi1>, vector<128x128xf32>
    %cst_4 = arith.constant dense<0xFF800000> : vector<128xf32>
    %15 = vector.multi_reduction <maximumf>, %14, %cst_4 [1] : vector<128x128xf32> to vector<128xf32>
    %16 = vector.shape_cast %15 : vector<128xf32> to vector<128x1xf32>
    %17 = vector.broadcast %16 : vector<128x1xf32> to vector<128x128xf32>
    %18 = arith.subf %14, %17 : vector<128x128xf32>
    %cst_5 = arith.constant -1.000000e+00 : f32
    %19 = vector.broadcast %cst_5 : f32 to vector<128x1xf32>
    %cst_6 = arith.constant 0.000000e+00 : f32
    %20 = vector.broadcast %cst_6 : f32 to vector<128x1xf32>
    %21 = arith.addf %19, %20 : vector<128x1xf32>
    %cst_7 = arith.constant 5.000000e-01 : f32
    %22 = vector.broadcast %cst_7 : f32 to vector<128x1xf32>
    %23 = arith.mulf %22, %21 : vector<128x1xf32>
    %24 = vector.broadcast %23 : vector<128x1xf32> to vector<128x128xf32>
    %25 = arith.subf %18, %24 : vector<128x128xf32>
    %cst_8 = arith.constant 0.000000e+00 : f32
    %26 = vector.broadcast %cst_8 : f32 to vector<128x128xf32>
    %27 = arith.maximumf %25, %26 : vector<128x128xf32>
    %cst_9 = arith.constant dense<0.000000e+00> : vector<128xf32>
    %28 = vector.multi_reduction <add>, %27, %cst_9 [1] : vector<128x128xf32> to vector<128xf32>
    %29 = vector.shape_cast %28 : vector<128xf32> to vector<128x1xf32>
    %cst_10 = arith.constant 1.000000e+00 : f32
    %30 = vector.broadcast %cst_10 : f32 to vector<128x1xf32>
    %31 = arith.cmpf ogt, %29, %30 : vector<128x1xf32>
    %32 = arith.select %31, %23, %19 : vector<128x1xi1>, vector<128x1xf32>
    %33 = arith.select %31, %20, %23 : vector<128x1xi1>, vector<128x1xf32>
    %34 = arith.addf %32, %33 : vector<128x1xf32>
    %cst_11 = arith.constant 5.000000e-01 : f32
    %35 = vector.broadcast %cst_11 : f32 to vector<128x1xf32>
    %36 = arith.mulf %35, %34 : vector<128x1xf32>
    %37 = vector.broadcast %36 : vector<128x1xf32> to vector<128x128xf32>
    %38 = arith.subf %18, %37 : vector<128x128xf32>
    %cst_12 = arith.constant 0.000000e+00 : f32
    %39 = vector.broadcast %cst_12 : f32 to vector<128x128xf32>
    %40 = arith.maximumf %38, %39 : vector<128x128xf32>
    %cst_13 = arith.constant dense<0.000000e+00> : vector<128xf32>
    %41 = vector.multi_reduction <add>, %40, %cst_13 [1] : vector<128x128xf32> to vector<128xf32>
    %42 = vector.shape_cast %41 : vector<128xf32> to vector<128x1xf32>
    %cst_14 = arith.constant 1.000000e+00 : f32
    %43 = vector.broadcast %cst_14 : f32 to vector<128x1xf32>
    %44 = arith.cmpf ogt, %42, %43 : vector<128x1xf32>
    %45 = arith.select %44, %36, %32 : vector<128x1xi1>, vector<128x1xf32>
    %46 = arith.select %44, %33, %36 : vector<128x1xi1>, vector<128x1xf32>
    %47 = arith.addf %45, %46 : vector<128x1xf32>
    %cst_15 = arith.constant 5.000000e-01 : f32
    %48 = vector.broadcast %cst_15 : f32 to vector<128x1xf32>
    %49 = arith.mulf %48, %47 : vector<128x1xf32>
    %50 = vector.broadcast %49 : vector<128x1xf32> to vector<128x128xf32>
    %51 = arith.subf %18, %50 : vector<128x128xf32>
    %cst_16 = arith.constant 0.000000e+00 : f32
    %52 = vector.broadcast %cst_16 : f32 to vector<128x128xf32>
    %53 = arith.maximumf %51, %52 : vector<128x128xf32>
    %cst_17 = arith.constant dense<0.000000e+00> : vector<128xf32>
    %54 = vector.multi_reduction <add>, %53, %cst_17 [1] : vector<128x128xf32> to vector<128xf32>
    %55 = vector.shape_cast %54 : vector<128xf32> to vector<128x1xf32>
    %cst_18 = arith.constant 1.000000e+00 : f32
    %56 = vector.broadcast %cst_18 : f32 to vector<128x1xf32>
    %57 = arith.cmpf ogt, %55, %56 : vector<128x1xf32>
    %58 = arith.select %57, %49, %45 : vector<128x1xi1>, vector<128x1xf32>
    %59 = arith.select %57, %46, %49 : vector<128x1xi1>, vector<128x1xf32>
    %60 = arith.addf %58, %59 : vector<128x1xf32>
    %cst_19 = arith.constant 5.000000e-01 : f32
    %61 = vector.broadcast %cst_19 : f32 to vector<128x1xf32>
    %62 = arith.mulf %61, %60 : vector<128x1xf32>
    %63 = vector.broadcast %62 : vector<128x1xf32> to vector<128x128xf32>
    %64 = arith.subf %18, %63 : vector<128x128xf32>
    %cst_20 = arith.constant 0.000000e+00 : f32
    %65 = vector.broadcast %cst_20 : f32 to vector<128x128xf32>
    %66 = arith.maximumf %64, %65 : vector<128x128xf32>
    %cst_21 = arith.constant dense<0.000000e+00> : vector<128xf32>
    %67 = vector.multi_reduction <add>, %66, %cst_21 [1] : vector<128x128xf32> to vector<128xf32>
    %68 = vector.shape_cast %67 : vector<128xf32> to vector<128x1xf32>
    %cst_22 = arith.constant 1.000000e+00 : f32
    %69 = vector.broadcast %cst_22 : f32 to vector<128x1xf32>
    %70 = arith.cmpf ogt, %68, %69 : vector<128x1xf32>
    %71 = arith.select %70, %62, %58 : vector<128x1xi1>, vector<128x1xf32>
    %72 = arith.select %70, %59, %62 : vector<128x1xi1>, vector<128x1xf32>
    %73 = arith.addf %71, %72 : vector<128x1xf32>
    %cst_23 = arith.constant 5.000000e-01 : f32
    %74 = vector.broadcast %cst_23 : f32 to vector<128x1xf32>
    %75 = arith.mulf %74, %73 : vector<128x1xf32>
    %76 = vector.broadcast %75 : vector<128x1xf32> to vector<128x128xf32>
    %77 = arith.subf %18, %76 : vector<128x128xf32>
    %cst_24 = arith.constant 0.000000e+00 : f32
    %78 = vector.broadcast %cst_24 : f32 to vector<128x128xf32>
    %79 = arith.maximumf %77, %78 : vector<128x128xf32>
    %cst_25 = arith.constant dense<0.000000e+00> : vector<128xf32>
    %80 = vector.multi_reduction <add>, %79, %cst_25 [1] : vector<128x128xf32> to vector<128xf32>
    %81 = vector.shape_cast %80 : vector<128xf32> to vector<128x1xf32>
    %cst_26 = arith.constant 1.000000e+00 : f32
    %82 = vector.broadcast %cst_26 : f32 to vector<128x1xf32>
    %83 = arith.cmpf ogt, %81, %82 : vector<128x1xf32>
    %84 = arith.select %83, %75, %71 : vector<128x1xi1>, vector<128x1xf32>
    %85 = arith.select %83, %72, %75 : vector<128x1xi1>, vector<128x1xf32>
    %86 = arith.addf %84, %85 : vector<128x1xf32>
    %cst_27 = arith.constant 5.000000e-01 : f32
    %87 = vector.broadcast %cst_27 : f32 to vector<128x1xf32>
    %88 = arith.mulf %87, %86 : vector<128x1xf32>
    %89 = vector.broadcast %88 : vector<128x1xf32> to vector<128x128xf32>
    %90 = arith.subf %18, %89 : vector<128x128xf32>
    %cst_28 = arith.constant 0.000000e+00 : f32
    %91 = vector.broadcast %cst_28 : f32 to vector<128x128xf32>
    %92 = arith.maximumf %90, %91 : vector<128x128xf32>
    %cst_29 = arith.constant dense<0.000000e+00> : vector<128xf32>
    %93 = vector.multi_reduction <add>, %92, %cst_29 [1] : vector<128x128xf32> to vector<128xf32>
    %94 = vector.shape_cast %93 : vector<128xf32> to vector<128x1xf32>
    %cst_30 = arith.constant 1.000000e+00 : f32
    %95 = vector.broadcast %cst_30 : f32 to vector<128x1xf32>
    %96 = arith.cmpf ogt, %94, %95 : vector<128x1xf32>
    %97 = arith.select %96, %88, %84 : vector<128x1xi1>, vector<128x1xf32>
    %98 = arith.select %96, %85, %88 : vector<128x1xi1>, vector<128x1xf32>
    %99 = arith.addf %97, %98 : vector<128x1xf32>
    %cst_31 = arith.constant 5.000000e-01 : f32
    %100 = vector.broadcast %cst_31 : f32 to vector<128x1xf32>
    %101 = arith.mulf %100, %99 : vector<128x1xf32>
    %102 = vector.broadcast %101 : vector<128x1xf32> to vector<128x128xf32>
    %103 = arith.subf %18, %102 : vector<128x128xf32>
    %cst_32 = arith.constant 0.000000e+00 : f32
    %104 = vector.broadcast %cst_32 : f32 to vector<128x128xf32>
    %105 = arith.maximumf %103, %104 : vector<128x128xf32>
    %cst_33 = arith.constant dense<0.000000e+00> : vector<128xf32>
    %106 = vector.multi_reduction <add>, %105, %cst_33 [1] : vector<128x128xf32> to vector<128xf32>
    %107 = vector.shape_cast %106 : vector<128xf32> to vector<128x1xf32>
    %cst_34 = arith.constant 1.000000e+00 : f32
    %108 = vector.broadcast %cst_34 : f32 to vector<128x1xf32>
    %109 = arith.cmpf ogt, %107, %108 : vector<128x1xf32>
    %110 = arith.select %109, %101, %97 : vector<128x1xi1>, vector<128x1xf32>
    %111 = arith.select %109, %98, %101 : vector<128x1xi1>, vector<128x1xf32>
    %112 = arith.addf %110, %111 : vector<128x1xf32>
    %cst_35 = arith.constant 5.000000e-01 : f32
    %113 = vector.broadcast %cst_35 : f32 to vector<128x1xf32>
    %114 = arith.mulf %113, %112 : vector<128x1xf32>
    %115 = vector.broadcast %114 : vector<128x1xf32> to vector<128x128xf32>
    %116 = arith.subf %18, %115 : vector<128x128xf32>
    %cst_36 = arith.constant 0.000000e+00 : f32
    %117 = vector.broadcast %cst_36 : f32 to vector<128x128xf32>
    %118 = arith.maximumf %116, %117 : vector<128x128xf32>
    %cst_37 = arith.constant dense<0.000000e+00> : vector<128xf32>
    %119 = vector.multi_reduction <add>, %118, %cst_37 [1] : vector<128x128xf32> to vector<128xf32>
    %120 = vector.shape_cast %119 : vector<128xf32> to vector<128x1xf32>
    %cst_38 = arith.constant 1.000000e+00 : f32
    %121 = vector.broadcast %cst_38 : f32 to vector<128x1xf32>
    %122 = arith.cmpf ogt, %120, %121 : vector<128x1xf32>
    %123 = arith.select %122, %114, %110 : vector<128x1xi1>, vector<128x1xf32>
    %124 = arith.select %122, %111, %114 : vector<128x1xi1>, vector<128x1xf32>
    %125 = arith.addf %123, %124 : vector<128x1xf32>
    %cst_39 = arith.constant 5.000000e-01 : f32
    %126 = vector.broadcast %cst_39 : f32 to vector<128x1xf32>
    %127 = arith.mulf %126, %125 : vector<128x1xf32>
    %128 = vector.broadcast %127 : vector<128x1xf32> to vector<128x128xf32>
    %129 = arith.subf %18, %128 : vector<128x128xf32>
    %cst_40 = arith.constant 0.000000e+00 : f32
    %130 = vector.broadcast %cst_40 : f32 to vector<128x128xf32>
    %131 = arith.maximumf %129, %130 : vector<128x128xf32>
    %cst_41 = arith.constant dense<0.000000e+00> : vector<128xf32>
    %132 = vector.multi_reduction <add>, %131, %cst_41 [1] : vector<128x128xf32> to vector<128xf32>
    %133 = vector.shape_cast %132 : vector<128xf32> to vector<128x1xf32>
    %cst_42 = arith.constant 1.000000e+00 : f32
    %134 = vector.broadcast %cst_42 : f32 to vector<128x1xf32>
    %135 = arith.cmpf ogt, %133, %134 : vector<128x1xf32>
    %136 = arith.select %135, %127, %123 : vector<128x1xi1>, vector<128x1xf32>
    %137 = arith.select %135, %124, %127 : vector<128x1xi1>, vector<128x1xf32>
    %138 = arith.addf %136, %137 : vector<128x1xf32>
    %cst_43 = arith.constant 5.000000e-01 : f32
    %139 = vector.broadcast %cst_43 : f32 to vector<128x1xf32>
    %140 = arith.mulf %139, %138 : vector<128x1xf32>
    %141 = vector.broadcast %140 : vector<128x1xf32> to vector<128x128xf32>
    %142 = arith.subf %18, %141 : vector<128x128xf32>
    %cst_44 = arith.constant 0.000000e+00 : f32
    %143 = vector.broadcast %cst_44 : f32 to vector<128x128xf32>
    %144 = arith.maximumf %142, %143 : vector<128x128xf32>
    %cst_45 = arith.constant dense<0.000000e+00> : vector<128xf32>
    %145 = vector.multi_reduction <add>, %144, %cst_45 [1] : vector<128x128xf32> to vector<128xf32>
    %146 = vector.shape_cast %145 : vector<128xf32> to vector<128x1xf32>
    %cst_46 = arith.constant 1.000000e+00 : f32
    %147 = vector.broadcast %cst_46 : f32 to vector<128x1xf32>
    %148 = arith.cmpf ogt, %146, %147 : vector<128x1xf32>
    %149 = arith.select %148, %140, %136 : vector<128x1xi1>, vector<128x1xf32>
    %150 = arith.select %148, %137, %140 : vector<128x1xi1>, vector<128x1xf32>
    %151 = arith.addf %149, %150 : vector<128x1xf32>
    %cst_47 = arith.constant 5.000000e-01 : f32
    %152 = vector.broadcast %cst_47 : f32 to vector<128x1xf32>
    %153 = arith.mulf %152, %151 : vector<128x1xf32>
    %154 = vector.broadcast %153 : vector<128x1xf32> to vector<128x128xf32>
    %155 = arith.subf %18, %154 : vector<128x128xf32>
    %cst_48 = arith.constant 0.000000e+00 : f32
    %156 = vector.broadcast %cst_48 : f32 to vector<128x128xf32>
    %157 = arith.maximumf %155, %156 : vector<128x128xf32>
    %cst_49 = arith.constant dense<0.000000e+00> : vector<128xf32>
    %158 = vector.multi_reduction <add>, %157, %cst_49 [1] : vector<128x128xf32> to vector<128xf32>
    %159 = vector.shape_cast %158 : vector<128xf32> to vector<128x1xf32>
    %cst_50 = arith.constant 1.000000e+00 : f32
    %160 = vector.broadcast %cst_50 : f32 to vector<128x1xf32>
    %161 = arith.cmpf ogt, %159, %160 : vector<128x1xf32>
    %162 = arith.select %161, %153, %149 : vector<128x1xi1>, vector<128x1xf32>
    %163 = arith.select %161, %150, %153 : vector<128x1xi1>, vector<128x1xf32>
    %164 = arith.addf %162, %163 : vector<128x1xf32>
    %cst_51 = arith.constant 5.000000e-01 : f32
    %165 = vector.broadcast %cst_51 : f32 to vector<128x1xf32>
    %166 = arith.mulf %165, %164 : vector<128x1xf32>
    %167 = vector.broadcast %166 : vector<128x1xf32> to vector<128x128xf32>
    %168 = arith.subf %18, %167 : vector<128x128xf32>
    %cst_52 = arith.constant 0.000000e+00 : f32
    %169 = vector.broadcast %cst_52 : f32 to vector<128x128xf32>
    %170 = arith.maximumf %168, %169 : vector<128x128xf32>
    %cst_53 = arith.constant dense<0.000000e+00> : vector<128xf32>
    %171 = vector.multi_reduction <add>, %170, %cst_53 [1] : vector<128x128xf32> to vector<128xf32>
    %172 = vector.shape_cast %171 : vector<128xf32> to vector<128x1xf32>
    %cst_54 = arith.constant 1.000000e+00 : f32
    %173 = vector.broadcast %cst_54 : f32 to vector<128x1xf32>
    %174 = arith.cmpf ogt, %172, %173 : vector<128x1xf32>
    %175 = arith.select %174, %166, %162 : vector<128x1xi1>, vector<128x1xf32>
    %176 = arith.select %174, %163, %166 : vector<128x1xi1>, vector<128x1xf32>
    %177 = arith.addf %175, %176 : vector<128x1xf32>
    %cst_55 = arith.constant 5.000000e-01 : f32
    %178 = vector.broadcast %cst_55 : f32 to vector<128x1xf32>
    %179 = arith.mulf %178, %177 : vector<128x1xf32>
    %180 = vector.broadcast %179 : vector<128x1xf32> to vector<128x128xf32>
    %181 = arith.subf %18, %180 : vector<128x128xf32>
    %cst_56 = arith.constant 0.000000e+00 : f32
    %182 = vector.broadcast %cst_56 : f32 to vector<128x128xf32>
    %183 = arith.maximumf %181, %182 : vector<128x128xf32>
    %cst_57 = arith.constant dense<0.000000e+00> : vector<128xf32>
    %184 = vector.multi_reduction <add>, %183, %cst_57 [1] : vector<128x128xf32> to vector<128xf32>
    %185 = vector.shape_cast %184 : vector<128xf32> to vector<128x1xf32>
    %cst_58 = arith.constant 1.000000e+00 : f32
    %186 = vector.broadcast %cst_58 : f32 to vector<128x1xf32>
    %187 = arith.cmpf ogt, %185, %186 : vector<128x1xf32>
    %188 = arith.select %187, %179, %175 : vector<128x1xi1>, vector<128x1xf32>
    %189 = arith.select %187, %176, %179 : vector<128x1xi1>, vector<128x1xf32>
    %190 = arith.addf %188, %189 : vector<128x1xf32>
    %cst_59 = arith.constant 5.000000e-01 : f32
    %191 = vector.broadcast %cst_59 : f32 to vector<128x1xf32>
    %192 = arith.mulf %191, %190 : vector<128x1xf32>
    %193 = vector.broadcast %192 : vector<128x1xf32> to vector<128x128xf32>
    %194 = arith.subf %18, %193 : vector<128x128xf32>
    %cst_60 = arith.constant 0.000000e+00 : f32
    %195 = vector.broadcast %cst_60 : f32 to vector<128x128xf32>
    %196 = arith.maximumf %194, %195 : vector<128x128xf32>
    %cst_61 = arith.constant dense<0.000000e+00> : vector<128xf32>
    %197 = vector.multi_reduction <add>, %196, %cst_61 [1] : vector<128x128xf32> to vector<128xf32>
    %198 = vector.shape_cast %197 : vector<128xf32> to vector<128x1xf32>
    %199 = vector.broadcast %192 : vector<128x1xf32> to vector<128x128xf32>
    %200 = arith.cmpf ogt, %18, %199 : vector<128x128xf32>
    %cst_62 = arith.constant 1.000000e+00 : f32
    %cst_63 = arith.constant 0.000000e+00 : f32
    %201 = vector.broadcast %cst_62 : f32 to vector<128x128xf32>
    %202 = vector.broadcast %cst_63 : f32 to vector<128x128xf32>
    %203 = arith.select %200, %201, %202 : vector<128x128xi1>, vector<128x128xf32>
    %cst_64 = arith.constant dense<0.000000e+00> : vector<128xf32>
    %204 = vector.multi_reduction <add>, %203, %cst_64 [1] : vector<128x128xf32> to vector<128xf32>
    %205 = vector.shape_cast %204 : vector<128xf32> to vector<128x1xf32>
    %cst_65 = arith.constant 1.000000e+00 : f32
    %206 = vector.broadcast %cst_65 : f32 to vector<128x1xf32>
    %207 = arith.subf %198, %206 : vector<128x1xf32>
    %208 = arith.divf %207, %205 : vector<128x1xf32>
    %209 = arith.addf %192, %208 : vector<128x1xf32>
    %210 = vector.broadcast %209 : vector<128x1xf32> to vector<128x128xf32>
    %211 = arith.subf %18, %210 : vector<128x128xf32>
    %cst_66 = arith.constant 0.000000e+00 : f32
    %212 = vector.broadcast %cst_66 : f32 to vector<128x128xf32>
    %213 = arith.maximumf %211, %212 : vector<128x128xf32>
    %cst_67 = arith.constant dense<0.000000e+00> : vector<128xf32>
    %214 = vector.multi_reduction <add>, %213, %cst_67 [1] : vector<128x128xf32> to vector<128xf32>
    %215 = vector.shape_cast %214 : vector<128xf32> to vector<128x1xf32>
    %216 = vector.broadcast %209 : vector<128x1xf32> to vector<128x128xf32>
    %217 = arith.cmpf ogt, %18, %216 : vector<128x128xf32>
    %cst_68 = arith.constant 1.000000e+00 : f32
    %cst_69 = arith.constant 0.000000e+00 : f32
    %218 = vector.broadcast %cst_68 : f32 to vector<128x128xf32>
    %219 = vector.broadcast %cst_69 : f32 to vector<128x128xf32>
    %220 = arith.select %217, %218, %219 : vector<128x128xi1>, vector<128x128xf32>
    %cst_70 = arith.constant dense<0.000000e+00> : vector<128xf32>
    %221 = vector.multi_reduction <add>, %220, %cst_70 [1] : vector<128x128xf32> to vector<128xf32>
    %222 = vector.shape_cast %221 : vector<128xf32> to vector<128x1xf32>
    %cst_71 = arith.constant 1.000000e+00 : f32
    %223 = vector.broadcast %cst_71 : f32 to vector<128x1xf32>
    %224 = arith.subf %215, %223 : vector<128x1xf32>
    %225 = arith.divf %224, %222 : vector<128x1xf32>
    %226 = arith.addf %209, %225 : vector<128x1xf32>
    %227 = vector.broadcast %226 : vector<128x1xf32> to vector<128x128xf32>
    %228 = arith.subf %18, %227 : vector<128x128xf32>
    %cst_72 = arith.constant 0.000000e+00 : f32
    %229 = vector.broadcast %cst_72 : f32 to vector<128x128xf32>
    %230 = arith.maximumf %228, %229 : vector<128x128xf32>
    %cst_73 = arith.constant dense<0.000000e+00> : vector<16x128xf32>
    %231 = tpu.matmul %8, %230, %cst_73 {dimension_numbers = #tpu.dot_dimension_numbers<[1], [1], [0], [0], [0, 0, 1, 0], [], []>} : vector<16x128xf32>, vector<128x128xf32>, vector<16x128xf32> -> vector<16x128xf32>
    %cst_74 = arith.constant 1.000000e+00 : f32
    %232 = vector.broadcast %cst_74 : f32 to vector<16x128xf32>
    %233 = arith.mulf %232, %231 : vector<16x128xf32>
    %c0_75 = arith.constant 0 : index
    %c0_76 = arith.constant 0 : index
    %234 = arith.index_cast %4 : i32 to index
    %235 = vector.load %arg2[%c0_75, %c0_76, %234] : memref<1x16x128xf32, #tpu.memory_space<vmem>>, vector<1x16x128xf32>
    %236 = vector.shape_cast %235 : vector<1x16x128xf32> to vector<16x128xf32>
    %237 = arith.addf %233, %236 : vector<16x128xf32>
    %c0_77 = arith.constant 0 : index
    %c0_78 = arith.constant 0 : index
    %c0_79 = arith.constant 0 : index
    %238 = vector.load %arg6[%c0_77, %c0_78, %c0_79] : memref<1x16x128xf32, #tpu.memory_space<vmem>>, vector<1x16x128xf32>
    %239 = vector.shape_cast %238 : vector<1x16x128xf32> to vector<16x128xf32>
    %240 = vector.shape_cast %237 : vector<16x128xf32> to vector<1x16x128xf32>
    tpu.vector_store %arg6[%c0_77, %c0_78, %c0_79], %240 {strides = array<i32>} : memref<1x16x128xf32, #tpu.memory_space<vmem>>, vector<1x16x128xf32>,
    return
  }
  func.func @transform_0(%arg0: i32, %arg1: i32) -> (i32, i32, i32) {
    %c0_i32 = arith.constant 0 : i32
    %c0_i32_0 = arith.constant 0 : i32
    %c0_i32_1 = arith.constant 0 : i32
    return %arg0, %c0_i32, %c0_i32_0 : i32, i32, i32
  }
  func.func @transform_1(%arg0: i32, %arg1: i32) -> (i32, i32) {
    %c0_i32 = arith.constant 0 : i32
    %c0_i32_0 = arith.constant 0 : i32
    %c0_i32_1 = arith.constant 0 : i32
    return %c0_i32, %c0_i32_0 : i32, i32
  }
  func.func @transform_2(%arg0: i32, %arg1: i32) -> (i32, i32) {
    %c0_i32 = arith.constant 0 : i32
    %c0_i32_0 = arith.constant 0 : i32
    %c0_i32_1 = arith.constant 0 : i32
    return %c0_i32, %c0_i32_0 : i32, i32
  }
  func.func @transform_3(%arg0: i32, %arg1: i32) -> (i32, i32) {
    %c0_i32 = arith.constant 0 : i32
    %c0_i32_0 = arith.constant 0 : i32
    %c0_i32_1 = arith.constant 0 : i32
    return %c0_i32, %c0_i32_0 : i32, i32
  }
  func.func @transform_4(%arg0: i32, %arg1: i32) -> (i32, i32, i32) {
    %c0_i32 = arith.constant 0 : i32
    %c0_i32_0 = arith.constant 0 : i32
    return %arg0, %c0_i32, %arg1 : i32, i32, i32
  }
}

</mosaic_0001>

<llo_original>
// kernel: hspa_forward.1
$region0: #{hspa_forward.1}
  #allocation0 [shape = 'u32[]', space=smem, size = 0x4, offset = 0x4, fixed_abs, tag = 'smem constant byte address 0x4 - core index']
  #allocation1 [shape = 'u32[72,128]{1,0:T(1,128)}', space=vmem, size = 0x9000, scoped, tag = 'internal scratch']
  #allocation2 [shape = 'f32[32,128]{1,0:T(8,128)}', space=vmem, size = 0x4000, scoped, tag = 'scratch operand']
  %s0 = inlined_call_operand.vmem [shape: f32[2,16,128], index: 0, kind: input, shape index: {}, may-alias: {0,4}]
  %s1 = inlined_call_operand.vmem [shape: f32[32,16], index: 1, kind: input, shape index: {}]
  %s2 = inlined_call_operand.vmem [shape: f32[32,1], index: 2, kind: input, shape index: {}]
  %s3 = inlined_call_operand.vmem [shape: f32[32,1], index: 3, kind: input, shape index: {}]
  %s4 = inlined_call_operand.vmem [shape: f32[2,16,128], index: 4, kind: output, shape index: {}, may-alias: {0,4}]
  %s5 = sld [smem:[#allocation0]]
  $region53: #{hspa_forward.1} parent=0
    _
  %s7 = ssub.s32 1, %s5
  %s8 = scalar_select 0, %s7, %s5
  loop: start=0, step=1, limit=4
  $region2: #{hspa_forward.1} parent=0 // loop_pre_header
    _
  $region3: #{hspa_forward.1} parent=0 // loop_header
    %s10 = sphi 0, %s14
    %p11 = scmp.ge.s32.totalorder %s10, 4
    %s17 = sphi 0, %s29
    %s18 = sphi 0, %s25
    %s19 = sphi 0, %s17
    %s20 = sphi 0, %s18
    %s21 = sphi 0, %s19
    %s22 = sphi 0, %s20
    %s32 = sphi 0, %s34
    %s35 = sphi 0, %s32
    %s36 = sphi 0, %s35
    %s52 = sphi 0, %s36
    %s56 = sphi 0, %s56
    %s58 = sphi 0, %s56
    %s59 = sphi 0, %s58
    %s73 = sphi 0, %s59
    %s77 = sphi 0, %s77
    %s79 = sphi 0, %s77
    %s80 = sphi 0, %s79
    %s94 = sphi 0, %s80
    %s98 = sphi 0, %s98
    %s100 = sphi 0, %s98
    %s101 = sphi 0, %s100
    %s115 = sphi 0, %s101
    %s123 = sphi 0, %s125
    %s126 = sphi 0, %s123
    %s127 = sphi 0, %s126
    %s143 = sphi 0, %s127
  $region4: #{hspa_forward.1} parent=0 // loop_header_branch
    %13 = sbr.rel (%p11) target = $region8
  $region5: #{hspa_forward.1} parent=0 // loop_body
    %s15 = ssub.s32 %s10, 1
    %s16 = ssub.s32 %s10, 2
    %s23 = sadd.s32 1, %s18
    %p24 = scmp.ge.s32.totalorder %s23, 1
    %s25 = scalar_select %p24, 0, %s23
    %s26 = sadd.s32 1, %s17
    %s27 = scalar_select %p24, %s26, %s17
    %p28 = scmp.ge.s32.totalorder %s27, 2
    %s29 = scalar_select %p28, 0, %s27
    %s30 = ssub.s32 %s17, %s29
    %p31 = scmp.eq.s32.totalorder %s30, 0
    %s33 = sadd.s32 %s32, 1
    %s34 = scalar_select %p31, %s32, %s33
    %p37 = pneg %p31
    %p38 = scmp.eq.s32.totalorder %s10, 1
    %p39 = por %p37, %p38
    %p40 = scmp.ne.s32.totalorder %s32, %s35
    %p41 = scmp.eq.s32.totalorder %s10, 0
    %p42 = por %p40, %p41
    %p43 = scmp.ne.s32.totalorder %s32, %s35
    %p44 = scmp.eq.s32.totalorder %s15, 1
    %p45 = por %p43, %p44
    %p46 = scmp.ne.s32.totalorder %s35, %s36
    %p47 = scmp.eq.s32.totalorder %s15, 0
    %p48 = por %p46, %p47
    %p49 = scmp.ne.s32.totalorder %s35, %s36
    %p50 = scmp.eq.s32.totalorder %s16, 1
    %p51 = por %p49, %p50
    %p53 = scmp.ne.s32.totalorder %s36, %s52
    %p54 = scmp.eq.s32.totalorder %s16, 0
    %p55 = por %p53, %p54
    %s57 = sadd.s32 %s56, 1
    %p60 = scmp.eq.s32.totalorder %s10, 1
    %p61 = scmp.ne.s32.totalorder %s56, %s58
    %p62 = scmp.eq.s32.totalorder %s10, 0
    %p63 = por %p61, %p62
    %p64 = scmp.ne.s32.totalorder %s56, %s58
    %p65 = scmp.eq.s32.totalorder %s15, 1
    %p66 = por %p64, %p65
    %p67 = scmp.ne.s32.totalorder %s58, %s59
    %p68 = scmp.eq.s32.totalorder %s15, 0
    %p69 = por %p67, %p68
    %p70 = scmp.ne.s32.totalorder %s58, %s59
    %p71 = scmp.eq.s32.totalorder %s16, 1
    %p72 = por %p70, %p71
    %p74 = scmp.ne.s32.totalorder %s59, %s73
    %p75 = scmp.eq.s32.totalorder %s16, 0
    %p76 = por %p74, %p75
    %s78 = sadd.s32 %s77, 1
    %p81 = scmp.eq.s32.totalorder %s10, 1
    %p82 = scmp.ne.s32.totalorder %s77, %s79
    %p83 = scmp.eq.s32.totalorder %s10, 0
    %p84 = por %p82, %p83
    %p85 = scmp.ne.s32.totalorder %s77, %s79
    %p86 = scmp.eq.s32.totalorder %s15, 1
    %p87 = por %p85, %p86
    %p88 = scmp.ne.s32.totalorder %s79, %s80
    %p89 = scmp.eq.s32.totalorder %s15, 0
    %p90 = por %p88, %p89
    %p91 = scmp.ne.s32.totalorder %s79, %s80
    %p92 = scmp.eq.s32.totalorder %s16, 1
    %p93 = por %p91, %p92
    %p95 = scmp.ne.s32.totalorder %s80, %s94
    %p96 = scmp.eq.s32.totalorder %s16, 0
    %p97 = por %p95, %p96
    %s99 = sadd.s32 %s98, 1
    %p102 = scmp.eq.s32.totalorder %s10, 1
    %p103 = scmp.ne.s32.totalorder %s98, %s100
    %p104 = scmp.eq.s32.totalorder %s10, 0
    %p105 = por %p103, %p104
    %p106 = scmp.ne.s32.totalorder %s98, %s100
    %p107 = scmp.eq.s32.totalorder %s15, 1
    %p108 = por %p106, %p107
    %p109 = scmp.ne.s32.totalorder %s100, %s101
    %p110 = scmp.eq.s32.totalorder %s15, 0
    %p111 = por %p109, %p110
    %p112 = scmp.ne.s32.totalorder %s100, %s101
    %p113 = scmp.eq.s32.totalorder %s16, 1
    %p114 = por %p112, %p113
    %p116 = scmp.ne.s32.totalorder %s101, %s115
    %p117 = scmp.eq.s32.totalorder %s16, 0
    %p118 = por %p116, %p117
    %s119 = ssub.s32 %s17, %s29
    %s120 = ssub.s32 %s18, %s25
    %s121 = sor.u32 %s119, %s120
    %p122 = scmp.eq.s32.totalorder %s121, 0
    %s124 = sadd.s32 %s123, 1
    %s125 = scalar_select %p122, %s123, %s124
    %p128 = pneg %p122
    %p129 = scmp.eq.s32.totalorder %s10, 1
    %p130 = por %p128, %p129
    %p131 = scmp.ne.s32.totalorder %s123, %s126
    %p132 = scmp.eq.s32.totalorder %s10, 0
    %p133 = por %p131, %p132
    %p134 = scmp.ne.s32.totalorder %s123, %s126
    %p135 = scmp.eq.s32.totalorder %s15, 1
    %p136 = por %p134, %p135
    %p137 = scmp.ne.s32.totalorder %s126, %s127
    %p138 = scmp.eq.s32.totalorder %s15, 0
    %p139 = por %p137, %p138
    %p140 = scmp.ne.s32.totalorder %s126, %s127
    %p141 = scmp.eq.s32.totalorder %s16, 1
    %p142 = por %p140, %p141
    %p144 = scmp.ne.s32.totalorder %s127, %s143
    %p145 = scmp.eq.s32.totalorder %s16, 0
    %p146 = por %p144, %p145
    %p147 = scmp.le.s32.totalorder 1, %s10
    %p148 = scmp.lt.s32.totalorder %s10, 3
    %p149 = pnand %p147, %p148
    %p150 = pneg %p149
    // Predicated region
    $region9: #{hspa_forward.1} parent=5 // pred_check
      _
    $region10: #{hspa_forward.1} parent=5 // pred_check_branch
      %152 = sbr.rel (%p149) target = $region12
    $region11: #{hspa_forward.1} parent=5 // pred_region
      %s153 = ssub.s32 %s10, 1
      // Predicated region
      $region13: #{hspa_forward.1} parent=11 // pred_check
        %p154 = pneg %p69
      $region14: #{hspa_forward.1} parent=11 // pred_check_branch
        %156 = sbr.rel (%p154) target = $region16
      $region15: #{hspa_forward.1} parent=11 // pred_region
        _
      $region16: #{hspa_forward.1} parent=11 // pred_fallthru
        _
      // Predicated region
      $region17: #{hspa_forward.1} parent=11 // pred_check
        %p157 = pneg %p90
      $region18: #{hspa_forward.1} parent=11 // pred_check_branch
        %159 = sbr.rel (%p157) target = $region20
      $region19: #{hspa_forward.1} parent=11 // pred_region
        _
      $region20: #{hspa_forward.1} parent=11 // pred_fallthru
        _
      // Predicated region
      $region21: #{hspa_forward.1} parent=11 // pred_check
        %p160 = pneg %p111
      $region22: #{hspa_forward.1} parent=11 // pred_check_branch
        %162 = sbr.rel (%p160) target = $region24
      $region23: #{hspa_forward.1} parent=11 // pred_region
        _
      $region24: #{hspa_forward.1} parent=11 // pred_fallthru
        _
    $region12: #{hspa_forward.1} parent=5 // pred_fallthru
      _
    %p163 = scmp.lt.s32.totalorder %s10, 2
    // Predicated region
    $region25: #{hspa_forward.1} parent=5 // pred_check
      %p164 = pneg %p163
    $region26: #{hspa_forward.1} parent=5 // pred_check_branch
      %166 = sbr.rel (%p164) target = $region28
    $region27: #{hspa_forward.1} parent=5 // pred_region
      // Predicated region
      $region29: #{hspa_forward.1} parent=27 // pred_check
        %p167 = pneg %p42
      $region30: #{hspa_forward.1} parent=27 // pred_check_branch
        %169 = sbr.rel (%p167) target = $region32
      $region31: #{hspa_forward.1} parent=27 // pred_region
        %p170 = scmp.lt.s32.totalorder %s17, 1
        %s171 = scalar_select %p170, %s17, 1
        %s172 = smul.addr %s171, 2
        %s173 = smul.addr %s172, 8
        %s174 = scalar_lea.vmem %s0, %s173
      $region32: #{hspa_forward.1} parent=27 // pred_fallthru
        _
    $region28: #{hspa_forward.1} parent=5 // pred_fallthru
      _
    %p175 = scmp.le.s32.totalorder 1, %s10
    %p176 = scmp.lt.s32.totalorder %s10, 3
    %p177 = pnand %p175, %p176
    %p178 = pneg %p177
    // Predicated region
    $region33: #{hspa_forward.1} parent=5 // pred_check
      _
    $region34: #{hspa_forward.1} parent=5 // pred_check_branch
      %180 = sbr.rel (%p177) target = $region36
    $region35: #{hspa_forward.1} parent=5 // pred_region
      %s181 = ssub.s32 %s10, 1
      %p182 = scmp.lt.s32.totalorder %s19, 1
      %s183 = scalar_select %p182, %s19, 1
      %s184 = smul.addr %s183, 2
      %s185 = smul.addr %s184, 8
      %s186 = scalar_lea.vmem %s0, %s185
      %p187 = pneg %p48
      %p188 = pneg %p45
      %p189 = pneg %p69
      %p190 = pneg %p66
      %p191 = pneg %p90
      %p192 = pneg %p87
      %p193 = pneg %p111
      %p194 = pneg %p108
      %p195 = pneg %p139
      %p196 = pneg %p136
      %p197 = scmp.lt.s32.totalorder %s19, 1
      %s198 = scalar_select %p197, %s19, 1
      %p199 = scmp.lt.s32.totalorder %s20, 0
      %s200 = scalar_select %p199, %s20, 0
      %s201 = smul.addr %s198, 2
      %s202 = sadd.s32 %s200, %s201
      %s203 = smul.addr %s202, 8
      %s204 = scalar_lea.vmem %s4, %s203
      %p205 = scmp.lt.s32.totalorder %s19, 1
      %s206 = scalar_select %p205, %s19, 1
      %s207 = smul.addr %s206, 2
      %s208 = smul.addr %s207, 8
      %s209 = scalar_lea.vmem %s0, %s208
      %p210 = scmp.lt.s32.totalorder %s19, 1
      %s211 = scalar_select %p210, %s19, 1
      %p212 = scmp.lt.s32.totalorder %s20, 0
      %s213 = scalar_select %p212, %s20, 0
      %s214 = smul.addr %s211, 2
      %s215 = sadd.s32 %s213, %s214
      %s216 = smul.addr %s215, 8
      %s217 = scalar_lea.vmem %s4, %s216
      %p218 = scmp.eq.s32.totalorder %s20, 0
      // Predicated region
      $region37: #{hspa_forward.1} parent=35 // pred_check
        %p219 = pneg %p218
      $region38: #{hspa_forward.1} parent=35 // pred_check_branch
        %221 = sbr.rel (%p219) target = $region40
      $region39: #{hspa_forward.1} parent=35 // pred_region
        %v222 = vld [vmem:[%s1] sm:$0xff]
        %v223 = vld [vmem:[%s1 + $0x8] sm:$0xff]
        %v224 = vld [vmem:[%s1 + $0x10] sm:$0xff]
        %v225 = vld [vmem:[%s1 + $0x18] sm:$0xff]
        %v226 = vld [vmem:[%s209] sm:$0xff]
        %v227 = vld [vmem:[%s209 + $0x8] sm:$0xff]
        %v228 = vld [vmem:[%s2] sm:$0xff]
        %v229 = vld [vmem:[%s2 + $0x8] sm:$0xff]
        %v230 = vld [vmem:[%s2 + $0x10] sm:$0xff]
        %v231 = vld [vmem:[%s2 + $0x18] sm:$0xff]
        %233 = vset.pattern.permute.xlu0 0
        %234 = vperm.xlu0 %233, %v228
        %v235 = vpop.permute.xlu0 %234
        %238 = vset.pattern.permute.xlu0 0
        %239 = vperm.xlu0 %238, %v229
        %v240 = vpop.permute.xlu0 %239
        %243 = vset.pattern.permute.xlu0 0
        %244 = vperm.xlu0 %243, %v230
        %v245 = vpop.permute.xlu0 %244
        %248 = vset.pattern.permute.xlu0 0
        %249 = vperm.xlu0 %248, %v231
        %v250 = vpop.permute.xlu0 %249
        %vm252 = vcmask 130048
        %v254 = vsel %vm252, %v222, 0
        %v257 = vsel %vm252, %v223, 0
        %v260 = vsel %vm252, %v224, 0
        %v263 = vsel %vm252, %v225, 0
        %265 = vmatpush.msra.mxu0 0.0
        %266 = vmatpush.msra.mxu0 0.0
        %267 = vmatpush.msra.mxu0 0.0
        %268 = vmatpush.msra.mxu0 0.0
        %269 = vmatpush.msra.mxu0 0.0
        %270 = vmatpush.msra.mxu0 0.0
        %271 = vmatpush.msra.mxu0 0.0
        %272 = vmatpush.msra.mxu0 0.0
        %273 = vmatpush.msra.mxu0 0.0
        %274 = vmatpush.msra.mxu0 0.0
        %275 = vmatpush.msra.mxu0 0.0
        %276 = vmatpush.msra.mxu0 0.0
        %277 = vmatpush.msra.mxu0 0.0
        %278 = vmatpush.msra.mxu0 0.0
        %279 = vmatpush.msra.mxu0 %v227
        %280 = vmatpush.msra.mxu0 %v226
        %281 = vmatmul.f32.gmra.mxu0 %v254
        %v282 = vpop.f32.mrf.mxu0
        %v283 = vadd.f32 %v235, %v282
        %284 = vmatmul.f32.gmra.mxu0 %v257
        %v285 = vpop.f32.mrf.mxu0
        %v286 = vadd.f32 %v240, %v285
        %287 = vmatmul.f32.gmra.mxu0 %v260
        %v288 = vpop.f32.mrf.mxu0
        %v289 = vadd.f32 %v245, %v288
        %290 = vmatmul.f32.gmra.mxu0 %v263
        %v291 = vpop.f32.mrf.mxu0
        %v292 = vadd.f32 %v250, %v291
        %293 = vdwg.mxu0
        %vm294 = vcmp.ge.f32.partialorder %v283, 0.0
        %vm295 = vcmp.ge.f32.partialorder %v286, 0.0
        %vm296 = vcmp.ge.f32.partialorder %v289, 0.0
        %vm297 = vcmp.ge.f32.partialorder %v292, 0.0
        %v298 = vld [vmem:[%s3] sm:$0xff]
        %v299 = vld [vmem:[%s3 + $0x8] sm:$0xff]
        %v300 = vld [vmem:[%s3 + $0x10] sm:$0xff]
        %v301 = vld [vmem:[%s3 + $0x18] sm:$0xff]
        %303 = vset.pattern.permute.xlu0 0
        %304 = vperm.xlu0 %303, %v298
        %v305 = vpop.permute.xlu0 %304
        %308 = vset.pattern.permute.xlu0 0
        %309 = vperm.xlu0 %308, %v299
        %v310 = vpop.permute.xlu0 %309
        %313 = vset.pattern.permute.xlu0 0
        %314 = vperm.xlu0 %313, %v300
        %v315 = vpop.permute.xlu0 %314
        %318 = vset.pattern.permute.xlu0 0
        %319 = vperm.xlu0 %318, %v301
        %v320 = vpop.permute.xlu0 %319
        %v322 = vmul.f32 %v305, %v283
        %v323 = vmul.f32 %v310, %v286
        %v324 = vmul.f32 %v315, %v289
        %v325 = vmul.f32 %v320, %v292
        %v326 = vsel %vm294, %v283, %v322
        %v327 = vsel %vm295, %v286, %v323
        %v328 = vsel %vm296, %v289, %v324
        %v329 = vsel %vm297, %v292, %v325
        %330 = vst [vmem:[#allocation2] sm:$0xff] %v326
        %331 = vst [vmem:[#allocation2 + $0x8] sm:$0xff] %v327
        %332 = vst [vmem:[#allocation2 + $0x10] sm:$0xff] %v328
        %333 = vst [vmem:[#allocation2 + $0x18] sm:$0xff] %v329
      $region40: #{hspa_forward.1} parent=35 // pred_fallthru
        _
      %s334 = smul.u32 %s20, 128
      %s335 = sshra.s32 %s334, 7
      %s336 = sand.u32 %s334, 127
      %s337 = scalar_lea.vmem [#allocation2], %s335
      %v338 = vld [vmem:[%s337] sm:$0xff]
      %v339 = vld [vmem:[#allocation2 + $0x8] sm:$0xff]
      %v340 = vld [vmem:[#allocation2 + $0x10] sm:$0xff]
      %v341 = vld [vmem:[#allocation2 + $0x18] sm:$0xff]
      %342 = vxpose.xlu0.b32.start [1/16] %v338, 128
      %343 = vxpose.xlu0.b32.cont [2/16] 0.0, 128
      %344 = vxpose.xlu0.b32.cont [3/16] 0.0, 128
      %345 = vxpose.xlu0.b32.cont [4/16] 0.0, 128
      %346 = vxpose.xlu0.b32.cont [5/16] 0.0, 128
      %347 = vxpose.xlu0.b32.cont [6/16] 0.0, 128
      %348 = vxpose.xlu0.b32.cont [7/16] 0.0, 128
      %349 = vxpose.xlu0.b32.cont [8/16] 0.0, 128
      %350 = vxpose.xlu0.b32.cont [9/16] 0.0, 128
      %351 = vxpose.xlu0.b32.cont [10/16] 0.0, 128
      %352 = vxpose.xlu0.b32.cont [11/16] 0.0, 128
      %353 = vxpose.xlu0.b32.cont [12/16] 0.0, 128
      %354 = vxpose.xlu0.b32.cont [13/16] 0.0, 128
      %355 = vxpose.xlu0.b32.cont [14/16] 0.0, 128
      %356 = vxpose.xlu0.b32.cont [15/16] 0.0, 128
      %357 = vxpose.xlu0.b32.end [16/16] 0.0, 128
      %v358 = vpop.trf.xlu0
      %v359 = vpop.trf.xlu0
      %v360 = vpop.trf.xlu0
      %v361 = vpop.trf.xlu0
      %v362 = vpop.trf.xlu0
      %v363 = vpop.trf.xlu0
      %v364 = vpop.trf.xlu0
      %v365 = vpop.trf.xlu0
      %v366 = vpop.trf.xlu0
      %v367 = vpop.trf.xlu0
      %v368 = vpop.trf.xlu0
      %v369 = vpop.trf.xlu0
      %v370 = vpop.trf.xlu0
      %v371 = vpop.trf.xlu0
      %v372 = vpop.trf.xlu0
      %v373 = vpop.trf.xlu0
      %vm374 = vcmask 64512
      %v376 = vsel %vm374, %v358, 0
      %v379 = vsel %vm374, %v359, 0
      %v382 = vsel %vm374, %v360, 0
      %v385 = vsel %vm374, %v361, 0
      %v388 = vsel %vm374, %v362, 0
      %v391 = vsel %vm374, %v363, 0
      %v394 = vsel %vm374, %v364, 0
      %v397 = vsel %vm374, %v365, 0
      %v400 = vsel %vm374, %v366, 0
      %v403 = vsel %vm374, %v367, 0
      %v406 = vsel %vm374, %v368, 0
      %v409 = vsel %vm374, %v369, 0
      %v412 = vsel %vm374, %v370, 0
      %v415 = vsel %vm374, %v371, 0
      %v418 = vsel %vm374, %v372, 0
      %v421 = vsel %vm374, %v373, 0
      %423 = vmatpush.msra.mxu0 0.0
      %424 = vmatpush.msra.mxu0 0.0
      %425 = vmatpush.msra.mxu0 0.0
      %426 = vmatpush.msra.mxu0 0.0
      %427 = vmatpush.msra.mxu0 0.0
      %428 = vmatpush.msra.mxu0 0.0
      %429 = vmatpush.msra.mxu0 0.0
      %430 = vmatpush.msra.mxu0 0.0
      %431 = vmatpush.msra.mxu0 0.0
      %432 = vmatpush.msra.mxu0 0.0
      %433 = vmatpush.msra.mxu0 0.0
      %434 = vmatpush.msra.mxu0 0.0
      %435 = vmatpush.msra.mxu0 0.0
      %436 = vmatpush.msra.mxu0 0.0
      %437 = vmatpush.msra.mxu0 0.0
      %438 = vmatpush.msra.mxu0 %v339
      %439 = vmatmul.f32.gmra.mxu0 %v376
      %v440 = vpop.f32.mrf.mxu0
      %v441 = vadd.f32 0.0, %v440
      %442 = vmatmul.f32.gmra.mxu0 %v379
      %v443 = vpop.f32.mrf.mxu0
      %v444 = vadd.f32 0.0, %v443
      %445 = vmatmul.f32.gmra.mxu0 %v382
      %v446 = vpop.f32.mrf.mxu0
      %v447 = vadd.f32 0.0, %v446
      %448 = vmatmul.f32.gmra.mxu0 %v385
      %v449 = vpop.f32.mrf.mxu0
      %v450 = vadd.f32 0.0, %v449
      %451 = vmatmul.f32.gmra.mxu0 %v388
      %v452 = vpop.f32.mrf.mxu0
      %v453 = vadd.f32 0.0, %v452
      %454 = vmatmul.f32.gmra.mxu0 %v391
      %v455 = vpop.f32.mrf.mxu0
      %v456 = vadd.f32 0.0, %v455
      %457 = vmatmul.f32.gmra.mxu0 %v394
      %v458 = vpop.f32.mrf.mxu0
      %v459 = vadd.f32 0.0, %v458
      %460 = vmatmul.f32.gmra.mxu0 %v397
      %v461 = vpop.f32.mrf.mxu0
      %v462 = vadd.f32 0.0, %v461
      %463 = vmatmul.f32.gmra.mxu0 %v400
      %v464 = vpop.f32.mrf.mxu0
      %v465 = vadd.f32 0.0, %v464
      %466 = vmatmul.f32.gmra.mxu0 %v403
      %v467 = vpop.f32.mrf.mxu0
      %v468 = vadd.f32 0.0, %v467
      %469 = vmatmul.f32.gmra.mxu0 %v406
      %v470 = vpop.f32.mrf.mxu0
      %v471 = vadd.f32 0.0, %v470
      %472 = vmatmul.f32.gmra.mxu0 %v409
      %v473 = vpop.f32.mrf.mxu0
      %v474 = vadd.f32 0.0, %v473
      %475 = vmatmul.f32.gmra.mxu0 %v412
      %v476 = vpop.f32.mrf.mxu0
      %v477 = vadd.f32 0.0, %v476
      %478 = vmatmul.f32.gmra.mxu0 %v415
      %v479 = vpop.f32.mrf.mxu0
      %v480 = vadd.f32 0.0, %v479
      %481 = vmatmul.f32.gmra.mxu0 %v418
      %v482 = vpop.f32.mrf.mxu0
      %v483 = vadd.f32 0.0, %v482
      %484 = vmatmul.f32.gmra.mxu0 %v421
      %v485 = vpop.f32.mrf.mxu0
      %v486 = vadd.f32 0.0, %v485
      %487 = vdwg.mxu0
      %v488 = vlaneseq
      %v489 = vand.u32 %v488, 127
      %vm490 = vcmp.lt.s32.totalorder %v489, 64
      %v491 = vsel %vm490, %v441, -1e+30
      %v492 = vsel %vm490, %v444, -1e+30
      %v493 = vsel %vm490, %v447, -1e+30
      %v494 = vsel %vm490, %v450, -1e+30
      %v495 = vsel %vm490, %v453, -1e+30
      %v496 = vsel %vm490, %v456, -1e+30
      %v497 = vsel %vm490, %v459, -1e+30
      %v498 = vsel %vm490, %v462, -1e+30
      %v499 = vsel %vm490, %v465, -1e+30
      %v500 = vsel %vm490, %v468, -1e+30
      %v501 = vsel %vm490, %v471, -1e+30
      %v502 = vsel %vm490, %v474, -1e+30
      %v503 = vsel %vm490, %v477, -1e+30
      %v504 = vsel %vm490, %v480, -1e+30
      %v505 = vsel %vm490, %v483, -1e+30
      %v506 = vsel %vm490, %v486, -1e+30
      %507 = vmax.xlane.f32.xlu0 %v491
      %v508 = vpop.xlane.xlu0 %507
      %509 = vmax.xlane.f32.xlu0 %v492
      %v510 = vpop.xlane.xlu0 %509
      %511 = vmax.xlane.f32.xlu0 %v493
      %v512 = vpop.xlane.xlu0 %511
      %513 = vmax.xlane.f32.xlu0 %v494
      %v514 = vpop.xlane.xlu0 %513
      %515 = vmax.xlane.f32.xlu0 %v495
      %v516 = vpop.xlane.xlu0 %515
      %517 = vmax.xlane.f32.xlu0 %v496
      %v518 = vpop.xlane.xlu0 %517
      %519 = vmax.xlane.f32.xlu0 %v497
      %v520 = vpop.xlane.xlu0 %519
      %521 = vmax.xlane.f32.xlu0 %v498
      %v522 = vpop.xlane.xlu0 %521
      %523 = vmax.xlane.f32.xlu0 %v499
      %v524 = vpop.xlane.xlu0 %523
      %525 = vmax.xlane.f32.xlu0 %v500
      %v526 = vpop.xlane.xlu0 %525
      %527 = vmax.xlane.f32.xlu0 %v501
      %v528 = vpop.xlane.xlu0 %527
      %529 = vmax.xlane.f32.xlu0 %v502
      %v530 = vpop.xlane.xlu0 %529
      %531 = vmax.xlane.f32.xlu0 %v503
      %v532 = vpop.xlane.xlu0 %531
      %533 = vmax.xlane.f32.xlu0 %v504
      %v534 = vpop.xlane.xlu0 %533
      %535 = vmax.xlane.f32.xlu0 %v505
      %v536 = vpop.xlane.xlu0 %535
      %537 = vmax.xlane.f32.xlu0 %v506
      %v538 = vpop.xlane.xlu0 %537
      %v539 = vsub.f32 %v491, %v508
      %v540 = vsub.f32 %v492, %v510
      %v541 = vsub.f32 %v493, %v512
      %v542 = vsub.f32 %v494, %v514
      %v543 = vsub.f32 %v495, %v516
      %v544 = vsub.f32 %v496, %v518
      %v545 = vsub.f32 %v497, %v520
      %v546 = vsub.f32 %v498, %v522
      %v547 = vsub.f32 %v499, %v524
      %v548 = vsub.f32 %v500, %v526
      %v549 = vsub.f32 %v501, %v528
      %v550 = vsub.f32 %v502, %v530
      %v551 = vsub.f32 %v503, %v532
      %v552 = vsub.f32 %v504, %v534
      %v553 = vsub.f32 %v505, %v536
      %v554 = vsub.f32 %v506, %v538
      %v555 = vsub.f32 %v539, -0.5
      %v556 = vsub.f32 %v540, -0.5
      %v557 = vsub.f32 %v541, -0.5
      %v558 = vsub.f32 %v542, -0.5
      %v559 = vsub.f32 %v543, -0.5
      %v560 = vsub.f32 %v544, -0.5
      %v561 = vsub.f32 %v545, -0.5
      %v562 = vsub.f32 %v546, -0.5
      %v563 = vsub.f32 %v547, -0.5
      %v564 = vsub.f32 %v548, -0.5
      %v565 = vsub.f32 %v549, -0.5
      %v566 = vsub.f32 %v550, -0.5
      %v567 = vsub.f32 %v551, -0.5
      %v568 = vsub.f32 %v552, -0.5
      %v569 = vsub.f32 %v553, -0.5
      %v570 = vsub.f32 %v554, -0.5
      %v571 = vmax.f32 %v555, 0.0
      %v572 = vmax.f32 %v556, 0.0
      %v573 = vmax.f32 %v557, 0.0
      %v574 = vmax.f32 %v558, 0.0
      %v575 = vmax.f32 %v559, 0.0
      %v576 = vmax.f32 %v560, 0.0
      %v577 = vmax.f32 %v561, 0.0
      %v578 = vmax.f32 %v562, 0.0
      %v579 = vmax.f32 %v563, 0.0
      %v580 = vmax.f32 %v564, 0.0
      %v581 = vmax.f32 %v565, 0.0
      %v582 = vmax.f32 %v566, 0.0
      %v583 = vmax.f32 %v567, 0.0
      %v584 = vmax.f32 %v568, 0.0
      %v585 = vmax.f32 %v569, 0.0
      %v586 = vmax.f32 %v570, 0.0
      %587 = vadd.xlane.f32.xlu0 %v571
      %v588 = vpop.xlane.xlu0 %587
      %589 = vadd.xlane.f32.xlu0 %v572
      %v590 = vpop.xlane.xlu0 %589
      %591 = vadd.xlane.f32.xlu0 %v573
      %v592 = vpop.xlane.xlu0 %591
      %593 = vadd.xlane.f32.xlu0 %v574
      %v594 = vpop.xlane.xlu0 %593
      %595 = vadd.xlane.f32.xlu0 %v575
      %v596 = vpop.xlane.xlu0 %595
      %597 = vadd.xlane.f32.xlu0 %v576
      %v598 = vpop.xlane.xlu0 %597
      %599 = vadd.xlane.f32.xlu0 %v577
      %v600 = vpop.xlane.xlu0 %599
      %601 = vadd.xlane.f32.xlu0 %v578
      %v602 = vpop.xlane.xlu0 %601
      %603 = vadd.xlane.f32.xlu0 %v579
      %v604 = vpop.xlane.xlu0 %603
      %605 = vadd.xlane.f32.xlu0 %v580
      %v606 = vpop.xlane.xlu0 %605
      %607 = vadd.xlane.f32.xlu0 %v581
      %v608 = vpop.xlane.xlu0 %607
      %609 = vadd.xlane.f32.xlu0 %v582
      %v610 = vpop.xlane.xlu0 %609
      %611 = vadd.xlane.f32.xlu0 %v583
      %v612 = vpop.xlane.xlu0 %611
      %613 = vadd.xlane.f32.xlu0 %v584
      %v614 = vpop.xlane.xlu0 %613
      %615 = vadd.xlane.f32.xlu0 %v585
      %v616 = vpop.xlane.xlu0 %615
      %617 = vadd.xlane.f32.xlu0 %v586
      %v618 = vpop.xlane.xlu0 %617
      %vm619 = vcmp.gt.f32.partialorder %v588, 1.0
      %vm620 = vcmp.gt.f32.partialorder %v590, 1.0
      %vm621 = vcmp.gt.f32.partialorder %v592, 1.0
      %vm622 = vcmp.gt.f32.partialorder %v594, 1.0
      %vm623 = vcmp.gt.f32.partialorder %v596, 1.0
      %vm624 = vcmp.gt.f32.partialorder %v598, 1.0
      %vm625 = vcmp.gt.f32.partialorder %v600, 1.0
      %vm626 = vcmp.gt.f32.partialorder %v602, 1.0
      %vm627 = vcmp.gt.f32.partialorder %v604, 1.0
      %vm628 = vcmp.gt.f32.partialorder %v606, 1.0
      %vm629 = vcmp.gt.f32.partialorder %v608, 1.0
      %vm630 = vcmp.gt.f32.partialorder %v610, 1.0
      %vm631 = vcmp.gt.f32.partialorder %v612, 1.0
      %vm632 = vcmp.gt.f32.partialorder %v614, 1.0
      %vm633 = vcmp.gt.f32.partialorder %v616, 1.0
      %vm634 = vcmp.gt.f32.partialorder %v618, 1.0
      %v635 = vsel %vm619, -0.5, -1.0
      %v636 = vsel %vm620, -0.5, -1.0
      %v637 = vsel %vm621, -0.5, -1.0
      %v638 = vsel %vm622, -0.5, -1.0
      %v639 = vsel %vm623, -0.5, -1.0
      %v640 = vsel %vm624, -0.5, -1.0
      %v641 = vsel %vm625, -0.5, -1.0
      %v642 = vsel %vm626, -0.5, -1.0
      %v643 = vsel %vm627, -0.5, -1.0
      %v644 = vsel %vm628, -0.5, -1.0
      %v645 = vsel %vm629, -0.5, -1.0
      %v646 = vsel %vm630, -0.5, -1.0
      %v647 = vsel %vm631, -0.5, -1.0
      %v648 = vsel %vm632, -0.5, -1.0
      %v649 = vsel %vm633, -0.5, -1.0
      %v650 = vsel %vm634, -0.5, -1.0
      %v651 = vsel %vm619, 0.0, -0.5
      %v652 = vsel %vm620, 0.0, -0.5
      %v653 = vsel %vm621, 0.0, -0.5
      %v654 = vsel %vm622, 0.0, -0.5
      %v655 = vsel %vm623, 0.0, -0.5
      %v656 = vsel %vm624, 0.0, -0.5
      %v657 = vsel %vm625, 0.0, -0.5
      %v658 = vsel %vm626, 0.0, -0.5
      %v659 = vsel %vm627, 0.0, -0.5
      %v660 = vsel %vm628, 0.0, -0.5
      %v661 = vsel %vm629, 0.0, -0.5
      %v662 = vsel %vm630, 0.0, -0.5
      %v663 = vsel %vm631, 0.0, -0.5
      %v664 = vsel %vm632, 0.0, -0.5
      %v665 = vsel %vm633, 0.0, -0.5
      %v666 = vsel %vm634, 0.0, -0.5
      %v667 = vadd.f32 %v635, %v651
      %v668 = vadd.f32 %v636, %v652
      %v669 = vadd.f32 %v637, %v653
      %v670 = vadd.f32 %v638, %v654
      %v671 = vadd.f32 %v639, %v655
      %v672 = vadd.f32 %v640, %v656
      %v673 = vadd.f32 %v641, %v657
      %v674 = vadd.f32 %v642, %v658
      %v675 = vadd.f32 %v643, %v659
      %v676 = vadd.f32 %v644, %v660
      %v677 = vadd.f32 %v645, %v661
      %v678 = vadd.f32 %v646, %v662
      %v679 = vadd.f32 %v647, %v663
      %v680 = vadd.f32 %v648, %v664
      %v681 = vadd.f32 %v649, %v665
      %v682 = vadd.f32 %v650, %v666
      %v683 = vmul.f32 %v667, 0.5
      %v684 = vmul.f32 %v668, 0.5
      %v685 = vmul.f32 %v669, 0.5
      %v686 = vmul.f32 %v670, 0.5
      %v687 = vmul.f32 %v671, 0.5
      %v688 = vmul.f32 %v672, 0.5
      %v689 = vmul.f32 %v673, 0.5
      %v690 = vmul.f32 %v674, 0.5
      %v691 = vmul.f32 %v675, 0.5
      %v692 = vmul.f32 %v676, 0.5
      %v693 = vmul.f32 %v677, 0.5
      %v694 = vmul.f32 %v678, 0.5
      %v695 = vmul.f32 %v679, 0.5
      %v696 = vmul.f32 %v680, 0.5
      %v697 = vmul.f32 %v681, 0.5
      %v698 = vmul.f32 %v682, 0.5
      %v699 = vsub.f32 %v539, %v683
      %v700 = vsub.f32 %v540, %v684
      %v701 = vsub.f32 %v541, %v685
      %v702 = vsub.f32 %v542, %v686
      %v703 = vsub.f32 %v543, %v687
      %v704 = vsub.f32 %v544, %v688
      %v705 = vsub.f32 %v545, %v689
      %v706 = vsub.f32 %v546, %v690
      %v707 = vsub.f32 %v547, %v691
      %v708 = vsub.f32 %v548, %v692
      %v709 = vsub.f32 %v549, %v693
      %v710 = vsub.f32 %v550, %v694
      %v711 = vsub.f32 %v551, %v695
      %v712 = vsub.f32 %v552, %v696
      %v713 = vsub.f32 %v553, %v697
      %v714 = vsub.f32 %v554, %v698
      %v715 = vmax.f32 %v699, 0.0
      %v716 = vmax.f32 %v700, 0.0
      %v717 = vmax.f32 %v701, 0.0
      %v718 = vmax.f32 %v702, 0.0
      %v719 = vmax.f32 %v703, 0.0
      %v720 = vmax.f32 %v704, 0.0
      %v721 = vmax.f32 %v705, 0.0
      %v722 = vmax.f32 %v706, 0.0
      %v723 = vmax.f32 %v707, 0.0
      %v724 = vmax.f32 %v708, 0.0
      %v725 = vmax.f32 %v709, 0.0
      %v726 = vmax.f32 %v710, 0.0
      %v727 = vmax.f32 %v711, 0.0
      %v728 = vmax.f32 %v712, 0.0
      %v729 = vmax.f32 %v713, 0.0
      %v730 = vmax.f32 %v714, 0.0
      %731 = vadd.xlane.f32.xlu0 %v715
      %v732 = vpop.xlane.xlu0 %731
      %733 = vadd.xlane.f32.xlu0 %v716
      %v734 = vpop.xlane.xlu0 %733
      %735 = vadd.xlane.f32.xlu0 %v717
      %v736 = vpop.xlane.xlu0 %735
      %737 = vadd.xlane.f32.xlu0 %v718
      %v738 = vpop.xlane.xlu0 %737
      %739 = vadd.xlane.f32.xlu0 %v719
      %v740 = vpop.xlane.xlu0 %739
      %741 = vadd.xlane.f32.xlu0 %v720
      %v742 = vpop.xlane.xlu0 %741
      %743 = vadd.xlane.f32.xlu0 %v721
      %v744 = vpop.xlane.xlu0 %743
      %745 = vadd.xlane.f32.xlu0 %v722
      %v746 = vpop.xlane.xlu0 %745
      %747 = vadd.xlane.f32.xlu0 %v723
      %v748 = vpop.xlane.xlu0 %747
      %749 = vadd.xlane.f32.xlu0 %v724
      %v750 = vpop.xlane.xlu0 %749
      %751 = vadd.xlane.f32.xlu0 %v725
      %v752 = vpop.xlane.xlu0 %751
      %753 = vadd.xlane.f32.xlu0 %v726
      %v754 = vpop.xlane.xlu0 %753
      %755 = vadd.xlane.f32.xlu0 %v727
      %v756 = vpop.xlane.xlu0 %755
      %757 = vadd.xlane.f32.xlu0 %v728
      %v758 = vpop.xlane.xlu0 %757
      %759 = vadd.xlane.f32.xlu0 %v729
      %v760 = vpop.xlane.xlu0 %759
      %761 = vadd.xlane.f32.xlu0 %v730
      %v762 = vpop.xlane.xlu0 %761
      %vm763 = vcmp.gt.f32.partialorder %v732, 1.0
      %vm764 = vcmp.gt.f32.partialorder %v734, 1.0
      %vm765 = vcmp.gt.f32.partialorder %v736, 1.0
      %vm766 = vcmp.gt.f32.partialorder %v738, 1.0
      %vm767 = vcmp.gt.f32.partialorder %v740, 1.0
      %vm768 = vcmp.gt.f32.partialorder %v742, 1.0
      %vm769 = vcmp.gt.f32.partialorder %v744, 1.0
      %vm770 = vcmp.gt.f32.partialorder %v746, 1.0
      %vm771 = vcmp.gt.f32.partialorder %v748, 1.0
      %vm772 = vcmp.gt.f32.partialorder %v750, 1.0
      %vm773 = vcmp.gt.f32.partialorder %v752, 1.0
      %vm774 = vcmp.gt.f32.partialorder %v754, 1.0
      %vm775 = vcmp.gt.f32.partialorder %v756, 1.0
      %vm776 = vcmp.gt.f32.partialorder %v758, 1.0
      %vm777 = vcmp.gt.f32.partialorder %v760, 1.0
      %vm778 = vcmp.gt.f32.partialorder %v762, 1.0
      %v779 = vsel %vm763, %v683, %v635
      %v780 = vsel %vm764, %v684, %v636
      %v781 = vsel %vm765, %v685, %v637
      %v782 = vsel %vm766, %v686, %v638
      %v783 = vsel %vm767, %v687, %v639
      %v784 = vsel %vm768, %v688, %v640
      %v785 = vsel %vm769, %v689, %v641
      %v786 = vsel %vm770, %v690, %v642
      %v787 = vsel %vm771, %v691, %v643
      %v788 = vsel %vm772, %v692, %v644
      %v789 = vsel %vm773, %v693, %v645
      %v790 = vsel %vm774, %v694, %v646
      %v791 = vsel %vm775, %v695, %v647
      %v792 = vsel %vm776, %v696, %v648
      %v793 = vsel %vm777, %v697, %v649
      %v794 = vsel %vm778, %v698, %v650
      %v795 = vsel %vm763, %v651, %v683
      %v796 = vsel %vm764, %v652, %v684
      %v797 = vsel %vm765, %v653, %v685
      %v798 = vsel %vm766, %v654, %v686
      %v799 = vsel %vm767, %v655, %v687
      %v800 = vsel %vm768, %v656, %v688
      %v801 = vsel %vm769, %v657, %v689
      %v802 = vsel %vm770, %v658, %v690
      %v803 = vsel %vm771, %v659, %v691
      %v804 = vsel %vm772, %v660, %v692
      %v805 = vsel %vm773, %v661, %v693
      %v806 = vsel %vm774, %v662, %v694
      %v807 = vsel %vm775, %v663, %v695
      %v808 = vsel %vm776, %v664, %v696
      %v809 = vsel %vm777, %v665, %v697
      %v810 = vsel %vm778, %v666, %v698
      %v811 = vadd.f32 %v779, %v795
      %v812 = vadd.f32 %v780, %v796
      %v813 = vadd.f32 %v781, %v797
      %v814 = vadd.f32 %v782, %v798
      %v815 = vadd.f32 %v783, %v799
      %v816 = vadd.f32 %v784, %v800
      %v817 = vadd.f32 %v785, %v801
      %v818 = vadd.f32 %v786, %v802
      %v819 = vadd.f32 %v787, %v803
      %v820 = vadd.f32 %v788, %v804
      %v821 = vadd.f32 %v789, %v805
      %v822 = vadd.f32 %v790, %v806
      %v823 = vadd.f32 %v791, %v807
      %v824 = vadd.f32 %v792, %v808
      %v825 = vadd.f32 %v793, %v809
      %v826 = vadd.f32 %v794, %v810
      %v827 = vmul.f32 %v811, 0.5
      %v828 = vmul.f32 %v812, 0.5
      %v829 = vmul.f32 %v813, 0.5
      %v830 = vmul.f32 %v814, 0.5
      %v831 = vmul.f32 %v815, 0.5
      %v832 = vmul.f32 %v816, 0.5
      %v833 = vmul.f32 %v817, 0.5
      %v834 = vmul.f32 %v818, 0.5
      %v835 = vmul.f32 %v819, 0.5
      %v836 = vmul.f32 %v820, 0.5
      %v837 = vmul.f32 %v821, 0.5
      %v838 = vmul.f32 %v822, 0.5
      %v839 = vmul.f32 %v823, 0.5
      %v840 = vmul.f32 %v824, 0.5
      %v841 = vmul.f32 %v825, 0.5
      %v842 = vmul.f32 %v826, 0.5
      %v843 = vsub.f32 %v539, %v827
      %v844 = vsub.f32 %v540, %v828
      %v845 = vsub.f32 %v541, %v829
      %v846 = vsub.f32 %v542, %v830
      %v847 = vsub.f32 %v543, %v831
      %v848 = vsub.f32 %v544, %v832
      %v849 = vsub.f32 %v545, %v833
      %v850 = vsub.f32 %v546, %v834
      %v851 = vsub.f32 %v547, %v835
      %v852 = vsub.f32 %v548, %v836
      %v853 = vsub.f32 %v549, %v837
      %v854 = vsub.f32 %v550, %v838
      %v855 = vsub.f32 %v551, %v839
      %v856 = vsub.f32 %v552, %v840
      %v857 = vsub.f32 %v553, %v841
      %v858 = vsub.f32 %v554, %v842
      %v859 = vmax.f32 %v843, 0.0
      %v860 = vmax.f32 %v844, 0.0
      %v861 = vmax.f32 %v845, 0.0
      %v862 = vmax.f32 %v846, 0.0
      %v863 = vmax.f32 %v847, 0.0
      %v864 = vmax.f32 %v848, 0.0
      %v865 = vmax.f32 %v849, 0.0
      %v866 = vmax.f32 %v850, 0.0
      %v867 = vmax.f32 %v851, 0.0
      %v868 = vmax.f32 %v852, 0.0
      %v869 = vmax.f32 %v853, 0.0
      %v870 = vmax.f32 %v854, 0.0
      %v871 = vmax.f32 %v855, 0.0
      %v872 = vmax.f32 %v856, 0.0
      %v873 = vmax.f32 %v857, 0.0
      %v874 = vmax.f32 %v858, 0.0
      %875 = vadd.xlane.f32.xlu0 %v859
      %v876 = vpop.xlane.xlu0 %875
      %877 = vadd.xlane.f32.xlu0 %v860
      %v878 = vpop.xlane.xlu0 %877
      %879 = vadd.xlane.f32.xlu0 %v861
      %v880 = vpop.xlane.xlu0 %879
      %881 = vadd.xlane.f32.xlu0 %v862
      %v882 = vpop.xlane.xlu0 %881
      %883 = vadd.xlane.f32.xlu0 %v863
      %v884 = vpop.xlane.xlu0 %883
      %885 = vadd.xlane.f32.xlu0 %v864
      %v886 = vpop.xlane.xlu0 %885
      %887 = vadd.xlane.f32.xlu0 %v865
      %v888 = vpop.xlane.xlu0 %887
      %889 = vadd.xlane.f32.xlu0 %v866
      %v890 = vpop.xlane.xlu0 %889
      %891 = vadd.xlane.f32.xlu0 %v867
      %v892 = vpop.xlane.xlu0 %891
      %893 = vadd.xlane.f32.xlu0 %v868
      %v894 = vpop.xlane.xlu0 %893
      %895 = vadd.xlane.f32.xlu0 %v869
      %v896 = vpop.xlane.xlu0 %895
      %897 = vadd.xlane.f32.xlu0 %v870
      %v898 = vpop.xlane.xlu0 %897
      %899 = vadd.xlane.f32.xlu0 %v871
      %v900 = vpop.xlane.xlu0 %899
      %901 = vadd.xlane.f32.xlu0 %v872
      %v902 = vpop.xlane.xlu0 %901
      %903 = vadd.xlane.f32.xlu0 %v873
      %v904 = vpop.xlane.xlu0 %903
      %905 = vadd.xlane.f32.xlu0 %v874
      %v906 = vpop.xlane.xlu0 %905
      %vm907 = vcmp.gt.f32.partialorder %v876, 1.0
      %vm908 = vcmp.gt.f32.partialorder %v878, 1.0
      %vm909 = vcmp.gt.f32.partialorder %v880, 1.0
      %vm910 = vcmp.gt.f32.partialorder %v882, 1.0
      %vm911 = vcmp.gt.f32.partialorder %v884, 1.0
      %vm912 = vcmp.gt.f32.partialorder %v886, 1.0
      %vm913 = vcmp.gt.f32.partialorder %v888, 1.0
      %vm914 = vcmp.gt.f32.partialorder %v890, 1.0
      %vm915 = vcmp.gt.f32.partialorder %v892, 1.0
      %vm916 = vcmp.gt.f32.partialorder %v894, 1.0
      %vm917 = vcmp.gt.f32.partialorder %v896, 1.0
      %vm918 = vcmp.gt.f32.partialorder %v898, 1.0
      %vm919 = vcmp.gt.f32.partialorder %v900, 1.0
      %vm920 = vcmp.gt.f32.partialorder %v902, 1.0
      %vm921 = vcmp.gt.f32.partialorder %v904, 1.0
      %vm922 = vcmp.gt.f32.partialorder %v906, 1.0
      %v923 = vsel %vm907, %v827, %v779
      %v924 = vsel %vm908, %v828, %v780
      %v925 = vsel %vm909, %v829, %v781
      %v926 = vsel %vm910, %v830, %v782
      %v927 = vsel %vm911, %v831, %v783
      %v928 = vsel %vm912, %v832, %v784
      %v929 = vsel %vm913, %v833, %v785
      %v930 = vsel %vm914, %v834, %v786
      %v931 = vsel %vm915, %v835, %v787
      %v932 = vsel %vm916, %v836, %v788
      %v933 = vsel %vm917, %v837, %v789
      %v934 = vsel %vm918, %v838, %v790
      %v935 = vsel %vm919, %v839, %v791
      %v936 = vsel %vm920, %v840, %v792
      %v937 = vsel %vm921, %v841, %v793
      %v938 = vsel %vm922, %v842, %v794
      %v939 = vsel %vm907, %v795, %v827
      %v940 = vsel %vm908, %v796, %v828
      %v941 = vsel %vm909, %v797, %v829
      %v942 = vsel %vm910, %v798, %v830
      %v943 = vsel %vm911, %v799, %v831
      %v944 = vsel %vm912, %v800, %v832
      %v945 = vsel %vm913, %v801, %v833
      %v946 = vsel %vm914, %v802, %v834
      %v947 = vsel %vm915, %v803, %v835
      %v948 = vsel %vm916, %v804, %v836
      %v949 = vsel %vm917, %v805, %v837
      %v950 = vsel %vm918, %v806, %v838
      %v951 = vsel %vm919, %v807, %v839
      %v952 = vsel %vm920, %v808, %v840
      %v953 = vsel %vm921, %v809, %v841
      %v954 = vsel %vm922, %v810, %v842
      %v955 = vadd.f32 %v923, %v939
      %v956 = vadd.f32 %v924, %v940
      %v957 = vadd.f32 %v925, %v941
      %v958 = vadd.f32 %v926, %v942
      %v959 = vadd.f32 %v927, %v943
      %v960 = vadd.f32 %v928, %v944
      %v961 = vadd.f32 %v929, %v945
      %v962 = vadd.f32 %v930, %v946
      %v963 = vadd.f32 %v931, %v947
      %v964 = vadd.f32 %v932, %v948
      %v965 = vadd.f32 %v933, %v949
      %v966 = vadd.f32 %v934, %v950
      %v967 = vadd.f32 %v935, %v951
      %v968 = vadd.f32 %v936, %v952
      %v969 = vadd.f32 %v937, %v953
      %v970 = vadd.f32 %v938, %v954
      %v971 = vmul.f32 %v955, 0.5
      %v972 = vmul.f32 %v956, 0.5
      %v973 = vmul.f32 %v957, 0.5
      %v974 = vmul.f32 %v958, 0.5
      %v975 = vmul.f32 %v959, 0.5
      %v976 = vmul.f32 %v960, 0.5
      %v977 = vmul.f32 %v961, 0.5
      %v978 = vmul.f32 %v962, 0.5
      %v979 = vmul.f32 %v963, 0.5
      %v980 = vmul.f32 %v964, 0.5
      %v981 = vmul.f32 %v965, 0.5
      %v982 = vmul.f32 %v966, 0.5
      %v983 = vmul.f32 %v967, 0.5
      %v984 = vmul.f32 %v968, 0.5
      %v985 = vmul.f32 %v969, 0.5
      %v986 = vmul.f32 %v970, 0.5
      %v987 = vsub.f32 %v539, %v971
      %v988 = vsub.f32 %v540, %v972
      %v989 = vsub.f32 %v541, %v973
      %v990 = vsub.f32 %v542, %v974
      %v991 = vsub.f32 %v543, %v975
      %v992 = vsub.f32 %v544, %v976
      %v993 = vsub.f32 %v545, %v977
      %v994 = vsub.f32 %v546, %v978
      %v995 = vsub.f32 %v547, %v979
      %v996 = vsub.f32 %v548, %v980
      %v997 = vsub.f32 %v549, %v981
      %v998 = vsub.f32 %v550, %v982
      %v999 = vsub.f32 %v551, %v983
      %v1000 = vsub.f32 %v552, %v984
      %v1001 = vsub.f32 %v553, %v985
      %v1002 = vsub.f32 %v554, %v986
      %v1003 = vmax.f32 %v987, 0.0
      %v1004 = vmax.f32 %v988, 0.0
      %v1005 = vmax.f32 %v989, 0.0
      %v1006 = vmax.f32 %v990, 0.0
      %v1007 = vmax.f32 %v991, 0.0
      %v1008 = vmax.f32 %v992, 0.0
      %v1009 = vmax.f32 %v993, 0.0
      %v1010 = vmax.f32 %v994, 0.0
      %v1011 = vmax.f32 %v995, 0.0
      %v1012 = vmax.f32 %v996, 0.0
      %v1013 = vmax.f32 %v997, 0.0
      %v1014 = vmax.f32 %v998, 0.0
      %v1015 = vmax.f32 %v999, 0.0
      %v1016 = vmax.f32 %v1000, 0.0
      %v1017 = vmax.f32 %v1001, 0.0
      %v1018 = vmax.f32 %v1002, 0.0
      %1019 = vadd.xlane.f32.xlu0 %v1003
      %v1020 = vpop.xlane.xlu0 %1019
      %1021 = vadd.xlane.f32.xlu0 %v1004
      %v1022 = vpop.xlane.xlu0 %1021
      %1023 = vadd.xlane.f32.xlu0 %v1005
      %v1024 = vpop.xlane.xlu0 %1023
      %1025 = vadd.xlane.f32.xlu0 %v1006
      %v1026 = vpop.xlane.xlu0 %1025
      %1027 = vadd.xlane.f32.xlu0 %v1007
      %v1028 = vpop.xlane.xlu0 %1027
      %1029 = vadd.xlane.f32.xlu0 %v1008
      %v1030 = vpop.xlane.xlu0 %1029
      %1031 = vadd.xlane.f32.xlu0 %v1009
      %v1032 = vpop.xlane.xlu0 %1031
      %1033 = vadd.xlane.f32.xlu0 %v1010
      %v1034 = vpop.xlane.xlu0 %1033
      %1035 = vadd.xlane.f32.xlu0 %v1011
      %v1036 = vpop.xlane.xlu0 %1035
      %1037 = vadd.xlane.f32.xlu0 %v1012
      %v1038 = vpop.xlane.xlu0 %1037
      %1039 = vadd.xlane.f32.xlu0 %v1013
      %v1040 = vpop.xlane.xlu0 %1039
      %1041 = vadd.xlane.f32.xlu0 %v1014
      %v1042 = vpop.xlane.xlu0 %1041
      %1043 = vadd.xlane.f32.xlu0 %v1015
      %v1044 = vpop.xlane.xlu0 %1043
      %1045 = vadd.xlane.f32.xlu0 %v1016
      %v1046 = vpop.xlane.xlu0 %1045
      %1047 = vadd.xlane.f32.xlu0 %v1017
      %v1048 = vpop.xlane.xlu0 %1047
      %1049 = vadd.xlane.f32.xlu0 %v1018
      %v1050 = vpop.xlane.xlu0 %1049
      %vm1051 = vcmp.gt.f32.partialorder %v1020, 1.0
      %vm1052 = vcmp.gt.f32.partialorder %v1022, 1.0
      %vm1053 = vcmp.gt.f32.partialorder %v1024, 1.0
      %vm1054 = vcmp.gt.f32.partialorder %v1026, 1.0
      %vm1055 = vcmp.gt.f32.partialorder %v1028, 1.0
      %vm1056 = vcmp.gt.f32.partialorder %v1030, 1.0
      %vm1057 = vcmp.gt.f32.partialorder %v1032, 1.0
      %vm1058 = vcmp.gt.f32.partialorder %v1034, 1.0
      %vm1059 = vcmp.gt.f32.partialorder %v1036, 1.0
      %vm1060 = vcmp.gt.f32.partialorder %v1038, 1.0
      %vm1061 = vcmp.gt.f32.partialorder %v1040, 1.0
      %vm1062 = vcmp.gt.f32.partialorder %v1042, 1.0
      %vm1063 = vcmp.gt.f32.partialorder %v1044, 1.0
      %vm1064 = vcmp.gt.f32.partialorder %v1046, 1.0
      %vm1065 = vcmp.gt.f32.partialorder %v1048, 1.0
      %vm1066 = vcmp.gt.f32.partialorder %v1050, 1.0
      %v1067 = vsel %vm1051, %v971, %v923
      %v1068 = vsel %vm1052, %v972, %v924
      %v1069 = vsel %vm1053, %v973, %v925
      %v1070 = vsel %vm1054, %v974, %v926
      %v1071 = vsel %vm1055, %v975, %v927
      %v1072 = vsel %vm1056, %v976, %v928
      %v1073 = vsel %vm1057, %v977, %v929
      %v1074 = vsel %vm1058, %v978, %v930
      %v1075 = vsel %vm1059, %v979, %v931
      %v1076 = vsel %vm1060, %v980, %v932
      %v1077 = vsel %vm1061, %v981, %v933
      %v1078 = vsel %vm1062, %v982, %v934
      %v1079 = vsel %vm1063, %v983, %v935
      %v1080 = vsel %vm1064, %v984, %v936
      %v1081 = vsel %vm1065, %v985, %v937
      %v1082 = vsel %vm1066, %v986, %v938
      %v1083 = vsel %vm1051, %v939, %v971
      %v1084 = vsel %vm1052, %v940, %v972
      %v1085 = vsel %vm1053, %v941, %v973
      %v1086 = vsel %vm1054, %v942, %v974
      %v1087 = vsel %vm1055, %v943, %v975
      %v1088 = vsel %vm1056, %v944, %v976
      %v1089 = vsel %vm1057, %v945, %v977
      %v1090 = vsel %vm1058, %v946, %v978
      %v1091 = vsel %vm1059, %v947, %v979
      %v1092 = vsel %vm1060, %v948, %v980
      %v1093 = vsel %vm1061, %v949, %v981
      %v1094 = vsel %vm1062, %v950, %v982
      %v1095 = vsel %vm1063, %v951, %v983
      %v1096 = vsel %vm1064, %v952, %v984
      %v1097 = vsel %vm1065, %v953, %v985
      %v1098 = vsel %vm1066, %v954, %v986
      %v1099 = vadd.f32 %v1067, %v1083
      %v1100 = vadd.f32 %v1068, %v1084
      %v1101 = vadd.f32 %v1069, %v1085
      %v1102 = vadd.f32 %v1070, %v1086
      %v1103 = vadd.f32 %v1071, %v1087
      %v1104 = vadd.f32 %v1072, %v1088
      %v1105 = vadd.f32 %v1073, %v1089
      %v1106 = vadd.f32 %v1074, %v1090
      %v1107 = vadd.f32 %v1075, %v1091
      %v1108 = vadd.f32 %v1076, %v1092
      %v1109 = vadd.f32 %v1077, %v1093
      %v1110 = vadd.f32 %v1078, %v1094
      %v1111 = vadd.f32 %v1079, %v1095
      %v1112 = vadd.f32 %v1080, %v1096
      %v1113 = vadd.f32 %v1081, %v1097
      %v1114 = vadd.f32 %v1082, %v1098
      %v1115 = vmul.f32 %v1099, 0.5
      %v1116 = vmul.f32 %v1100, 0.5
      %v1117 = vmul.f32 %v1101, 0.5
      %v1118 = vmul.f32 %v1102, 0.5
      %v1119 = vmul.f32 %v1103, 0.5
      %v1120 = vmul.f32 %v1104, 0.5
      %v1121 = vmul.f32 %v1105, 0.5
      %v1122 = vmul.f32 %v1106, 0.5
      %v1123 = vmul.f32 %v1107, 0.5
      %v1124 = vmul.f32 %v1108, 0.5
      %v1125 = vmul.f32 %v1109, 0.5
      %v1126 = vmul.f32 %v1110, 0.5
      %v1127 = vmul.f32 %v1111, 0.5
      %v1128 = vmul.f32 %v1112, 0.5
      %v1129 = vmul.f32 %v1113, 0.5
      %v1130 = vmul.f32 %v1114, 0.5
      %v1131 = vsub.f32 %v539, %v1115
      %v1132 = vsub.f32 %v540, %v1116
      %v1133 = vsub.f32 %v541, %v1117
      %v1134 = vsub.f32 %v542, %v1118
      %v1135 = vsub.f32 %v543, %v1119
      %v1136 = vsub.f32 %v544, %v1120
      %v1137 = vsub.f32 %v545, %v1121
      %v1138 = vsub.f32 %v546, %v1122
      %v1139 = vsub.f32 %v547, %v1123
      %v1140 = vsub.f32 %v548, %v1124
      %v1141 = vsub.f32 %v549, %v1125
      %v1142 = vsub.f32 %v550, %v1126
      %v1143 = vsub.f32 %v551, %v1127
      %v1144 = vsub.f32 %v552, %v1128
      %v1145 = vsub.f32 %v553, %v1129
      %v1146 = vsub.f32 %v554, %v1130
      %v1147 = vmax.f32 %v1131, 0.0
      %v1148 = vmax.f32 %v1132, 0.0
      %v1149 = vmax.f32 %v1133, 0.0
      %v1150 = vmax.f32 %v1134, 0.0
      %v1151 = vmax.f32 %v1135, 0.0
      %v1152 = vmax.f32 %v1136, 0.0
      %v1153 = vmax.f32 %v1137, 0.0
      %v1154 = vmax.f32 %v1138, 0.0
      %v1155 = vmax.f32 %v1139, 0.0
      %v1156 = vmax.f32 %v1140, 0.0
      %v1157 = vmax.f32 %v1141, 0.0
      %v1158 = vmax.f32 %v1142, 0.0
      %v1159 = vmax.f32 %v1143, 0.0
      %v1160 = vmax.f32 %v1144, 0.0
      %v1161 = vmax.f32 %v1145, 0.0
      %v1162 = vmax.f32 %v1146, 0.0
      %1163 = vadd.xlane.f32.xlu0 %v1147
      %v1164 = vpop.xlane.xlu0 %1163
      %1165 = vadd.xlane.f32.xlu0 %v1148
      %v1166 = vpop.xlane.xlu0 %1165
      %1167 = vadd.xlane.f32.xlu0 %v1149
      %v1168 = vpop.xlane.xlu0 %1167
      %1169 = vadd.xlane.f32.xlu0 %v1150
      %v1170 = vpop.xlane.xlu0 %1169
      %1171 = vadd.xlane.f32.xlu0 %v1151
      %v1172 = vpop.xlane.xlu0 %1171
      %1173 = vadd.xlane.f32.xlu0 %v1152
      %v1174 = vpop.xlane.xlu0 %1173
      %1175 = vadd.xlane.f32.xlu0 %v1153
      %v1176 = vpop.xlane.xlu0 %1175
      %1177 = vadd.xlane.f32.xlu0 %v1154
      %v1178 = vpop.xlane.xlu0 %1177
      %1179 = vadd.xlane.f32.xlu0 %v1155
      %v1180 = vpop.xlane.xlu0 %1179
      %1181 = vadd.xlane.f32.xlu0 %v1156
      %v1182 = vpop.xlane.xlu0 %1181
      %1183 = vadd.xlane.f32.xlu0 %v1157
      %v1184 = vpop.xlane.xlu0 %1183
      %1185 = vadd.xlane.f32.xlu0 %v1158
      %v1186 = vpop.xlane.xlu0 %1185
      %1187 = vadd.xlane.f32.xlu0 %v1159
      %v1188 = vpop.xlane.xlu0 %1187
      %1189 = vadd.xlane.f32.xlu0 %v1160
      %v1190 = vpop.xlane.xlu0 %1189
      %1191 = vadd.xlane.f32.xlu0 %v1161
      %v1192 = vpop.xlane.xlu0 %1191
      %1193 = vadd.xlane.f32.xlu0 %v1162
      %v1194 = vpop.xlane.xlu0 %1193
      %vm1195 = vcmp.gt.f32.partialorder %v1164, 1.0
      %vm1196 = vcmp.gt.f32.partialorder %v1166, 1.0
      %vm1197 = vcmp.gt.f32.partialorder %v1168, 1.0
      %vm1198 = vcmp.gt.f32.partialorder %v1170, 1.0
      %vm1199 = vcmp.gt.f32.partialorder %v1172, 1.0
      %vm1200 = vcmp.gt.f32.partialorder %v1174, 1.0
      %vm1201 = vcmp.gt.f32.partialorder %v1176, 1.0
      %vm1202 = vcmp.gt.f32.partialorder %v1178, 1.0
      %vm1203 = vcmp.gt.f32.partialorder %v1180, 1.0
      %vm1204 = vcmp.gt.f32.partialorder %v1182, 1.0
      %vm1205 = vcmp.gt.f32.partialorder %v1184, 1.0
      %vm1206 = vcmp.gt.f32.partialorder %v1186, 1.0
      %vm1207 = vcmp.gt.f32.partialorder %v1188, 1.0
      %vm1208 = vcmp.gt.f32.partialorder %v1190, 1.0
      %vm1209 = vcmp.gt.f32.partialorder %v1192, 1.0
      %vm1210 = vcmp.gt.f32.partialorder %v1194, 1.0
      %v1211 = vsel %vm1195, %v1115, %v1067
      %v1212 = vsel %vm1196, %v1116, %v1068
      %v1213 = vsel %vm1197, %v1117, %v1069
      %v1214 = vsel %vm1198, %v1118, %v1070
      %v1215 = vsel %vm1199, %v1119, %v1071
      %v1216 = vsel %vm1200, %v1120, %v1072
      %v1217 = vsel %vm1201, %v1121, %v1073
      %v1218 = vsel %vm1202, %v1122, %v1074
      %v1219 = vsel %vm1203, %v1123, %v1075
      %v1220 = vsel %vm1204, %v1124, %v1076
      %v1221 = vsel %vm1205, %v1125, %v1077
      %v1222 = vsel %vm1206, %v1126, %v1078
      %v1223 = vsel %vm1207, %v1127, %v1079
      %v1224 = vsel %vm1208, %v1128, %v1080
      %v1225 = vsel %vm1209, %v1129, %v1081
      %v1226 = vsel %vm1210, %v1130, %v1082
      %v1227 = vsel %vm1195, %v1083, %v1115
      %v1228 = vsel %vm1196, %v1084, %v1116
      %v1229 = vsel %vm1197, %v1085, %v1117
      %v1230 = vsel %vm1198, %v1086, %v1118
      %v1231 = vsel %vm1199, %v1087, %v1119
      %v1232 = vsel %vm1200, %v1088, %v1120
      %v1233 = vsel %vm1201, %v1089, %v1121
      %v1234 = vsel %vm1202, %v1090, %v1122
      %v1235 = vsel %vm1203, %v1091, %v1123
      %v1236 = vsel %vm1204, %v1092, %v1124
      %v1237 = vsel %vm1205, %v1093, %v1125
      %v1238 = vsel %vm1206, %v1094, %v1126
      %v1239 = vsel %vm1207, %v1095, %v1127
      %v1240 = vsel %vm1208, %v1096, %v1128
      %v1241 = vsel %vm1209, %v1097, %v1129
      %v1242 = vsel %vm1210, %v1098, %v1130
      %v1243 = vadd.f32 %v1211, %v1227
      %v1244 = vadd.f32 %v1212, %v1228
      %v1245 = vadd.f32 %v1213, %v1229
      %v1246 = vadd.f32 %v1214, %v1230
      %v1247 = vadd.f32 %v1215, %v1231
      %v1248 = vadd.f32 %v1216, %v1232
      %v1249 = vadd.f32 %v1217, %v1233
      %v1250 = vadd.f32 %v1218, %v1234
      %v1251 = vadd.f32 %v1219, %v1235
      %v1252 = vadd.f32 %v1220, %v1236
      %v1253 = vadd.f32 %v1221, %v1237
      %v1254 = vadd.f32 %v1222, %v1238
      %v1255 = vadd.f32 %v1223, %v1239
      %v1256 = vadd.f32 %v1224, %v1240
      %v1257 = vadd.f32 %v1225, %v1241
      %v1258 = vadd.f32 %v1226, %v1242
      %v1259 = vmul.f32 %v1243, 0.5
      %v1260 = vmul.f32 %v1244, 0.5
      %v1261 = vmul.f32 %v1245, 0.5
      %v1262 = vmul.f32 %v1246, 0.5
      %v1263 = vmul.f32 %v1247, 0.5
      %v1264 = vmul.f32 %v1248, 0.5
      %v1265 = vmul.f32 %v1249, 0.5
      %v1266 = vmul.f32 %v1250, 0.5
      %v1267 = vmul.f32 %v1251, 0.5
      %v1268 = vmul.f32 %v1252, 0.5
      %v1269 = vmul.f32 %v1253, 0.5
      %v1270 = vmul.f32 %v1254, 0.5
      %v1271 = vmul.f32 %v1255, 0.5
      %v1272 = vmul.f32 %v1256, 0.5
      %v1273 = vmul.f32 %v1257, 0.5
      %v1274 = vmul.f32 %v1258, 0.5
      %v1275 = vsub.f32 %v539, %v1259
      %v1276 = vsub.f32 %v540, %v1260
      %v1277 = vsub.f32 %v541, %v1261
      %v1278 = vsub.f32 %v542, %v1262
      %v1279 = vsub.f32 %v543, %v1263
      %v1280 = vsub.f32 %v544, %v1264
      %v1281 = vsub.f32 %v545, %v1265
      %v1282 = vsub.f32 %v546, %v1266
      %v1283 = vsub.f32 %v547, %v1267
      %v1284 = vsub.f32 %v548, %v1268
      %v1285 = vsub.f32 %v549, %v1269
      %v1286 = vsub.f32 %v550, %v1270
      %v1287 = vsub.f32 %v551, %v1271
      %v1288 = vsub.f32 %v552, %v1272
      %v1289 = vsub.f32 %v553, %v1273
      %v1290 = vsub.f32 %v554, %v1274
      %v1291 = vmax.f32 %v1275, 0.0
      %v1292 = vmax.f32 %v1276, 0.0
      %v1293 = vmax.f32 %v1277, 0.0
      %v1294 = vmax.f32 %v1278, 0.0
      %v1295 = vmax.f32 %v1279, 0.0
      %v1296 = vmax.f32 %v1280, 0.0
      %v1297 = vmax.f32 %v1281, 0.0
      %v1298 = vmax.f32 %v1282, 0.0
      %v1299 = vmax.f32 %v1283, 0.0
      %v1300 = vmax.f32 %v1284, 0.0
      %v1301 = vmax.f32 %v1285, 0.0
      %v1302 = vmax.f32 %v1286, 0.0
      %v1303 = vmax.f32 %v1287, 0.0
      %v1304 = vmax.f32 %v1288, 0.0
      %v1305 = vmax.f32 %v1289, 0.0
      %v1306 = vmax.f32 %v1290, 0.0
      %1307 = vadd.xlane.f32.xlu0 %v1291
      %v1308 = vpop.xlane.xlu0 %1307
      %1309 = vadd.xlane.f32.xlu0 %v1292
      %v1310 = vpop.xlane.xlu0 %1309
      %1311 = vadd.xlane.f32.xlu0 %v1293
      %v1312 = vpop.xlane.xlu0 %1311
      %1313 = vadd.xlane.f32.xlu0 %v1294
      %v1314 = vpop.xlane.xlu0 %1313
      %1315 = vadd.xlane.f32.xlu0 %v1295
      %v1316 = vpop.xlane.xlu0 %1315
      %1317 = vadd.xlane.f32.xlu0 %v1296
      %v1318 = vpop.xlane.xlu0 %1317
      %1319 = vadd.xlane.f32.xlu0 %v1297
      %v1320 = vpop.xlane.xlu0 %1319
      %1321 = vadd.xlane.f32.xlu0 %v1298
      %v1322 = vpop.xlane.xlu0 %1321
      %1323 = vadd.xlane.f32.xlu0 %v1299
      %v1324 = vpop.xlane.xlu0 %1323
      %1325 = vadd.xlane.f32.xlu0 %v1300
      %v1326 = vpop.xlane.xlu0 %1325
      %1327 = vadd.xlane.f32.xlu0 %v1301
      %v1328 = vpop.xlane.xlu0 %1327
      %1329 = vadd.xlane.f32.xlu0 %v1302
      %v1330 = vpop.xlane.xlu0 %1329
      %1331 = vadd.xlane.f32.xlu0 %v1303
      %v1332 = vpop.xlane.xlu0 %1331
      %1333 = vadd.xlane.f32.xlu0 %v1304
      %v1334 = vpop.xlane.xlu0 %1333
      %1335 = vadd.xlane.f32.xlu0 %v1305
      %v1336 = vpop.xlane.xlu0 %1335
      %1337 = vadd.xlane.f32.xlu0 %v1306
      %v1338 = vpop.xlane.xlu0 %1337
      %vm1339 = vcmp.gt.f32.partialorder %v1308, 1.0
      %vm1340 = vcmp.gt.f32.partialorder %v1310, 1.0
      %vm1341 = vcmp.gt.f32.partialorder %v1312, 1.0
      %vm1342 = vcmp.gt.f32.partialorder %v1314, 1.0
      %vm1343 = vcmp.gt.f32.partialorder %v1316, 1.0
      %vm1344 = vcmp.gt.f32.partialorder %v1318, 1.0
      %vm1345 = vcmp.gt.f32.partialorder %v1320, 1.0
      %vm1346 = vcmp.gt.f32.partialorder %v1322, 1.0
      %vm1347 = vcmp.gt.f32.partialorder %v1324, 1.0
      %vm1348 = vcmp.gt.f32.partialorder %v1326, 1.0
      %vm1349 = vcmp.gt.f32.partialorder %v1328, 1.0
      %vm1350 = vcmp.gt.f32.partialorder %v1330, 1.0
      %vm1351 = vcmp.gt.f32.partialorder %v1332, 1.0
      %vm1352 = vcmp.gt.f32.partialorder %v1334, 1.0
      %vm1353 = vcmp.gt.f32.partialorder %v1336, 1.0
      %vm1354 = vcmp.gt.f32.partialorder %v1338, 1.0
      %v1355 = vsel %vm1339, %v1259, %v1211
      %v1356 = vsel %vm1340, %v1260, %v1212
      %v1357 = vsel %vm1341, %v1261, %v1213
      %v1358 = vsel %vm1342, %v1262, %v1214
      %v1359 = vsel %vm1343, %v1263, %v1215
      %v1360 = vsel %vm1344, %v1264, %v1216
      %v1361 = vsel %vm1345, %v1265, %v1217
      %v1362 = vsel %vm1346, %v1266, %v1218
      %v1363 = vsel %vm1347, %v1267, %v1219
      %v1364 = vsel %vm1348, %v1268, %v1220
      %v1365 = vsel %vm1349, %v1269, %v1221
      %v1366 = vsel %vm1350, %v1270, %v1222
      %v1367 = vsel %vm1351, %v1271, %v1223
      %v1368 = vsel %vm1352, %v1272, %v1224
      %v1369 = vsel %vm1353, %v1273, %v1225
      %v1370 = vsel %vm1354, %v1274, %v1226
      %v1371 = vsel %vm1339, %v1227, %v1259
      %v1372 = vsel %vm1340, %v1228, %v1260
      %v1373 = vsel %vm1341, %v1229, %v1261
      %v1374 = vsel %vm1342, %v1230, %v1262
      %v1375 = vsel %vm1343, %v1231, %v1263
      %v1376 = vsel %vm1344, %v1232, %v1264
      %v1377 = vsel %vm1345, %v1233, %v1265
      %v1378 = vsel %vm1346, %v1234, %v1266
      %v1379 = vsel %vm1347, %v1235, %v1267
      %v1380 = vsel %vm1348, %v1236, %v1268
      %v1381 = vsel %vm1349, %v1237, %v1269
      %v1382 = vsel %vm1350, %v1238, %v1270
      %v1383 = vsel %vm1351, %v1239, %v1271
      %v1384 = vsel %vm1352, %v1240, %v1272
      %v1385 = vsel %vm1353, %v1241, %v1273
      %v1386 = vsel %vm1354, %v1242, %v1274
      %v1387 = vadd.f32 %v1355, %v1371
      %v1388 = vadd.f32 %v1356, %v1372
      %v1389 = vadd.f32 %v1357, %v1373
      %v1390 = vadd.f32 %v1358, %v1374
      %v1391 = vadd.f32 %v1359, %v1375
      %v1392 = vadd.f32 %v1360, %v1376
      %v1393 = vadd.f32 %v1361, %v1377
      %v1394 = vadd.f32 %v1362, %v1378
      %v1395 = vadd.f32 %v1363, %v1379
      %v1396 = vadd.f32 %v1364, %v1380
      %v1397 = vadd.f32 %v1365, %v1381
      %v1398 = vadd.f32 %v1366, %v1382
      %v1399 = vadd.f32 %v1367, %v1383
      %v1400 = vadd.f32 %v1368, %v1384
      %v1401 = vadd.f32 %v1369, %v1385
      %v1402 = vadd.f32 %v1370, %v1386
      %v1403 = vmul.f32 %v1387, 0.5
      %v1404 = vmul.f32 %v1388, 0.5
      %v1405 = vmul.f32 %v1389, 0.5
      %v1406 = vmul.f32 %v1390, 0.5
      %v1407 = vmul.f32 %v1391, 0.5
      %v1408 = vmul.f32 %v1392, 0.5
      %v1409 = vmul.f32 %v1393, 0.5
      %v1410 = vmul.f32 %v1394, 0.5
      %v1411 = vmul.f32 %v1395, 0.5
      %v1412 = vmul.f32 %v1396, 0.5
      %v1413 = vmul.f32 %v1397, 0.5
      %v1414 = vmul.f32 %v1398, 0.5
      %v1415 = vmul.f32 %v1399, 0.5
      %v1416 = vmul.f32 %v1400, 0.5
      %v1417 = vmul.f32 %v1401, 0.5
      %v1418 = vmul.f32 %v1402, 0.5
      %v1419 = vsub.f32 %v539, %v1403
      %v1420 = vsub.f32 %v540, %v1404
      %v1421 = vsub.f32 %v541, %v1405
      %v1422 = vsub.f32 %v542, %v1406
      %v1423 = vsub.f32 %v543, %v1407
      %v1424 = vsub.f32 %v544, %v1408
      %v1425 = vsub.f32 %v545, %v1409
      %v1426 = vsub.f32 %v546, %v1410
      %v1427 = vsub.f32 %v547, %v1411
      %v1428 = vsub.f32 %v548, %v1412
      %v1429 = vsub.f32 %v549, %v1413
      %v1430 = vsub.f32 %v550, %v1414
      %v1431 = vsub.f32 %v551, %v1415
      %v1432 = vsub.f32 %v552, %v1416
      %v1433 = vsub.f32 %v553, %v1417
      %v1434 = vsub.f32 %v554, %v1418
      %v1435 = vmax.f32 %v1419, 0.0
      %v1436 = vmax.f32 %v1420, 0.0
      %v1437 = vmax.f32 %v1421, 0.0
      %v1438 = vmax.f32 %v1422, 0.0
      %v1439 = vmax.f32 %v1423, 0.0
      %v1440 = vmax.f32 %v1424, 0.0
      %v1441 = vmax.f32 %v1425, 0.0
      %v1442 = vmax.f32 %v1426, 0.0
      %v1443 = vmax.f32 %v1427, 0.0
      %v1444 = vmax.f32 %v1428, 0.0
      %v1445 = vmax.f32 %v1429, 0.0
      %v1446 = vmax.f32 %v1430, 0.0
      %v1447 = vmax.f32 %v1431, 0.0
      %v1448 = vmax.f32 %v1432, 0.0
      %v1449 = vmax.f32 %v1433, 0.0
      %v1450 = vmax.f32 %v1434, 0.0
      %1451 = vadd.xlane.f32.xlu0 %v1435
      %v1452 = vpop.xlane.xlu0 %1451
      %1453 = vadd.xlane.f32.xlu0 %v1436
      %v1454 = vpop.xlane.xlu0 %1453
      %1455 = vadd.xlane.f32.xlu0 %v1437
      %v1456 = vpop.xlane.xlu0 %1455
      %1457 = vadd.xlane.f32.xlu0 %v1438
      %v1458 = vpop.xlane.xlu0 %1457
      %1459 = vadd.xlane.f32.xlu0 %v1439
      %v1460 = vpop.xlane.xlu0 %1459
      %1461 = vadd.xlane.f32.xlu0 %v1440
      %v1462 = vpop.xlane.xlu0 %1461
      %1463 = vadd.xlane.f32.xlu0 %v1441
      %v1464 = vpop.xlane.xlu0 %1463
      %1465 = vadd.xlane.f32.xlu0 %v1442
      %v1466 = vpop.xlane.xlu0 %1465
      %1467 = vadd.xlane.f32.xlu0 %v1443
      %v1468 = vpop.xlane.xlu0 %1467
      %1469 = vadd.xlane.f32.xlu0 %v1444
      %v1470 = vpop.xlane.xlu0 %1469
      %1471 = vadd.xlane.f32.xlu0 %v1445
      %v1472 = vpop.xlane.xlu0 %1471
      %1473 = vadd.xlane.f32.xlu0 %v1446
      %v1474 = vpop.xlane.xlu0 %1473
      %1475 = vadd.xlane.f32.xlu0 %v1447
      %v1476 = vpop.xlane.xlu0 %1475
      %1477 = vadd.xlane.f32.xlu0 %v1448
      %v1478 = vpop.xlane.xlu0 %1477
      %1479 = vadd.xlane.f32.xlu0 %v1449
      %v1480 = vpop.xlane.xlu0 %1479
      %1481 = vadd.xlane.f32.xlu0 %v1450
      %v1482 = vpop.xlane.xlu0 %1481
      %vm1483 = vcmp.gt.f32.partialorder %v1452, 1.0
      %vm1484 = vcmp.gt.f32.partialorder %v1454, 1.0
      %vm1485 = vcmp.gt.f32.partialorder %v1456, 1.0
      %vm1486 = vcmp.gt.f32.partialorder %v1458, 1.0
      %vm1487 = vcmp.gt.f32.partialorder %v1460, 1.0
      %vm1488 = vcmp.gt.f32.partialorder %v1462, 1.0
      %vm1489 = vcmp.gt.f32.partialorder %v1464, 1.0
      %vm1490 = vcmp.gt.f32.partialorder %v1466, 1.0
      %vm1491 = vcmp.gt.f32.partialorder %v1468, 1.0
      %vm1492 = vcmp.gt.f32.partialorder %v1470, 1.0
      %vm1493 = vcmp.gt.f32.partialorder %v1472, 1.0
      %vm1494 = vcmp.gt.f32.partialorder %v1474, 1.0
      %vm1495 = vcmp.gt.f32.partialorder %v1476, 1.0
      %vm1496 = vcmp.gt.f32.partialorder %v1478, 1.0
      %vm1497 = vcmp.gt.f32.partialorder %v1480, 1.0
      %vm1498 = vcmp.gt.f32.partialorder %v1482, 1.0
      %v1499 = vsel %vm1483, %v1403, %v1355
      %v1500 = vsel %vm1484, %v1404, %v1356
      %v1501 = vsel %vm1485, %v1405, %v1357
      %v1502 = vsel %vm1486, %v1406, %v1358
      %v1503 = vsel %vm1487, %v1407, %v1359
      %v1504 = vsel %vm1488, %v1408, %v1360
      %v1505 = vsel %vm1489, %v1409, %v1361
      %v1506 = vsel %vm1490, %v1410, %v1362
      %v1507 = vsel %vm1491, %v1411, %v1363
      %v1508 = vsel %vm1492, %v1412, %v1364
      %v1509 = vsel %vm1493, %v1413, %v1365
      %v1510 = vsel %vm1494, %v1414, %v1366
      %v1511 = vsel %vm1495, %v1415, %v1367
      %v1512 = vsel %vm1496, %v1416, %v1368
      %v1513 = vsel %vm1497, %v1417, %v1369
      %v1514 = vsel %vm1498, %v1418, %v1370
      %v1515 = vsel %vm1483, %v1371, %v1403
      %v1516 = vsel %vm1484, %v1372, %v1404
      %v1517 = vsel %vm1485, %v1373, %v1405
      %v1518 = vsel %vm1486, %v1374, %v1406
      %v1519 = vsel %vm1487, %v1375, %v1407
      %v1520 = vsel %vm1488, %v1376, %v1408
      %v1521 = vsel %vm1489, %v1377, %v1409
      %v1522 = vsel %vm1490, %v1378, %v1410
      %v1523 = vsel %vm1491, %v1379, %v1411
      %v1524 = vsel %vm1492, %v1380, %v1412
      %v1525 = vsel %vm1493, %v1381, %v1413
      %v1526 = vsel %vm1494, %v1382, %v1414
      %v1527 = vsel %vm1495, %v1383, %v1415
      %v1528 = vsel %vm1496, %v1384, %v1416
      %v1529 = vsel %vm1497, %v1385, %v1417
      %v1530 = vsel %vm1498, %v1386, %v1418
      %v1531 = vadd.f32 %v1499, %v1515
      %v1532 = vadd.f32 %v1500, %v1516
      %v1533 = vadd.f32 %v1501, %v1517
      %v1534 = vadd.f32 %v1502, %v1518
      %v1535 = vadd.f32 %v1503, %v1519
      %v1536 = vadd.f32 %v1504, %v1520
      %v1537 = vadd.f32 %v1505, %v1521
      %v1538 = vadd.f32 %v1506, %v1522
      %v1539 = vadd.f32 %v1507, %v1523
      %v1540 = vadd.f32 %v1508, %v1524
      %v1541 = vadd.f32 %v1509, %v1525
      %v1542 = vadd.f32 %v1510, %v1526
      %v1543 = vadd.f32 %v1511, %v1527
      %v1544 = vadd.f32 %v1512, %v1528
      %v1545 = vadd.f32 %v1513, %v1529
      %v1546 = vadd.f32 %v1514, %v1530
      %v1547 = vmul.f32 %v1531, 0.5
      %v1548 = vmul.f32 %v1532, 0.5
      %v1549 = vmul.f32 %v1533, 0.5
      %v1550 = vmul.f32 %v1534, 0.5
      %v1551 = vmul.f32 %v1535, 0.5
      %v1552 = vmul.f32 %v1536, 0.5
      %v1553 = vmul.f32 %v1537, 0.5
      %v1554 = vmul.f32 %v1538, 0.5
      %v1555 = vmul.f32 %v1539, 0.5
      %v1556 = vmul.f32 %v1540, 0.5
      %v1557 = vmul.f32 %v1541, 0.5
      %v1558 = vmul.f32 %v1542, 0.5
      %v1559 = vmul.f32 %v1543, 0.5
      %v1560 = vmul.f32 %v1544, 0.5
      %v1561 = vmul.f32 %v1545, 0.5
      %v1562 = vmul.f32 %v1546, 0.5
      %v1563 = vsub.f32 %v539, %v1547
      %v1564 = vsub.f32 %v540, %v1548
      %v1565 = vsub.f32 %v541, %v1549
      %v1566 = vsub.f32 %v542, %v1550
      %v1567 = vsub.f32 %v543, %v1551
      %v1568 = vsub.f32 %v544, %v1552
      %v1569 = vsub.f32 %v545, %v1553
      %v1570 = vsub.f32 %v546, %v1554
      %v1571 = vsub.f32 %v547, %v1555
      %v1572 = vsub.f32 %v548, %v1556
      %v1573 = vsub.f32 %v549, %v1557
      %v1574 = vsub.f32 %v550, %v1558
      %v1575 = vsub.f32 %v551, %v1559
      %v1576 = vsub.f32 %v552, %v1560
      %v1577 = vsub.f32 %v553, %v1561
      %v1578 = vsub.f32 %v554, %v1562
      %v1579 = vmax.f32 %v1563, 0.0
      %v1580 = vmax.f32 %v1564, 0.0
      %v1581 = vmax.f32 %v1565, 0.0
      %v1582 = vmax.f32 %v1566, 0.0
      %v1583 = vmax.f32 %v1567, 0.0
      %v1584 = vmax.f32 %v1568, 0.0
      %v1585 = vmax.f32 %v1569, 0.0
      %v1586 = vmax.f32 %v1570, 0.0
      %v1587 = vmax.f32 %v1571, 0.0
      %v1588 = vmax.f32 %v1572, 0.0
      %v1589 = vmax.f32 %v1573, 0.0
      %v1590 = vmax.f32 %v1574, 0.0
      %v1591 = vmax.f32 %v1575, 0.0
      %v1592 = vmax.f32 %v1576, 0.0
      %v1593 = vmax.f32 %v1577, 0.0
      %v1594 = vmax.f32 %v1578, 0.0
      %1595 = vadd.xlane.f32.xlu0 %v1579
      %v1596 = vpop.xlane.xlu0 %1595
      %1597 = vadd.xlane.f32.xlu0 %v1580
      %v1598 = vpop.xlane.xlu0 %1597
      %1599 = vadd.xlane.f32.xlu0 %v1581
      %v1600 = vpop.xlane.xlu0 %1599
      %1601 = vadd.xlane.f32.xlu0 %v1582
      %v1602 = vpop.xlane.xlu0 %1601
      %1603 = vadd.xlane.f32.xlu0 %v1583
      %v1604 = vpop.xlane.xlu0 %1603
      %1605 = vadd.xlane.f32.xlu0 %v1584
      %v1606 = vpop.xlane.xlu0 %1605
      %1607 = vadd.xlane.f32.xlu0 %v1585
      %v1608 = vpop.xlane.xlu0 %1607
      %1609 = vadd.xlane.f32.xlu0 %v1586
      %v1610 = vpop.xlane.xlu0 %1609
      %1611 = vadd.xlane.f32.xlu0 %v1587
      %v1612 = vpop.xlane.xlu0 %1611
      %1613 = vadd.xlane.f32.xlu0 %v1588
      %v1614 = vpop.xlane.xlu0 %1613
      %1615 = vadd.xlane.f32.xlu0 %v1589
      %v1616 = vpop.xlane.xlu0 %1615
      %1617 = vadd.xlane.f32.xlu0 %v1590
      %v1618 = vpop.xlane.xlu0 %1617
      %1619 = vadd.xlane.f32.xlu0 %v1591
      %v1620 = vpop.xlane.xlu0 %1619
      %1621 = vadd.xlane.f32.xlu0 %v1592
      %v1622 = vpop.xlane.xlu0 %1621
      %1623 = vadd.xlane.f32.xlu0 %v1593
      %v1624 = vpop.xlane.xlu0 %1623
      %1625 = vadd.xlane.f32.xlu0 %v1594
      %v1626 = vpop.xlane.xlu0 %1625
      %vm1627 = vcmp.gt.f32.partialorder %v1596, 1.0
      %vm1628 = vcmp.gt.f32.partialorder %v1598, 1.0
      %vm1629 = vcmp.gt.f32.partialorder %v1600, 1.0
      %vm1630 = vcmp.gt.f32.partialorder %v1602, 1.0
      %vm1631 = vcmp.gt.f32.partialorder %v1604, 1.0
      %vm1632 = vcmp.gt.f32.partialorder %v1606, 1.0
      %vm1633 = vcmp.gt.f32.partialorder %v1608, 1.0
      %vm1634 = vcmp.gt.f32.partialorder %v1610, 1.0
      %vm1635 = vcmp.gt.f32.partialorder %v1612, 1.0
      %vm1636 = vcmp.gt.f32.partialorder %v1614, 1.0
      %vm1637 = vcmp.gt.f32.partialorder %v1616, 1.0
      %vm1638 = vcmp.gt.f32.partialorder %v1618, 1.0
      %vm1639 = vcmp.gt.f32.partialorder %v1620, 1.0
      %vm1640 = vcmp.gt.f32.partialorder %v1622, 1.0
      %vm1641 = vcmp.gt.f32.partialorder %v1624, 1.0
      %vm1642 = vcmp.gt.f32.partialorder %v1626, 1.0
      %v1643 = vsel %vm1627, %v1547, %v1499
      %v1644 = vsel %vm1628, %v1548, %v1500
      %v1645 = vsel %vm1629, %v1549, %v1501
      %v1646 = vsel %vm1630, %v1550, %v1502
      %v1647 = vsel %vm1631, %v1551, %v1503
      %v1648 = vsel %vm1632, %v1552, %v1504
      %v1649 = vsel %vm1633, %v1553, %v1505
      %v1650 = vsel %vm1634, %v1554, %v1506
      %v1651 = vsel %vm1635, %v1555, %v1507
      %v1652 = vsel %vm1636, %v1556, %v1508
      %v1653 = vsel %vm1637, %v1557, %v1509
      %v1654 = vsel %vm1638, %v1558, %v1510
      %v1655 = vsel %vm1639, %v1559, %v1511
      %v1656 = vsel %vm1640, %v1560, %v1512
      %v1657 = vsel %vm1641, %v1561, %v1513
      %v1658 = vsel %vm1642, %v1562, %v1514
      %v1659 = vsel %vm1627, %v1515, %v1547
      %v1660 = vsel %vm1628, %v1516, %v1548
      %v1661 = vsel %vm1629, %v1517, %v1549
      %v1662 = vsel %vm1630, %v1518, %v1550
      %v1663 = vsel %vm1631, %v1519, %v1551
      %v1664 = vsel %vm1632, %v1520, %v1552
      %v1665 = vsel %vm1633, %v1521, %v1553
      %v1666 = vsel %vm1634, %v1522, %v1554
      %v1667 = vsel %vm1635, %v1523, %v1555
      %v1668 = vsel %vm1636, %v1524, %v1556
      %v1669 = vsel %vm1637, %v1525, %v1557
      %v1670 = vsel %vm1638, %v1526, %v1558
      %v1671 = vsel %vm1639, %v1527, %v1559
      %v1672 = vsel %vm1640, %v1528, %v1560
      %v1673 = vsel %vm1641, %v1529, %v1561
      %v1674 = vsel %vm1642, %v1530, %v1562
      %v1675 = vadd.f32 %v1643, %v1659
      %v1676 = vadd.f32 %v1644, %v1660
      %v1677 = vadd.f32 %v1645, %v1661
      %v1678 = vadd.f32 %v1646, %v1662
      %v1679 = vadd.f32 %v1647, %v1663
      %v1680 = vadd.f32 %v1648, %v1664
      %v1681 = vadd.f32 %v1649, %v1665
      %v1682 = vadd.f32 %v1650, %v1666
      %v1683 = vadd.f32 %v1651, %v1667
      %v1684 = vadd.f32 %v1652, %v1668
      %v1685 = vadd.f32 %v1653, %v1669
      %v1686 = vadd.f32 %v1654, %v1670
      %v1687 = vadd.f32 %v1655, %v1671
      %v1688 = vadd.f32 %v1656, %v1672
      %v1689 = vadd.f32 %v1657, %v1673
      %v1690 = vadd.f32 %v1658, %v1674
      %v1691 = vmul.f32 %v1675, 0.5
      %v1692 = vmul.f32 %v1676, 0.5
      %v1693 = vmul.f32 %v1677, 0.5
      %v1694 = vmul.f32 %v1678, 0.5
      %v1695 = vmul.f32 %v1679, 0.5
      %v1696 = vmul.f32 %v1680, 0.5
      %v1697 = vmul.f32 %v1681, 0.5
      %v1698 = vmul.f32 %v1682, 0.5
      %v1699 = vmul.f32 %v1683, 0.5
      %v1700 = vmul.f32 %v1684, 0.5
      %v1701 = vmul.f32 %v1685, 0.5
      %v1702 = vmul.f32 %v1686, 0.5
      %v1703 = vmul.f32 %v1687, 0.5
      %v1704 = vmul.f32 %v1688, 0.5
      %v1705 = vmul.f32 %v1689, 0.5
      %v1706 = vmul.f32 %v1690, 0.5
      %v1707 = vsub.f32 %v539, %v1691
      %v1708 = vsub.f32 %v540, %v1692
      %v1709 = vsub.f32 %v541, %v1693
      %v1710 = vsub.f32 %v542, %v1694
      %v1711 = vsub.f32 %v543, %v1695
      %v1712 = vsub.f32 %v544, %v1696
      %v1713 = vsub.f32 %v545, %v1697
      %v1714 = vsub.f32 %v546, %v1698
      %v1715 = vsub.f32 %v547, %v1699
      %v1716 = vsub.f32 %v548, %v1700
      %v1717 = vsub.f32 %v549, %v1701
      %v1718 = vsub.f32 %v550, %v1702
      %v1719 = vsub.f32 %v551, %v1703
      %v1720 = vsub.f32 %v552, %v1704
      %v1721 = vsub.f32 %v553, %v1705
      %v1722 = vsub.f32 %v554, %v1706
      %v1723 = vmax.f32 %v1707, 0.0
      %v1724 = vmax.f32 %v1708, 0.0
      %v1725 = vmax.f32 %v1709, 0.0
      %v1726 = vmax.f32 %v1710, 0.0
      %v1727 = vmax.f32 %v1711, 0.0
      %v1728 = vmax.f32 %v1712, 0.0
      %v1729 = vmax.f32 %v1713, 0.0
      %v1730 = vmax.f32 %v1714, 0.0
      %v1731 = vmax.f32 %v1715, 0.0
      %v1732 = vmax.f32 %v1716, 0.0
      %v1733 = vmax.f32 %v1717, 0.0
      %v1734 = vmax.f32 %v1718, 0.0
      %v1735 = vmax.f32 %v1719, 0.0
      %v1736 = vmax.f32 %v1720, 0.0
      %v1737 = vmax.f32 %v1721, 0.0
      %v1738 = vmax.f32 %v1722, 0.0
      %1739 = vadd.xlane.f32.xlu0 %v1723
      %v1740 = vpop.xlane.xlu0 %1739
      %1741 = vadd.xlane.f32.xlu0 %v1724
      %v1742 = vpop.xlane.xlu0 %1741
      %1743 = vadd.xlane.f32.xlu0 %v1725
      %v1744 = vpop.xlane.xlu0 %1743
      %1745 = vadd.xlane.f32.xlu0 %v1726
      %v1746 = vpop.xlane.xlu0 %1745
      %1747 = vadd.xlane.f32.xlu0 %v1727
      %v1748 = vpop.xlane.xlu0 %1747
      %1749 = vadd.xlane.f32.xlu0 %v1728
      %v1750 = vpop.xlane.xlu0 %1749
      %1751 = vadd.xlane.f32.xlu0 %v1729
      %v1752 = vpop.xlane.xlu0 %1751
      %1753 = vadd.xlane.f32.xlu0 %v1730
      %v1754 = vpop.xlane.xlu0 %1753
      %1755 = vadd.xlane.f32.xlu0 %v1731
      %v1756 = vpop.xlane.xlu0 %1755
      %1757 = vadd.xlane.f32.xlu0 %v1732
      %v1758 = vpop.xlane.xlu0 %1757
      %1759 = vadd.xlane.f32.xlu0 %v1733
      %v1760 = vpop.xlane.xlu0 %1759
      %1761 = vadd.xlane.f32.xlu0 %v1734
      %v1762 = vpop.xlane.xlu0 %1761
      %1763 = vadd.xlane.f32.xlu0 %v1735
      %v1764 = vpop.xlane.xlu0 %1763
      %1765 = vadd.xlane.f32.xlu0 %v1736
      %v1766 = vpop.xlane.xlu0 %1765
      %1767 = vadd.xlane.f32.xlu0 %v1737
      %v1768 = vpop.xlane.xlu0 %1767
      %1769 = vadd.xlane.f32.xlu0 %v1738
      %v1770 = vpop.xlane.xlu0 %1769
      %vm1771 = vcmp.gt.f32.partialorder %v1740, 1.0
      %vm1772 = vcmp.gt.f32.partialorder %v1742, 1.0
      %vm1773 = vcmp.gt.f32.partialorder %v1744, 1.0
      %vm1774 = vcmp.gt.f32.partialorder %v1746, 1.0
      %vm1775 = vcmp.gt.f32.partialorder %v1748, 1.0
      %vm1776 = vcmp.gt.f32.partialorder %v1750, 1.0
      %vm1777 = vcmp.gt.f32.partialorder %v1752, 1.0
      %vm1778 = vcmp.gt.f32.partialorder %v1754, 1.0
      %vm1779 = vcmp.gt.f32.partialorder %v1756, 1.0
      %vm1780 = vcmp.gt.f32.partialorder %v1758, 1.0
      %vm1781 = vcmp.gt.f32.partialorder %v1760, 1.0
      %vm1782 = vcmp.gt.f32.partialorder %v1762, 1.0
      %vm1783 = vcmp.gt.f32.partialorder %v1764, 1.0
      %vm1784 = vcmp.gt.f32.partialorder %v1766, 1.0
      %vm1785 = vcmp.gt.f32.partialorder %v1768, 1.0
      %vm1786 = vcmp.gt.f32.partialorder %v1770, 1.0
      %v1787 = vsel %vm1771, %v1691, %v1643
      %v1788 = vsel %vm1772, %v1692, %v1644
      %v1789 = vsel %vm1773, %v1693, %v1645
      %v1790 = vsel %vm1774, %v1694, %v1646
      %v1791 = vsel %vm1775, %v1695, %v1647
      %v1792 = vsel %vm1776, %v1696, %v1648
      %v1793 = vsel %vm1777, %v1697, %v1649
      %v1794 = vsel %vm1778, %v1698, %v1650
      %v1795 = vsel %vm1779, %v1699, %v1651
      %v1796 = vsel %vm1780, %v1700, %v1652
      %v1797 = vsel %vm1781, %v1701, %v1653
      %v1798 = vsel %vm1782, %v1702, %v1654
      %v1799 = vsel %vm1783, %v1703, %v1655
      %v1800 = vsel %vm1784, %v1704, %v1656
      %v1801 = vsel %vm1785, %v1705, %v1657
      %v1802 = vsel %vm1786, %v1706, %v1658
      %v1803 = vsel %vm1771, %v1659, %v1691
      %v1804 = vsel %vm1772, %v1660, %v1692
      %v1805 = vsel %vm1773, %v1661, %v1693
      %v1806 = vsel %vm1774, %v1662, %v1694
      %v1807 = vsel %vm1775, %v1663, %v1695
      %v1808 = vsel %vm1776, %v1664, %v1696
      %v1809 = vsel %vm1777, %v1665, %v1697
      %v1810 = vsel %vm1778, %v1666, %v1698
      %v1811 = vsel %vm1779, %v1667, %v1699
      %v1812 = vsel %vm1780, %v1668, %v1700
      %v1813 = vsel %vm1781, %v1669, %v1701
      %v1814 = vsel %vm1782, %v1670, %v1702
      %v1815 = vsel %vm1783, %v1671, %v1703
      %v1816 = vsel %vm1784, %v1672, %v1704
      %v1817 = vsel %vm1785, %v1673, %v1705
      %v1818 = vsel %vm1786, %v1674, %v1706
      %v1819 = vadd.f32 %v1787, %v1803
      %v1820 = vadd.f32 %v1788, %v1804
      %v1821 = vadd.f32 %v1789, %v1805
      %v1822 = vadd.f32 %v1790, %v1806
      %v1823 = vadd.f32 %v1791, %v1807
      %v1824 = vadd.f32 %v1792, %v1808
      %v1825 = vadd.f32 %v1793, %v1809
      %v1826 = vadd.f32 %v1794, %v1810
      %v1827 = vadd.f32 %v1795, %v1811
      %v1828 = vadd.f32 %v1796, %v1812
      %v1829 = vadd.f32 %v1797, %v1813
      %v1830 = vadd.f32 %v1798, %v1814
      %v1831 = vadd.f32 %v1799, %v1815
      %v1832 = vadd.f32 %v1800, %v1816
      %v1833 = vadd.f32 %v1801, %v1817
      %v1834 = vadd.f32 %v1802, %v1818
      %v1835 = vmul.f32 %v1819, 0.5
      %v1836 = vmul.f32 %v1820, 0.5
      %v1837 = vmul.f32 %v1821, 0.5
      %v1838 = vmul.f32 %v1822, 0.5
      %v1839 = vmul.f32 %v1823, 0.5
      %v1840 = vmul.f32 %v1824, 0.5
      %v1841 = vmul.f32 %v1825, 0.5
      %v1842 = vmul.f32 %v1826, 0.5
      %v1843 = vmul.f32 %v1827, 0.5
      %v1844 = vmul.f32 %v1828, 0.5
      %v1845 = vmul.f32 %v1829, 0.5
      %v1846 = vmul.f32 %v1830, 0.5
      %v1847 = vmul.f32 %v1831, 0.5
      %v1848 = vmul.f32 %v1832, 0.5
      %v1849 = vmul.f32 %v1833, 0.5
      %v1850 = vmul.f32 %v1834, 0.5
      %v1851 = vsub.f32 %v539, %v1835
      %v1852 = vsub.f32 %v540, %v1836
      %v1853 = vsub.f32 %v541, %v1837
      %v1854 = vsub.f32 %v542, %v1838
      %v1855 = vsub.f32 %v543, %v1839
      %v1856 = vsub.f32 %v544, %v1840
      %v1857 = vsub.f32 %v545, %v1841
      %v1858 = vsub.f32 %v546, %v1842
      %v1859 = vsub.f32 %v547, %v1843
      %v1860 = vsub.f32 %v548, %v1844
      %v1861 = vsub.f32 %v549, %v1845
      %v1862 = vsub.f32 %v550, %v1846
      %v1863 = vsub.f32 %v551, %v1847
      %v1864 = vsub.f32 %v552, %v1848
      %v1865 = vsub.f32 %v553, %v1849
      %v1866 = vsub.f32 %v554, %v1850
      %v1867 = vmax.f32 %v1851, 0.0
      %v1868 = vmax.f32 %v1852, 0.0
      %v1869 = vmax.f32 %v1853, 0.0
      %v1870 = vmax.f32 %v1854, 0.0
      %v1871 = vmax.f32 %v1855, 0.0
      %v1872 = vmax.f32 %v1856, 0.0
      %v1873 = vmax.f32 %v1857, 0.0
      %v1874 = vmax.f32 %v1858, 0.0
      %v1875 = vmax.f32 %v1859, 0.0
      %v1876 = vmax.f32 %v1860, 0.0
      %v1877 = vmax.f32 %v1861, 0.0
      %v1878 = vmax.f32 %v1862, 0.0
      %v1879 = vmax.f32 %v1863, 0.0
      %v1880 = vmax.f32 %v1864, 0.0
      %v1881 = vmax.f32 %v1865, 0.0
      %v1882 = vmax.f32 %v1866, 0.0
      %1883 = vadd.xlane.f32.xlu0 %v1867
      %v1884 = vpop.xlane.xlu0 %1883
      %1885 = vadd.xlane.f32.xlu0 %v1868
      %v1886 = vpop.xlane.xlu0 %1885
      %1887 = vadd.xlane.f32.xlu0 %v1869
      %v1888 = vpop.xlane.xlu0 %1887
      %1889 = vadd.xlane.f32.xlu0 %v1870
      %v1890 = vpop.xlane.xlu0 %1889
      %1891 = vadd.xlane.f32.xlu0 %v1871
      %v1892 = vpop.xlane.xlu0 %1891
      %1893 = vadd.xlane.f32.xlu0 %v1872
      %v1894 = vpop.xlane.xlu0 %1893
      %1895 = vadd.xlane.f32.xlu0 %v1873
      %v1896 = vpop.xlane.xlu0 %1895
      %1897 = vadd.xlane.f32.xlu0 %v1874
      %v1898 = vpop.xlane.xlu0 %1897
      %1899 = vadd.xlane.f32.xlu0 %v1875
      %v1900 = vpop.xlane.xlu0 %1899
      %1901 = vadd.xlane.f32.xlu0 %v1876
      %v1902 = vpop.xlane.xlu0 %1901
      %1903 = vadd.xlane.f32.xlu0 %v1877
      %v1904 = vpop.xlane.xlu0 %1903
      %1905 = vadd.xlane.f32.xlu0 %v1878
      %v1906 = vpop.xlane.xlu0 %1905
      %1907 = vadd.xlane.f32.xlu0 %v1879
      %v1908 = vpop.xlane.xlu0 %1907
      %1909 = vadd.xlane.f32.xlu0 %v1880
      %v1910 = vpop.xlane.xlu0 %1909
      %1911 = vadd.xlane.f32.xlu0 %v1881
      %v1912 = vpop.xlane.xlu0 %1911
      %1913 = vadd.xlane.f32.xlu0 %v1882
      %v1914 = vpop.xlane.xlu0 %1913
      %vm1915 = vcmp.gt.f32.partialorder %v1884, 1.0
      %vm1916 = vcmp.gt.f32.partialorder %v1886, 1.0
      %vm1917 = vcmp.gt.f32.partialorder %v1888, 1.0
      %vm1918 = vcmp.gt.f32.partialorder %v1890, 1.0
      %vm1919 = vcmp.gt.f32.partialorder %v1892, 1.0
      %vm1920 = vcmp.gt.f32.partialorder %v1894, 1.0
      %vm1921 = vcmp.gt.f32.partialorder %v1896, 1.0
      %vm1922 = vcmp.gt.f32.partialorder %v1898, 1.0
      %vm1923 = vcmp.gt.f32.partialorder %v1900, 1.0
      %vm1924 = vcmp.gt.f32.partialorder %v1902, 1.0
      %vm1925 = vcmp.gt.f32.partialorder %v1904, 1.0
      %vm1926 = vcmp.gt.f32.partialorder %v1906, 1.0
      %vm1927 = vcmp.gt.f32.partialorder %v1908, 1.0
      %vm1928 = vcmp.gt.f32.partialorder %v1910, 1.0
      %vm1929 = vcmp.gt.f32.partialorder %v1912, 1.0
      %vm1930 = vcmp.gt.f32.partialorder %v1914, 1.0
      %v1931 = vsel %vm1915, %v1835, %v1787
      %v1932 = vsel %vm1916, %v1836, %v1788
      %v1933 = vsel %vm1917, %v1837, %v1789
      %v1934 = vsel %vm1918, %v1838, %v1790
      %v1935 = vsel %vm1919, %v1839, %v1791
      %v1936 = vsel %vm1920, %v1840, %v1792
      %v1937 = vsel %vm1921, %v1841, %v1793
      %v1938 = vsel %vm1922, %v1842, %v1794
      %v1939 = vsel %vm1923, %v1843, %v1795
      %v1940 = vsel %vm1924, %v1844, %v1796
      %v1941 = vsel %vm1925, %v1845, %v1797
      %v1942 = vsel %vm1926, %v1846, %v1798
      %v1943 = vsel %vm1927, %v1847, %v1799
      %v1944 = vsel %vm1928, %v1848, %v1800
      %v1945 = vsel %vm1929, %v1849, %v1801
      %v1946 = vsel %vm1930, %v1850, %v1802
      %v1947 = vsel %vm1915, %v1803, %v1835
      %v1948 = vsel %vm1916, %v1804, %v1836
      %v1949 = vsel %vm1917, %v1805, %v1837
      %v1950 = vsel %vm1918, %v1806, %v1838
      %v1951 = vsel %vm1919, %v1807, %v1839
      %v1952 = vsel %vm1920, %v1808, %v1840
      %v1953 = vsel %vm1921, %v1809, %v1841
      %v1954 = vsel %vm1922, %v1810, %v1842
      %v1955 = vsel %vm1923, %v1811, %v1843
      %v1956 = vsel %vm1924, %v1812, %v1844
      %v1957 = vsel %vm1925, %v1813, %v1845
      %v1958 = vsel %vm1926, %v1814, %v1846
      %v1959 = vsel %vm1927, %v1815, %v1847
      %v1960 = vsel %vm1928, %v1816, %v1848
      %v1961 = vsel %vm1929, %v1817, %v1849
      %v1962 = vsel %vm1930, %v1818, %v1850
      %v1963 = vadd.f32 %v1931, %v1947
      %v1964 = vadd.f32 %v1932, %v1948
      %v1965 = vadd.f32 %v1933, %v1949
      %v1966 = vadd.f32 %v1934, %v1950
      %v1967 = vadd.f32 %v1935, %v1951
      %v1968 = vadd.f32 %v1936, %v1952
      %v1969 = vadd.f32 %v1937, %v1953
      %v1970 = vadd.f32 %v1938, %v1954
      %v1971 = vadd.f32 %v1939, %v1955
      %v1972 = vadd.f32 %v1940, %v1956
      %v1973 = vadd.f32 %v1941, %v1957
      %v1974 = vadd.f32 %v1942, %v1958
      %v1975 = vadd.f32 %v1943, %v1959
      %v1976 = vadd.f32 %v1944, %v1960
      %v1977 = vadd.f32 %v1945, %v1961
      %v1978 = vadd.f32 %v1946, %v1962
      %v1979 = vmul.f32 %v1963, 0.5
      %v1980 = vmul.f32 %v1964, 0.5
      %v1981 = vmul.f32 %v1965, 0.5
      %v1982 = vmul.f32 %v1966, 0.5
      %v1983 = vmul.f32 %v1967, 0.5
      %v1984 = vmul.f32 %v1968, 0.5
      %v1985 = vmul.f32 %v1969, 0.5
      %v1986 = vmul.f32 %v1970, 0.5
      %v1987 = vmul.f32 %v1971, 0.5
      %v1988 = vmul.f32 %v1972, 0.5
      %v1989 = vmul.f32 %v1973, 0.5
      %v1990 = vmul.f32 %v1974, 0.5
      %v1991 = vmul.f32 %v1975, 0.5
      %v1992 = vmul.f32 %v1976, 0.5
      %v1993 = vmul.f32 %v1977, 0.5
      %v1994 = vmul.f32 %v1978, 0.5
      %v1995 = vsub.f32 %v539, %v1979
      %v1996 = vsub.f32 %v540, %v1980
      %v1997 = vsub.f32 %v541, %v1981
      %v1998 = vsub.f32 %v542, %v1982
      %v1999 = vsub.f32 %v543, %v1983
      %v2000 = vsub.f32 %v544, %v1984
      %v2001 = vsub.f32 %v545, %v1985
      %v2002 = vsub.f32 %v546, %v1986
      %v2003 = vsub.f32 %v547, %v1987
      %v2004 = vsub.f32 %v548, %v1988
      %v2005 = vsub.f32 %v549, %v1989
      %v2006 = vsub.f32 %v550, %v1990
      %v2007 = vsub.f32 %v551, %v1991
      %v2008 = vsub.f32 %v552, %v1992
      %v2009 = vsub.f32 %v553, %v1993
      %v2010 = vsub.f32 %v554, %v1994
      %v2011 = vmax.f32 %v1995, 0.0
      %v2012 = vmax.f32 %v1996, 0.0
      %v2013 = vmax.f32 %v1997, 0.0
      %v2014 = vmax.f32 %v1998, 0.0
      %v2015 = vmax.f32 %v1999, 0.0
      %v2016 = vmax.f32 %v2000, 0.0
      %v2017 = vmax.f32 %v2001, 0.0
      %v2018 = vmax.f32 %v2002, 0.0
      %v2019 = vmax.f32 %v2003, 0.0
      %v2020 = vmax.f32 %v2004, 0.0
      %v2021 = vmax.f32 %v2005, 0.0
      %v2022 = vmax.f32 %v2006, 0.0
      %v2023 = vmax.f32 %v2007, 0.0
      %v2024 = vmax.f32 %v2008, 0.0
      %v2025 = vmax.f32 %v2009, 0.0
      %v2026 = vmax.f32 %v2010, 0.0
      %2027 = vadd.xlane.f32.xlu0 %v2011
      %v2028 = vpop.xlane.xlu0 %2027
      %2029 = vadd.xlane.f32.xlu0 %v2012
      %v2030 = vpop.xlane.xlu0 %2029
      %2031 = vadd.xlane.f32.xlu0 %v2013
      %v2032 = vpop.xlane.xlu0 %2031
      %2033 = vadd.xlane.f32.xlu0 %v2014
      %v2034 = vpop.xlane.xlu0 %2033
      %2035 = vadd.xlane.f32.xlu0 %v2015
      %v2036 = vpop.xlane.xlu0 %2035
      %2037 = vadd.xlane.f32.xlu0 %v2016
      %v2038 = vpop.xlane.xlu0 %2037
      %2039 = vadd.xlane.f32.xlu0 %v2017
      %v2040 = vpop.xlane.xlu0 %2039
      %2041 = vadd.xlane.f32.xlu0 %v2018
      %v2042 = vpop.xlane.xlu0 %2041
      %2043 = vadd.xlane.f32.xlu0 %v2019
      %v2044 = vpop.xlane.xlu0 %2043
      %2045 = vadd.xlane.f32.xlu0 %v2020
      %v2046 = vpop.xlane.xlu0 %2045
      %2047 = vadd.xlane.f32.xlu0 %v2021
      %v2048 = vpop.xlane.xlu0 %2047
      %2049 = vadd.xlane.f32.xlu0 %v2022
      %v2050 = vpop.xlane.xlu0 %2049
      %2051 = vadd.xlane.f32.xlu0 %v2023
      %v2052 = vpop.xlane.xlu0 %2051
      %2053 = vadd.xlane.f32.xlu0 %v2024
      %v2054 = vpop.xlane.xlu0 %2053
      %2055 = vadd.xlane.f32.xlu0 %v2025
      %v2056 = vpop.xlane.xlu0 %2055
      %2057 = vadd.xlane.f32.xlu0 %v2026
      %v2058 = vpop.xlane.xlu0 %2057
      %vm2059 = vcmp.gt.f32.partialorder %v2028, 1.0
      %vm2060 = vcmp.gt.f32.partialorder %v2030, 1.0
      %vm2061 = vcmp.gt.f32.partialorder %v2032, 1.0
      %vm2062 = vcmp.gt.f32.partialorder %v2034, 1.0
      %vm2063 = vcmp.gt.f32.partialorder %v2036, 1.0
      %vm2064 = vcmp.gt.f32.partialorder %v2038, 1.0
      %vm2065 = vcmp.gt.f32.partialorder %v2040, 1.0
      %vm2066 = vcmp.gt.f32.partialorder %v2042, 1.0
      %vm2067 = vcmp.gt.f32.partialorder %v2044, 1.0
      %vm2068 = vcmp.gt.f32.partialorder %v2046, 1.0
      %vm2069 = vcmp.gt.f32.partialorder %v2048, 1.0
      %vm2070 = vcmp.gt.f32.partialorder %v2050, 1.0
      %vm2071 = vcmp.gt.f32.partialorder %v2052, 1.0
      %vm2072 = vcmp.gt.f32.partialorder %v2054, 1.0
      %vm2073 = vcmp.gt.f32.partialorder %v2056, 1.0
      %vm2074 = vcmp.gt.f32.partialorder %v2058, 1.0
      %v2075 = vsel %vm2059, %v1979, %v1931
      %v2076 = vsel %vm2060, %v1980, %v1932
      %v2077 = vsel %vm2061, %v1981, %v1933
      %v2078 = vsel %vm2062, %v1982, %v1934
      %v2079 = vsel %vm2063, %v1983, %v1935
      %v2080 = vsel %vm2064, %v1984, %v1936
      %v2081 = vsel %vm2065, %v1985, %v1937
      %v2082 = vsel %vm2066, %v1986, %v1938
      %v2083 = vsel %vm2067, %v1987, %v1939
      %v2084 = vsel %vm2068, %v1988, %v1940
      %v2085 = vsel %vm2069, %v1989, %v1941
      %v2086 = vsel %vm2070, %v1990, %v1942
      %v2087 = vsel %vm2071, %v1991, %v1943
      %v2088 = vsel %vm2072, %v1992, %v1944
      %v2089 = vsel %vm2073, %v1993, %v1945
      %v2090 = vsel %vm2074, %v1994, %v1946
      %v2091 = vsel %vm2059, %v1947, %v1979
      %v2092 = vsel %vm2060, %v1948, %v1980
      %v2093 = vsel %vm2061, %v1949, %v1981
      %v2094 = vsel %vm2062, %v1950, %v1982
      %v2095 = vsel %vm2063, %v1951, %v1983
      %v2096 = vsel %vm2064, %v1952, %v1984
      %v2097 = vsel %vm2065, %v1953, %v1985
      %v2098 = vsel %vm2066, %v1954, %v1986
      %v2099 = vsel %vm2067, %v1955, %v1987
      %v2100 = vsel %vm2068, %v1956, %v1988
      %v2101 = vsel %vm2069, %v1957, %v1989
      %v2102 = vsel %vm2070, %v1958, %v1990
      %v2103 = vsel %vm2071, %v1959, %v1991
      %v2104 = vsel %vm2072, %v1960, %v1992
      %v2105 = vsel %vm2073, %v1961, %v1993
      %v2106 = vsel %vm2074, %v1962, %v1994
      %v2107 = vadd.f32 %v2075, %v2091
      %v2108 = vadd.f32 %v2076, %v2092
      %v2109 = vadd.f32 %v2077, %v2093
      %v2110 = vadd.f32 %v2078, %v2094
      %v2111 = vadd.f32 %v2079, %v2095
      %v2112 = vadd.f32 %v2080, %v2096
      %v2113 = vadd.f32 %v2081, %v2097
      %v2114 = vadd.f32 %v2082, %v2098
      %v2115 = vadd.f32 %v2083, %v2099
      %v2116 = vadd.f32 %v2084, %v2100
      %v2117 = vadd.f32 %v2085, %v2101
      %v2118 = vadd.f32 %v2086, %v2102
      %v2119 = vadd.f32 %v2087, %v2103
      %v2120 = vadd.f32 %v2088, %v2104
      %v2121 = vadd.f32 %v2089, %v2105
      %v2122 = vadd.f32 %v2090, %v2106
      %v2123 = vmul.f32 %v2107, 0.5
      %v2124 = vmul.f32 %v2108, 0.5
      %v2125 = vmul.f32 %v2109, 0.5
      %v2126 = vmul.f32 %v2110, 0.5
      %v2127 = vmul.f32 %v2111, 0.5
      %v2128 = vmul.f32 %v2112, 0.5
      %v2129 = vmul.f32 %v2113, 0.5
      %v2130 = vmul.f32 %v2114, 0.5
      %v2131 = vmul.f32 %v2115, 0.5
      %v2132 = vmul.f32 %v2116, 0.5
      %v2133 = vmul.f32 %v2117, 0.5
      %v2134 = vmul.f32 %v2118, 0.5
      %v2135 = vmul.f32 %v2119, 0.5
      %v2136 = vmul.f32 %v2120, 0.5
      %v2137 = vmul.f32 %v2121, 0.5
      %v2138 = vmul.f32 %v2122, 0.5
      %v2139 = vsub.f32 %v539, %v2123
      %v2140 = vsub.f32 %v540, %v2124
      %v2141 = vsub.f32 %v541, %v2125
      %v2142 = vsub.f32 %v542, %v2126
      %v2143 = vsub.f32 %v543, %v2127
      %v2144 = vsub.f32 %v544, %v2128
      %v2145 = vsub.f32 %v545, %v2129
      %v2146 = vsub.f32 %v546, %v2130
      %v2147 = vsub.f32 %v547, %v2131
      %v2148 = vsub.f32 %v548, %v2132
      %v2149 = vsub.f32 %v549, %v2133
      %v2150 = vsub.f32 %v550, %v2134
      %v2151 = vsub.f32 %v551, %v2135
      %v2152 = vsub.f32 %v552, %v2136
      %v2153 = vsub.f32 %v553, %v2137
      %v2154 = vsub.f32 %v554, %v2138
      %v2155 = vmax.f32 %v2139, 0.0
      %v2156 = vmax.f32 %v2140, 0.0
      %v2157 = vmax.f32 %v2141, 0.0
      %v2158 = vmax.f32 %v2142, 0.0
      %v2159 = vmax.f32 %v2143, 0.0
      %v2160 = vmax.f32 %v2144, 0.0
      %v2161 = vmax.f32 %v2145, 0.0
      %v2162 = vmax.f32 %v2146, 0.0
      %v2163 = vmax.f32 %v2147, 0.0
      %v2164 = vmax.f32 %v2148, 0.0
      %v2165 = vmax.f32 %v2149, 0.0
      %v2166 = vmax.f32 %v2150, 0.0
      %v2167 = vmax.f32 %v2151, 0.0
      %v2168 = vmax.f32 %v2152, 0.0
      %v2169 = vmax.f32 %v2153, 0.0
      %v2170 = vmax.f32 %v2154, 0.0
      %2171 = vadd.xlane.f32.xlu0 %v2155
      %v2172 = vpop.xlane.xlu0 %2171
      %2173 = vadd.xlane.f32.xlu0 %v2156
      %v2174 = vpop.xlane.xlu0 %2173
      %2175 = vadd.xlane.f32.xlu0 %v2157
      %v2176 = vpop.xlane.xlu0 %2175
      %2177 = vadd.xlane.f32.xlu0 %v2158
      %v2178 = vpop.xlane.xlu0 %2177
      %2179 = vadd.xlane.f32.xlu0 %v2159
      %v2180 = vpop.xlane.xlu0 %2179
      %2181 = vadd.xlane.f32.xlu0 %v2160
      %v2182 = vpop.xlane.xlu0 %2181
      %2183 = vadd.xlane.f32.xlu0 %v2161
      %v2184 = vpop.xlane.xlu0 %2183
      %2185 = vadd.xlane.f32.xlu0 %v2162
      %v2186 = vpop.xlane.xlu0 %2185
      %2187 = vadd.xlane.f32.xlu0 %v2163
      %v2188 = vpop.xlane.xlu0 %2187
      %2189 = vadd.xlane.f32.xlu0 %v2164
      %v2190 = vpop.xlane.xlu0 %2189
      %2191 = vadd.xlane.f32.xlu0 %v2165
      %v2192 = vpop.xlane.xlu0 %2191
      %2193 = vadd.xlane.f32.xlu0 %v2166
      %v2194 = vpop.xlane.xlu0 %2193
      %2195 = vadd.xlane.f32.xlu0 %v2167
      %v2196 = vpop.xlane.xlu0 %2195
      %2197 = vadd.xlane.f32.xlu0 %v2168
      %v2198 = vpop.xlane.xlu0 %2197
      %2199 = vadd.xlane.f32.xlu0 %v2169
      %v2200 = vpop.xlane.xlu0 %2199
      %2201 = vadd.xlane.f32.xlu0 %v2170
      %v2202 = vpop.xlane.xlu0 %2201
      %vm2203 = vcmp.gt.f32.partialorder %v2172, 1.0
      %vm2204 = vcmp.gt.f32.partialorder %v2174, 1.0
      %vm2205 = vcmp.gt.f32.partialorder %v2176, 1.0
      %vm2206 = vcmp.gt.f32.partialorder %v2178, 1.0
      %vm2207 = vcmp.gt.f32.partialorder %v2180, 1.0
      %vm2208 = vcmp.gt.f32.partialorder %v2182, 1.0
      %vm2209 = vcmp.gt.f32.partialorder %v2184, 1.0
      %vm2210 = vcmp.gt.f32.partialorder %v2186, 1.0
      %vm2211 = vcmp.gt.f32.partialorder %v2188, 1.0
      %vm2212 = vcmp.gt.f32.partialorder %v2190, 1.0
      %vm2213 = vcmp.gt.f32.partialorder %v2192, 1.0
      %vm2214 = vcmp.gt.f32.partialorder %v2194, 1.0
      %vm2215 = vcmp.gt.f32.partialorder %v2196, 1.0
      %vm2216 = vcmp.gt.f32.partialorder %v2198, 1.0
      %vm2217 = vcmp.gt.f32.partialorder %v2200, 1.0
      %vm2218 = vcmp.gt.f32.partialorder %v2202, 1.0
      %v2219 = vsel %vm2203, %v2123, %v2075
      %v2220 = vsel %vm2204, %v2124, %v2076
      %v2221 = vsel %vm2205, %v2125, %v2077
      %v2222 = vsel %vm2206, %v2126, %v2078
      %v2223 = vsel %vm2207, %v2127, %v2079
      %v2224 = vsel %vm2208, %v2128, %v2080
      %v2225 = vsel %vm2209, %v2129, %v2081
      %v2226 = vsel %vm2210, %v2130, %v2082
      %v2227 = vsel %vm2211, %v2131, %v2083
      %v2228 = vsel %vm2212, %v2132, %v2084
      %v2229 = vsel %vm2213, %v2133, %v2085
      %v2230 = vsel %vm2214, %v2134, %v2086
      %v2231 = vsel %vm2215, %v2135, %v2087
      %v2232 = vsel %vm2216, %v2136, %v2088
      %v2233 = vsel %vm2217, %v2137, %v2089
      %v2234 = vsel %vm2218, %v2138, %v2090
      %v2235 = vsel %vm2203, %v2091, %v2123
      %v2236 = vsel %vm2204, %v2092, %v2124
      %v2237 = vsel %vm2205, %v2093, %v2125
      %v2238 = vsel %vm2206, %v2094, %v2126
      %v2239 = vsel %vm2207, %v2095, %v2127
      %v2240 = vsel %vm2208, %v2096, %v2128
      %v2241 = vsel %vm2209, %v2097, %v2129
      %v2242 = vsel %vm2210, %v2098, %v2130
      %v2243 = vsel %vm2211, %v2099, %v2131
      %v2244 = vsel %vm2212, %v2100, %v2132
      %v2245 = vsel %vm2213, %v2101, %v2133
      %v2246 = vsel %vm2214, %v2102, %v2134
      %v2247 = vsel %vm2215, %v2103, %v2135
      %v2248 = vsel %vm2216, %v2104, %v2136
      %v2249 = vsel %vm2217, %v2105, %v2137
      %v2250 = vsel %vm2218, %v2106, %v2138
      %v2251 = vadd.f32 %v2219, %v2235
      %v2252 = vadd.f32 %v2220, %v2236
      %v2253 = vadd.f32 %v2221, %v2237
      %v2254 = vadd.f32 %v2222, %v2238
      %v2255 = vadd.f32 %v2223, %v2239
      %v2256 = vadd.f32 %v2224, %v2240
      %v2257 = vadd.f32 %v2225, %v2241
      %v2258 = vadd.f32 %v2226, %v2242
      %v2259 = vadd.f32 %v2227, %v2243
      %v2260 = vadd.f32 %v2228, %v2244
      %v2261 = vadd.f32 %v2229, %v2245
      %v2262 = vadd.f32 %v2230, %v2246
      %v2263 = vadd.f32 %v2231, %v2247
      %v2264 = vadd.f32 %v2232, %v2248
      %v2265 = vadd.f32 %v2233, %v2249
      %v2266 = vadd.f32 %v2234, %v2250
      %v2267 = vmul.f32 %v2251, 0.5
      %v2268 = vmul.f32 %v2252, 0.5
      %v2269 = vmul.f32 %v2253, 0.5
      %v2270 = vmul.f32 %v2254, 0.5
      %v2271 = vmul.f32 %v2255, 0.5
      %v2272 = vmul.f32 %v2256, 0.5
      %v2273 = vmul.f32 %v2257, 0.5
      %v2274 = vmul.f32 %v2258, 0.5
      %v2275 = vmul.f32 %v2259, 0.5
      %v2276 = vmul.f32 %v2260, 0.5
      %v2277 = vmul.f32 %v2261, 0.5
      %v2278 = vmul.f32 %v2262, 0.5
      %v2279 = vmul.f32 %v2263, 0.5
      %v2280 = vmul.f32 %v2264, 0.5
      %v2281 = vmul.f32 %v2265, 0.5
      %v2282 = vmul.f32 %v2266, 0.5
      %v2283 = vsub.f32 %v539, %v2267
      %v2284 = vsub.f32 %v540, %v2268
      %v2285 = vsub.f32 %v541, %v2269
      %v2286 = vsub.f32 %v542, %v2270
      %v2287 = vsub.f32 %v543, %v2271
      %v2288 = vsub.f32 %v544, %v2272
      %v2289 = vsub.f32 %v545, %v2273
      %v2290 = vsub.f32 %v546, %v2274
      %v2291 = vsub.f32 %v547, %v2275
      %v2292 = vsub.f32 %v548, %v2276
      %v2293 = vsub.f32 %v549, %v2277
      %v2294 = vsub.f32 %v550, %v2278
      %v2295 = vsub.f32 %v551, %v2279
      %v2296 = vsub.f32 %v552, %v2280
      %v2297 = vsub.f32 %v553, %v2281
      %v2298 = vsub.f32 %v554, %v2282
      %v2299 = vmax.f32 %v2283, 0.0
      %v2300 = vmax.f32 %v2284, 0.0
      %v2301 = vmax.f32 %v2285, 0.0
      %v2302 = vmax.f32 %v2286, 0.0
      %v2303 = vmax.f32 %v2287, 0.0
      %v2304 = vmax.f32 %v2288, 0.0
      %v2305 = vmax.f32 %v2289, 0.0
      %v2306 = vmax.f32 %v2290, 0.0
      %v2307 = vmax.f32 %v2291, 0.0
      %v2308 = vmax.f32 %v2292, 0.0
      %v2309 = vmax.f32 %v2293, 0.0
      %v2310 = vmax.f32 %v2294, 0.0
      %v2311 = vmax.f32 %v2295, 0.0
      %v2312 = vmax.f32 %v2296, 0.0
      %v2313 = vmax.f32 %v2297, 0.0
      %v2314 = vmax.f32 %v2298, 0.0
      %2315 = vadd.xlane.f32.xlu0 %v2299
      %v2316 = vpop.xlane.xlu0 %2315
      %2317 = vadd.xlane.f32.xlu0 %v2300
      %v2318 = vpop.xlane.xlu0 %2317
      %2319 = vadd.xlane.f32.xlu0 %v2301
      %v2320 = vpop.xlane.xlu0 %2319
      %2321 = vadd.xlane.f32.xlu0 %v2302
      %v2322 = vpop.xlane.xlu0 %2321
      %2323 = vadd.xlane.f32.xlu0 %v2303
      %v2324 = vpop.xlane.xlu0 %2323
      %2325 = vadd.xlane.f32.xlu0 %v2304
      %v2326 = vpop.xlane.xlu0 %2325
      %2327 = vadd.xlane.f32.xlu0 %v2305
      %v2328 = vpop.xlane.xlu0 %2327
      %2329 = vadd.xlane.f32.xlu0 %v2306
      %v2330 = vpop.xlane.xlu0 %2329
      %2331 = vadd.xlane.f32.xlu0 %v2307
      %v2332 = vpop.xlane.xlu0 %2331
      %2333 = vadd.xlane.f32.xlu0 %v2308
      %v2334 = vpop.xlane.xlu0 %2333
      %2335 = vadd.xlane.f32.xlu0 %v2309
      %v2336 = vpop.xlane.xlu0 %2335
      %2337 = vadd.xlane.f32.xlu0 %v2310
      %v2338 = vpop.xlane.xlu0 %2337
      %2339 = vadd.xlane.f32.xlu0 %v2311
      %v2340 = vpop.xlane.xlu0 %2339
      %2341 = vadd.xlane.f32.xlu0 %v2312
      %v2342 = vpop.xlane.xlu0 %2341
      %2343 = vadd.xlane.f32.xlu0 %v2313
      %v2344 = vpop.xlane.xlu0 %2343
      %2345 = vadd.xlane.f32.xlu0 %v2314
      %v2346 = vpop.xlane.xlu0 %2345
      %vm2347 = vcmp.gt.f32.partialorder %v2316, 1.0
      %vm2348 = vcmp.gt.f32.partialorder %v2318, 1.0
      %vm2349 = vcmp.gt.f32.partialorder %v2320, 1.0
      %vm2350 = vcmp.gt.f32.partialorder %v2322, 1.0
      %vm2351 = vcmp.gt.f32.partialorder %v2324, 1.0
      %vm2352 = vcmp.gt.f32.partialorder %v2326, 1.0
      %vm2353 = vcmp.gt.f32.partialorder %v2328, 1.0
      %vm2354 = vcmp.gt.f32.partialorder %v2330, 1.0
      %vm2355 = vcmp.gt.f32.partialorder %v2332, 1.0
      %vm2356 = vcmp.gt.f32.partialorder %v2334, 1.0
      %vm2357 = vcmp.gt.f32.partialorder %v2336, 1.0
      %vm2358 = vcmp.gt.f32.partialorder %v2338, 1.0
      %vm2359 = vcmp.gt.f32.partialorder %v2340, 1.0
      %vm2360 = vcmp.gt.f32.partialorder %v2342, 1.0
      %vm2361 = vcmp.gt.f32.partialorder %v2344, 1.0
      %vm2362 = vcmp.gt.f32.partialorder %v2346, 1.0
      %v2363 = vsel %vm2347, %v2267, %v2219
      %v2364 = vsel %vm2348, %v2268, %v2220
      %v2365 = vsel %vm2349, %v2269, %v2221
      %v2366 = vsel %vm2350, %v2270, %v2222
      %v2367 = vsel %vm2351, %v2271, %v2223
      %v2368 = vsel %vm2352, %v2272, %v2224
      %v2369 = vsel %vm2353, %v2273, %v2225
      %v2370 = vsel %vm2354, %v2274, %v2226
      %v2371 = vsel %vm2355, %v2275, %v2227
      %v2372 = vsel %vm2356, %v2276, %v2228
      %v2373 = vsel %vm2357, %v2277, %v2229
      %v2374 = vsel %vm2358, %v2278, %v2230
      %v2375 = vsel %vm2359, %v2279, %v2231
      %v2376 = vsel %vm2360, %v2280, %v2232
      %v2377 = vsel %vm2361, %v2281, %v2233
      %v2378 = vsel %vm2362, %v2282, %v2234
      %v2379 = vsel %vm2347, %v2235, %v2267
      %v2380 = vsel %vm2348, %v2236, %v2268
      %v2381 = vsel %vm2349, %v2237, %v2269
      %v2382 = vsel %vm2350, %v2238, %v2270
      %v2383 = vsel %vm2351, %v2239, %v2271
      %v2384 = vsel %vm2352, %v2240, %v2272
      %v2385 = vsel %vm2353, %v2241, %v2273
      %v2386 = vsel %vm2354, %v2242, %v2274
      %v2387 = vsel %vm2355, %v2243, %v2275
      %v2388 = vsel %vm2356, %v2244, %v2276
      %v2389 = vsel %vm2357, %v2245, %v2277
      %v2390 = vsel %vm2358, %v2246, %v2278
      %v2391 = vsel %vm2359, %v2247, %v2279
      %v2392 = vsel %vm2360, %v2248, %v2280
      %v2393 = vsel %vm2361, %v2249, %v2281
      %v2394 = vsel %vm2362, %v2250, %v2282
      %v2395 = vadd.f32 %v2363, %v2379
      %v2396 = vadd.f32 %v2364, %v2380
      %v2397 = vadd.f32 %v2365, %v2381
      %v2398 = vadd.f32 %v2366, %v2382
      %v2399 = vadd.f32 %v2367, %v2383
      %v2400 = vadd.f32 %v2368, %v2384
      %v2401 = vadd.f32 %v2369, %v2385
      %v2402 = vadd.f32 %v2370, %v2386
      %v2403 = vadd.f32 %v2371, %v2387
      %v2404 = vadd.f32 %v2372, %v2388
      %v2405 = vadd.f32 %v2373, %v2389
      %v2406 = vadd.f32 %v2374, %v2390
      %v2407 = vadd.f32 %v2375, %v2391
      %v2408 = vadd.f32 %v2376, %v2392
      %v2409 = vadd.f32 %v2377, %v2393
      %v2410 = vadd.f32 %v2378, %v2394
      %v2411 = vmul.f32 %v2395, 0.5
      %v2412 = vmul.f32 %v2396, 0.5
      %v2413 = vmul.f32 %v2397, 0.5
      %v2414 = vmul.f32 %v2398, 0.5
      %v2415 = vmul.f32 %v2399, 0.5
      %v2416 = vmul.f32 %v2400, 0.5
      %v2417 = vmul.f32 %v2401, 0.5
      %v2418 = vmul.f32 %v2402, 0.5
      %v2419 = vmul.f32 %v2403, 0.5
      %v2420 = vmul.f32 %v2404, 0.5
      %v2421 = vmul.f32 %v2405, 0.5
      %v2422 = vmul.f32 %v2406, 0.5
      %v2423 = vmul.f32 %v2407, 0.5
      %v2424 = vmul.f32 %v2408, 0.5
      %v2425 = vmul.f32 %v2409, 0.5
      %v2426 = vmul.f32 %v2410, 0.5
      %v2427 = vsub.f32 %v539, %v2411
      %v2428 = vsub.f32 %v540, %v2412
      %v2429 = vsub.f32 %v541, %v2413
      %v2430 = vsub.f32 %v542, %v2414
      %v2431 = vsub.f32 %v543, %v2415
      %v2432 = vsub.f32 %v544, %v2416
      %v2433 = vsub.f32 %v545, %v2417
      %v2434 = vsub.f32 %v546, %v2418
      %v2435 = vsub.f32 %v547, %v2419
      %v2436 = vsub.f32 %v548, %v2420
      %v2437 = vsub.f32 %v549, %v2421
      %v2438 = vsub.f32 %v550, %v2422
      %v2439 = vsub.f32 %v551, %v2423
      %v2440 = vsub.f32 %v552, %v2424
      %v2441 = vsub.f32 %v553, %v2425
      %v2442 = vsub.f32 %v554, %v2426
      %v2443 = vmax.f32 %v2427, 0.0
      %v2444 = vmax.f32 %v2428, 0.0
      %v2445 = vmax.f32 %v2429, 0.0
      %v2446 = vmax.f32 %v2430, 0.0
      %v2447 = vmax.f32 %v2431, 0.0
      %v2448 = vmax.f32 %v2432, 0.0
      %v2449 = vmax.f32 %v2433, 0.0
      %v2450 = vmax.f32 %v2434, 0.0
      %v2451 = vmax.f32 %v2435, 0.0
      %v2452 = vmax.f32 %v2436, 0.0
      %v2453 = vmax.f32 %v2437, 0.0
      %v2454 = vmax.f32 %v2438, 0.0
      %v2455 = vmax.f32 %v2439, 0.0
      %v2456 = vmax.f32 %v2440, 0.0
      %v2457 = vmax.f32 %v2441, 0.0
      %v2458 = vmax.f32 %v2442, 0.0
      %2459 = vadd.xlane.f32.xlu0 %v2443
      %v2460 = vpop.xlane.xlu0 %2459
      %2461 = vadd.xlane.f32.xlu0 %v2444
      %v2462 = vpop.xlane.xlu0 %2461
      %2463 = vadd.xlane.f32.xlu0 %v2445
      %v2464 = vpop.xlane.xlu0 %2463
      %2465 = vadd.xlane.f32.xlu0 %v2446
      %v2466 = vpop.xlane.xlu0 %2465
      %2467 = vadd.xlane.f32.xlu0 %v2447
      %v2468 = vpop.xlane.xlu0 %2467
      %2469 = vadd.xlane.f32.xlu0 %v2448
      %v2470 = vpop.xlane.xlu0 %2469
      %2471 = vadd.xlane.f32.xlu0 %v2449
      %v2472 = vpop.xlane.xlu0 %2471
      %2473 = vadd.xlane.f32.xlu0 %v2450
      %v2474 = vpop.xlane.xlu0 %2473
      %2475 = vadd.xlane.f32.xlu0 %v2451
      %v2476 = vpop.xlane.xlu0 %2475
      %2477 = vadd.xlane.f32.xlu0 %v2452
      %v2478 = vpop.xlane.xlu0 %2477
      %2479 = vadd.xlane.f32.xlu0 %v2453
      %v2480 = vpop.xlane.xlu0 %2479
      %2481 = vadd.xlane.f32.xlu0 %v2454
      %v2482 = vpop.xlane.xlu0 %2481
      %2483 = vadd.xlane.f32.xlu0 %v2455
      %v2484 = vpop.xlane.xlu0 %2483
      %2485 = vadd.xlane.f32.xlu0 %v2456
      %v2486 = vpop.xlane.xlu0 %2485
      %2487 = vadd.xlane.f32.xlu0 %v2457
      %v2488 = vpop.xlane.xlu0 %2487
      %2489 = vadd.xlane.f32.xlu0 %v2458
      %v2490 = vpop.xlane.xlu0 %2489
      %vm2491 = vcmp.gt.f32.partialorder %v539, %v2411
      %vm2492 = vcmp.gt.f32.partialorder %v540, %v2412
      %vm2493 = vcmp.gt.f32.partialorder %v541, %v2413
      %vm2494 = vcmp.gt.f32.partialorder %v542, %v2414
      %vm2495 = vcmp.gt.f32.partialorder %v543, %v2415
      %vm2496 = vcmp.gt.f32.partialorder %v544, %v2416
      %vm2497 = vcmp.gt.f32.partialorder %v545, %v2417
      %vm2498 = vcmp.gt.f32.partialorder %v546, %v2418
      %vm2499 = vcmp.gt.f32.partialorder %v547, %v2419
      %vm2500 = vcmp.gt.f32.partialorder %v548, %v2420
      %vm2501 = vcmp.gt.f32.partialorder %v549, %v2421
      %vm2502 = vcmp.gt.f32.partialorder %v550, %v2422
      %vm2503 = vcmp.gt.f32.partialorder %v551, %v2423
      %vm2504 = vcmp.gt.f32.partialorder %v552, %v2424
      %vm2505 = vcmp.gt.f32.partialorder %v553, %v2425
      %vm2506 = vcmp.gt.f32.partialorder %v554, %v2426
      %v2507 = vsel %vm2491, 1.0, 0.0
      %v2508 = vsel %vm2492, 1.0, 0.0
      %v2509 = vsel %vm2493, 1.0, 0.0
      %v2510 = vsel %vm2494, 1.0, 0.0
      %v2511 = vsel %vm2495, 1.0, 0.0
      %v2512 = vsel %vm2496, 1.0, 0.0
      %v2513 = vsel %vm2497, 1.0, 0.0
      %v2514 = vsel %vm2498, 1.0, 0.0
      %v2515 = vsel %vm2499, 1.0, 0.0
      %v2516 = vsel %vm2500, 1.0, 0.0
      %v2517 = vsel %vm2501, 1.0, 0.0
      %v2518 = vsel %vm2502, 1.0, 0.0
      %v2519 = vsel %vm2503, 1.0, 0.0
      %v2520 = vsel %vm2504, 1.0, 0.0
      %v2521 = vsel %vm2505, 1.0, 0.0
      %v2522 = vsel %vm2506, 1.0, 0.0
      %2523 = vadd.xlane.f32.xlu0 %v2507
      %v2524 = vpop.xlane.xlu0 %2523
      %2525 = vadd.xlane.f32.xlu0 %v2508
      %v2526 = vpop.xlane.xlu0 %2525
      %2527 = vadd.xlane.f32.xlu0 %v2509
      %v2528 = vpop.xlane.xlu0 %2527
      %2529 = vadd.xlane.f32.xlu0 %v2510
      %v2530 = vpop.xlane.xlu0 %2529
      %2531 = vadd.xlane.f32.xlu0 %v2511
      %v2532 = vpop.xlane.xlu0 %2531
      %2533 = vadd.xlane.f32.xlu0 %v2512
      %v2534 = vpop.xlane.xlu0 %2533
      %2535 = vadd.xlane.f32.xlu0 %v2513
      %v2536 = vpop.xlane.xlu0 %2535
      %2537 = vadd.xlane.f32.xlu0 %v2514
      %v2538 = vpop.xlane.xlu0 %2537
      %2539 = vadd.xlane.f32.xlu0 %v2515
      %v2540 = vpop.xlane.xlu0 %2539
      %2541 = vadd.xlane.f32.xlu0 %v2516
      %v2542 = vpop.xlane.xlu0 %2541
      %2543 = vadd.xlane.f32.xlu0 %v2517
      %v2544 = vpop.xlane.xlu0 %2543
      %2545 = vadd.xlane.f32.xlu0 %v2518
      %v2546 = vpop.xlane.xlu0 %2545
      %2547 = vadd.xlane.f32.xlu0 %v2519
      %v2548 = vpop.xlane.xlu0 %2547
      %2549 = vadd.xlane.f32.xlu0 %v2520
      %v2550 = vpop.xlane.xlu0 %2549
      %2551 = vadd.xlane.f32.xlu0 %v2521
      %v2552 = vpop.xlane.xlu0 %2551
      %2553 = vadd.xlane.f32.xlu0 %v2522
      %v2554 = vpop.xlane.xlu0 %2553
      %v2555 = vsub.f32 %v2460, 1.0
      %v2556 = vsub.f32 %v2462, 1.0
      %v2557 = vsub.f32 %v2464, 1.0
      %v2558 = vsub.f32 %v2466, 1.0
      %v2559 = vsub.f32 %v2468, 1.0
      %v2560 = vsub.f32 %v2470, 1.0
      %v2561 = vsub.f32 %v2472, 1.0
      %v2562 = vsub.f32 %v2474, 1.0
      %v2563 = vsub.f32 %v2476, 1.0
      %v2564 = vsub.f32 %v2478, 1.0
      %v2565 = vsub.f32 %v2480, 1.0
      %v2566 = vsub.f32 %v2482, 1.0
      %v2567 = vsub.f32 %v2484, 1.0
      %v2568 = vsub.f32 %v2486, 1.0
      %v2569 = vsub.f32 %v2488, 1.0
      %v2570 = vsub.f32 %v2490, 1.0
      %v2571 = vrcp.pop %v2524
      %v2572 = vmul.f32 %v2524, %v2571
      %v2573 = vsub.f32 1.0, %v2572
      %v2574 = vmul.f32 %v2571, %v2573
      %v2575 = vadd.f32 %v2571, %v2574
      %vm2576 = vweird.f32 %v2524
      %vm2577 = vweird.f32 %v2571
      %vm2578 = vmor %vm2576, %vm2577
      %v2579 = vsel %vm2578, %v2571, %v2575
      %v2580 = vand.u32 2147483647, %v2524
      %vm2581 = vcmp.eq.f32.partialorder %v2580, 8.507059e+37
      %v2582 = vand.u32 %v2524, 2147483648
      %v2583 = vor.u32 1.1754944e-38, %v2582
      %v2584 = vsel %vm2581, %v2583, %v2579
      %v2585 = vmul.f32 %v2555, %v2584
      %v2586 = vrcp.pop %v2526
      %v2587 = vmul.f32 %v2526, %v2586
      %v2588 = vsub.f32 1.0, %v2587
      %v2589 = vmul.f32 %v2586, %v2588
      %v2590 = vadd.f32 %v2586, %v2589
      %vm2591 = vweird.f32 %v2526
      %vm2592 = vweird.f32 %v2586
      %vm2593 = vmor %vm2591, %vm2592
      %v2594 = vsel %vm2593, %v2586, %v2590
      %v2595 = vand.u32 2147483647, %v2526
      %vm2596 = vcmp.eq.f32.partialorder %v2595, 8.507059e+37
      %v2597 = vand.u32 %v2526, 2147483648
      %v2598 = vor.u32 1.1754944e-38, %v2597
      %v2599 = vsel %vm2596, %v2598, %v2594
      %v2600 = vmul.f32 %v2556, %v2599
      %v2601 = vrcp.pop %v2528
      %v2602 = vmul.f32 %v2528, %v2601
      %v2603 = vsub.f32 1.0, %v2602
      %v2604 = vmul.f32 %v2601, %v2603
      %v2605 = vadd.f32 %v2601, %v2604
      %vm2606 = vweird.f32 %v2528
      %vm2607 = vweird.f32 %v2601
      %vm2608 = vmor %vm2606, %vm2607
      %v2609 = vsel %vm2608, %v2601, %v2605
      %v2610 = vand.u32 2147483647, %v2528
      %vm2611 = vcmp.eq.f32.partialorder %v2610, 8.507059e+37
      %v2612 = vand.u32 %v2528, 2147483648
      %v2613 = vor.u32 1.1754944e-38, %v2612
      %v2614 = vsel %vm2611, %v2613, %v2609
      %v2615 = vmul.f32 %v2557, %v2614
      %v2616 = vrcp.pop %v2530
      %v2617 = vmul.f32 %v2530, %v2616
      %v2618 = vsub.f32 1.0, %v2617
      %v2619 = vmul.f32 %v2616, %v2618
      %v2620 = vadd.f32 %v2616, %v2619
      %vm2621 = vweird.f32 %v2530
      %vm2622 = vweird.f32 %v2616
      %vm2623 = vmor %vm2621, %vm2622
      %v2624 = vsel %vm2623, %v2616, %v2620
      %v2625 = vand.u32 2147483647, %v2530
      %vm2626 = vcmp.eq.f32.partialorder %v2625, 8.507059e+37
      %v2627 = vand.u32 %v2530, 2147483648
      %v2628 = vor.u32 1.1754944e-38, %v2627
      %v2629 = vsel %vm2626, %v2628, %v2624
      %v2630 = vmul.f32 %v2558, %v2629
      %v2631 = vrcp.pop %v2532
      %v2632 = vmul.f32 %v2532, %v2631
      %v2633 = vsub.f32 1.0, %v2632
      %v2634 = vmul.f32 %v2631, %v2633
      %v2635 = vadd.f32 %v2631, %v2634
      %vm2636 = vweird.f32 %v2532
      %vm2637 = vweird.f32 %v2631
      %vm2638 = vmor %vm2636, %vm2637
      %v2639 = vsel %vm2638, %v2631, %v2635
      %v2640 = vand.u32 2147483647, %v2532
      %vm2641 = vcmp.eq.f32.partialorder %v2640, 8.507059e+37
      %v2642 = vand.u32 %v2532, 2147483648
      %v2643 = vor.u32 1.1754944e-38, %v2642
      %v2644 = vsel %vm2641, %v2643, %v2639
      %v2645 = vmul.f32 %v2559, %v2644
      %v2646 = vrcp.pop %v2534
      %v2647 = vmul.f32 %v2534, %v2646
      %v2648 = vsub.f32 1.0, %v2647
      %v2649 = vmul.f32 %v2646, %v2648
      %v2650 = vadd.f32 %v2646, %v2649
      %vm2651 = vweird.f32 %v2534
      %vm2652 = vweird.f32 %v2646
      %vm2653 = vmor %vm2651, %vm2652
      %v2654 = vsel %vm2653, %v2646, %v2650
      %v2655 = vand.u32 2147483647, %v2534
      %vm2656 = vcmp.eq.f32.partialorder %v2655, 8.507059e+37
      %v2657 = vand.u32 %v2534, 2147483648
      %v2658 = vor.u32 1.1754944e-38, %v2657
      %v2659 = vsel %vm2656, %v2658, %v2654
      %v2660 = vmul.f32 %v2560, %v2659
      %v2661 = vrcp.pop %v2536
      %v2662 = vmul.f32 %v2536, %v2661
      %v2663 = vsub.f32 1.0, %v2662
      %v2664 = vmul.f32 %v2661, %v2663
      %v2665 = vadd.f32 %v2661, %v2664
      %vm2666 = vweird.f32 %v2536
      %vm2667 = vweird.f32 %v2661
      %vm2668 = vmor %vm2666, %vm2667
      %v2669 = vsel %vm2668, %v2661, %v2665
      %v2670 = vand.u32 2147483647, %v2536
      %vm2671 = vcmp.eq.f32.partialorder %v2670, 8.507059e+37
      %v2672 = vand.u32 %v2536, 2147483648
      %v2673 = vor.u32 1.1754944e-38, %v2672
      %v2674 = vsel %vm2671, %v2673, %v2669
      %v2675 = vmul.f32 %v2561, %v2674
      %v2676 = vrcp.pop %v2538
      %v2677 = vmul.f32 %v2538, %v2676
      %v2678 = vsub.f32 1.0, %v2677
      %v2679 = vmul.f32 %v2676, %v2678
      %v2680 = vadd.f32 %v2676, %v2679
      %vm2681 = vweird.f32 %v2538
      %vm2682 = vweird.f32 %v2676
      %vm2683 = vmor %vm2681, %vm2682
      %v2684 = vsel %vm2683, %v2676, %v2680
      %v2685 = vand.u32 2147483647, %v2538
      %vm2686 = vcmp.eq.f32.partialorder %v2685, 8.507059e+37
      %v2687 = vand.u32 %v2538, 2147483648
      %v2688 = vor.u32 1.1754944e-38, %v2687
      %v2689 = vsel %vm2686, %v2688, %v2684
      %v2690 = vmul.f32 %v2562, %v2689
      %v2691 = vrcp.pop %v2540
      %v2692 = vmul.f32 %v2540, %v2691
      %v2693 = vsub.f32 1.0, %v2692
      %v2694 = vmul.f32 %v2691, %v2693
      %v2695 = vadd.f32 %v2691, %v2694
      %vm2696 = vweird.f32 %v2540
      %vm2697 = vweird.f32 %v2691
      %vm2698 = vmor %vm2696, %vm2697
      %v2699 = vsel %vm2698, %v2691, %v2695
      %v2700 = vand.u32 2147483647, %v2540
      %vm2701 = vcmp.eq.f32.partialorder %v2700, 8.507059e+37
      %v2702 = vand.u32 %v2540, 2147483648
      %v2703 = vor.u32 1.1754944e-38, %v2702
      %v2704 = vsel %vm2701, %v2703, %v2699
      %v2705 = vmul.f32 %v2563, %v2704
      %v2706 = vrcp.pop %v2542
      %v2707 = vmul.f32 %v2542, %v2706
      %v2708 = vsub.f32 1.0, %v2707
      %v2709 = vmul.f32 %v2706, %v2708
      %v2710 = vadd.f32 %v2706, %v2709
      %vm2711 = vweird.f32 %v2542
      %vm2712 = vweird.f32 %v2706
      %vm2713 = vmor %vm2711, %vm2712
      %v2714 = vsel %vm2713, %v2706, %v2710
      %v2715 = vand.u32 2147483647, %v2542
      %vm2716 = vcmp.eq.f32.partialorder %v2715, 8.507059e+37
      %v2717 = vand.u32 %v2542, 2147483648
      %v2718 = vor.u32 1.1754944e-38, %v2717
      %v2719 = vsel %vm2716, %v2718, %v2714
      %v2720 = vmul.f32 %v2564, %v2719
      %v2721 = vrcp.pop %v2544
      %v2722 = vmul.f32 %v2544, %v2721
      %v2723 = vsub.f32 1.0, %v2722
      %v2724 = vmul.f32 %v2721, %v2723
      %v2725 = vadd.f32 %v2721, %v2724
      %vm2726 = vweird.f32 %v2544
      %vm2727 = vweird.f32 %v2721
      %vm2728 = vmor %vm2726, %vm2727
      %v2729 = vsel %vm2728, %v2721, %v2725
      %v2730 = vand.u32 2147483647, %v2544
      %vm2731 = vcmp.eq.f32.partialorder %v2730, 8.507059e+37
      %v2732 = vand.u32 %v2544, 2147483648
      %v2733 = vor.u32 1.1754944e-38, %v2732
      %v2734 = vsel %vm2731, %v2733, %v2729
      %v2735 = vmul.f32 %v2565, %v2734
      %v2736 = vrcp.pop %v2546
      %v2737 = vmul.f32 %v2546, %v2736
      %v2738 = vsub.f32 1.0, %v2737
      %v2739 = vmul.f32 %v2736, %v2738
      %v2740 = vadd.f32 %v2736, %v2739
      %vm2741 = vweird.f32 %v2546
      %vm2742 = vweird.f32 %v2736
      %vm2743 = vmor %vm2741, %vm2742
      %v2744 = vsel %vm2743, %v2736, %v2740
      %v2745 = vand.u32 2147483647, %v2546
      %vm2746 = vcmp.eq.f32.partialorder %v2745, 8.507059e+37
      %v2747 = vand.u32 %v2546, 2147483648
      %v2748 = vor.u32 1.1754944e-38, %v2747
      %v2749 = vsel %vm2746, %v2748, %v2744
      %v2750 = vmul.f32 %v2566, %v2749
      %v2751 = vrcp.pop %v2548
      %v2752 = vmul.f32 %v2548, %v2751
      %v2753 = vsub.f32 1.0, %v2752
      %v2754 = vmul.f32 %v2751, %v2753
      %v2755 = vadd.f32 %v2751, %v2754
      %vm2756 = vweird.f32 %v2548
      %vm2757 = vweird.f32 %v2751
      %vm2758 = vmor %vm2756, %vm2757
      %v2759 = vsel %vm2758, %v2751, %v2755
      %v2760 = vand.u32 2147483647, %v2548
      %vm2761 = vcmp.eq.f32.partialorder %v2760, 8.507059e+37
      %v2762 = vand.u32 %v2548, 2147483648
      %v2763 = vor.u32 1.1754944e-38, %v2762
      %v2764 = vsel %vm2761, %v2763, %v2759
      %v2765 = vmul.f32 %v2567, %v2764
      %v2766 = vrcp.pop %v2550
      %v2767 = vmul.f32 %v2550, %v2766
      %v2768 = vsub.f32 1.0, %v2767
      %v2769 = vmul.f32 %v2766, %v2768
      %v2770 = vadd.f32 %v2766, %v2769
      %vm2771 = vweird.f32 %v2550
      %vm2772 = vweird.f32 %v2766
      %vm2773 = vmor %vm2771, %vm2772
      %v2774 = vsel %vm2773, %v2766, %v2770
      %v2775 = vand.u32 2147483647, %v2550
      %vm2776 = vcmp.eq.f32.partialorder %v2775, 8.507059e+37
      %v2777 = vand.u32 %v2550, 2147483648
      %v2778 = vor.u32 1.1754944e-38, %v2777
      %v2779 = vsel %vm2776, %v2778, %v2774
      %v2780 = vmul.f32 %v2568, %v2779
      %v2781 = vrcp.pop %v2552
      %v2782 = vmul.f32 %v2552, %v2781
      %v2783 = vsub.f32 1.0, %v2782
      %v2784 = vmul.f32 %v2781, %v2783
      %v2785 = vadd.f32 %v2781, %v2784
      %vm2786 = vweird.f32 %v2552
      %vm2787 = vweird.f32 %v2781
      %vm2788 = vmor %vm2786, %vm2787
      %v2789 = vsel %vm2788, %v2781, %v2785
      %v2790 = vand.u32 2147483647, %v2552
      %vm2791 = vcmp.eq.f32.partialorder %v2790, 8.507059e+37
      %v2792 = vand.u32 %v2552, 2147483648
      %v2793 = vor.u32 1.1754944e-38, %v2792
      %v2794 = vsel %vm2791, %v2793, %v2789
      %v2795 = vmul.f32 %v2569, %v2794
      %v2796 = vrcp.pop %v2554
      %v2797 = vmul.f32 %v2554, %v2796
      %v2798 = vsub.f32 1.0, %v2797
      %v2799 = vmul.f32 %v2796, %v2798
      %v2800 = vadd.f32 %v2796, %v2799
      %vm2801 = vweird.f32 %v2554
      %vm2802 = vweird.f32 %v2796
      %vm2803 = vmor %vm2801, %vm2802
      %v2804 = vsel %vm2803, %v2796, %v2800
      %v2805 = vand.u32 2147483647, %v2554
      %vm2806 = vcmp.eq.f32.partialorder %v2805, 8.507059e+37
      %v2807 = vand.u32 %v2554, 2147483648
      %v2808 = vor.u32 1.1754944e-38, %v2807
      %v2809 = vsel %vm2806, %v2808, %v2804
      %v2810 = vmul.f32 %v2570, %v2809
      %v2811 = vadd.f32 %v2411, %v2585
      %v2812 = vadd.f32 %v2412, %v2600
      %v2813 = vadd.f32 %v2413, %v2615
      %v2814 = vadd.f32 %v2414, %v2630
      %v2815 = vadd.f32 %v2415, %v2645
      %v2816 = vadd.f32 %v2416, %v2660
      %v2817 = vadd.f32 %v2417, %v2675
      %v2818 = vadd.f32 %v2418, %v2690
      %v2819 = vadd.f32 %v2419, %v2705
      %v2820 = vadd.f32 %v2420, %v2720
      %v2821 = vadd.f32 %v2421, %v2735
      %v2822 = vadd.f32 %v2422, %v2750
      %v2823 = vadd.f32 %v2423, %v2765
      %v2824 = vadd.f32 %v2424, %v2780
      %v2825 = vadd.f32 %v2425, %v2795
      %v2826 = vadd.f32 %v2426, %v2810
      %v2827 = vsub.f32 %v539, %v2811
      %v2828 = vsub.f32 %v540, %v2812
      %v2829 = vsub.f32 %v541, %v2813
      %v2830 = vsub.f32 %v542, %v2814
      %v2831 = vsub.f32 %v543, %v2815
      %v2832 = vsub.f32 %v544, %v2816
      %v2833 = vsub.f32 %v545, %v2817
      %v2834 = vsub.f32 %v546, %v2818
      %v2835 = vsub.f32 %v547, %v2819
      %v2836 = vsub.f32 %v548, %v2820
      %v2837 = vsub.f32 %v549, %v2821
      %v2838 = vsub.f32 %v550, %v2822
      %v2839 = vsub.f32 %v551, %v2823
      %v2840 = vsub.f32 %v552, %v2824
      %v2841 = vsub.f32 %v553, %v2825
      %v2842 = vsub.f32 %v554, %v2826
      %v2843 = vmax.f32 %v2827, 0.0
      %v2844 = vmax.f32 %v2828, 0.0
      %v2845 = vmax.f32 %v2829, 0.0
      %v2846 = vmax.f32 %v2830, 0.0
      %v2847 = vmax.f32 %v2831, 0.0
      %v2848 = vmax.f32 %v2832, 0.0
      %v2849 = vmax.f32 %v2833, 0.0
      %v2850 = vmax.f32 %v2834, 0.0
      %v2851 = vmax.f32 %v2835, 0.0
      %v2852 = vmax.f32 %v2836, 0.0
      %v2853 = vmax.f32 %v2837, 0.0
      %v2854 = vmax.f32 %v2838, 0.0
      %v2855 = vmax.f32 %v2839, 0.0
      %v2856 = vmax.f32 %v2840, 0.0
      %v2857 = vmax.f32 %v2841, 0.0
      %v2858 = vmax.f32 %v2842, 0.0
      %2859 = vadd.xlane.f32.xlu0 %v2843
      %v2860 = vpop.xlane.xlu0 %2859
      %2861 = vadd.xlane.f32.xlu0 %v2844
      %v2862 = vpop.xlane.xlu0 %2861
      %2863 = vadd.xlane.f32.xlu0 %v2845
      %v2864 = vpop.xlane.xlu0 %2863
      %2865 = vadd.xlane.f32.xlu0 %v2846
      %v2866 = vpop.xlane.xlu0 %2865
      %2867 = vadd.xlane.f32.xlu0 %v2847
      %v2868 = vpop.xlane.xlu0 %2867
      %2869 = vadd.xlane.f32.xlu0 %v2848
      %v2870 = vpop.xlane.xlu0 %2869
      %2871 = vadd.xlane.f32.xlu0 %v2849
      %v2872 = vpop.xlane.xlu0 %2871
      %2873 = vadd.xlane.f32.xlu0 %v2850
      %v2874 = vpop.xlane.xlu0 %2873
      %2875 = vadd.xlane.f32.xlu0 %v2851
      %v2876 = vpop.xlane.xlu0 %2875
      %2877 = vadd.xlane.f32.xlu0 %v2852
      %v2878 = vpop.xlane.xlu0 %2877
      %2879 = vadd.xlane.f32.xlu0 %v2853
      %v2880 = vpop.xlane.xlu0 %2879
      %2881 = vadd.xlane.f32.xlu0 %v2854
      %v2882 = vpop.xlane.xlu0 %2881
      %2883 = vadd.xlane.f32.xlu0 %v2855
      %v2884 = vpop.xlane.xlu0 %2883
      %2885 = vadd.xlane.f32.xlu0 %v2856
      %v2886 = vpop.xlane.xlu0 %2885
      %2887 = vadd.xlane.f32.xlu0 %v2857
      %v2888 = vpop.xlane.xlu0 %2887
      %2889 = vadd.xlane.f32.xlu0 %v2858
      %v2890 = vpop.xlane.xlu0 %2889
      %vm2891 = vcmp.gt.f32.partialorder %v539, %v2811
      %vm2892 = vcmp.gt.f32.partialorder %v540, %v2812
      %vm2893 = vcmp.gt.f32.partialorder %v541, %v2813
      %vm2894 = vcmp.gt.f32.partialorder %v542, %v2814
      %vm2895 = vcmp.gt.f32.partialorder %v543, %v2815
      %vm2896 = vcmp.gt.f32.partialorder %v544, %v2816
      %vm2897 = vcmp.gt.f32.partialorder %v545, %v2817
      %vm2898 = vcmp.gt.f32.partialorder %v546, %v2818
      %vm2899 = vcmp.gt.f32.partialorder %v547, %v2819
      %vm2900 = vcmp.gt.f32.partialorder %v548, %v2820
      %vm2901 = vcmp.gt.f32.partialorder %v549, %v2821
      %vm2902 = vcmp.gt.f32.partialorder %v550, %v2822
      %vm2903 = vcmp.gt.f32.partialorder %v551, %v2823
      %vm2904 = vcmp.gt.f32.partialorder %v552, %v2824
      %vm2905 = vcmp.gt.f32.partialorder %v553, %v2825
      %vm2906 = vcmp.gt.f32.partialorder %v554, %v2826
      %v2907 = vsel %vm2891, 1.0, 0.0
      %v2908 = vsel %vm2892, 1.0, 0.0
      %v2909 = vsel %vm2893, 1.0, 0.0
      %v2910 = vsel %vm2894, 1.0, 0.0
      %v2911 = vsel %vm2895, 1.0, 0.0
      %v2912 = vsel %vm2896, 1.0, 0.0
      %v2913 = vsel %vm2897, 1.0, 0.0
      %v2914 = vsel %vm2898, 1.0, 0.0
      %v2915 = vsel %vm2899, 1.0, 0.0
      %v2916 = vsel %vm2900, 1.0, 0.0
      %v2917 = vsel %vm2901, 1.0, 0.0
      %v2918 = vsel %vm2902, 1.0, 0.0
      %v2919 = vsel %vm2903, 1.0, 0.0
      %v2920 = vsel %vm2904, 1.0, 0.0
      %v2921 = vsel %vm2905, 1.0, 0.0
      %v2922 = vsel %vm2906, 1.0, 0.0
      %2923 = vadd.xlane.f32.xlu0 %v2907
      %v2924 = vpop.xlane.xlu0 %2923
      %2925 = vadd.xlane.f32.xlu0 %v2908
      %v2926 = vpop.xlane.xlu0 %2925
      %2927 = vadd.xlane.f32.xlu0 %v2909
      %v2928 = vpop.xlane.xlu0 %2927
      %2929 = vadd.xlane.f32.xlu0 %v2910
      %v2930 = vpop.xlane.xlu0 %2929
      %2931 = vadd.xlane.f32.xlu0 %v2911
      %v2932 = vpop.xlane.xlu0 %2931
      %2933 = vadd.xlane.f32.xlu0 %v2912
      %v2934 = vpop.xlane.xlu0 %2933
      %2935 = vadd.xlane.f32.xlu0 %v2913
      %v2936 = vpop.xlane.xlu0 %2935
      %2937 = vadd.xlane.f32.xlu0 %v2914
      %v2938 = vpop.xlane.xlu0 %2937
      %2939 = vadd.xlane.f32.xlu0 %v2915
      %v2940 = vpop.xlane.xlu0 %2939
      %2941 = vadd.xlane.f32.xlu0 %v2916
      %v2942 = vpop.xlane.xlu0 %2941
      %2943 = vadd.xlane.f32.xlu0 %v2917
      %v2944 = vpop.xlane.xlu0 %2943
      %2945 = vadd.xlane.f32.xlu0 %v2918
      %v2946 = vpop.xlane.xlu0 %2945
      %2947 = vadd.xlane.f32.xlu0 %v2919
      %v2948 = vpop.xlane.xlu0 %2947
      %2949 = vadd.xlane.f32.xlu0 %v2920
      %v2950 = vpop.xlane.xlu0 %2949
      %2951 = vadd.xlane.f32.xlu0 %v2921
      %v2952 = vpop.xlane.xlu0 %2951
      %2953 = vadd.xlane.f32.xlu0 %v2922
      %v2954 = vpop.xlane.xlu0 %2953
      %v2955 = vsub.f32 %v2860, 1.0
      %v2956 = vsub.f32 %v2862, 1.0
      %v2957 = vsub.f32 %v2864, 1.0
      %v2958 = vsub.f32 %v2866, 1.0
      %v2959 = vsub.f32 %v2868, 1.0
      %v2960 = vsub.f32 %v2870, 1.0
      %v2961 = vsub.f32 %v2872, 1.0
      %v2962 = vsub.f32 %v2874, 1.0
      %v2963 = vsub.f32 %v2876, 1.0
      %v2964 = vsub.f32 %v2878, 1.0
      %v2965 = vsub.f32 %v2880, 1.0
      %v2966 = vsub.f32 %v2882, 1.0
      %v2967 = vsub.f32 %v2884, 1.0
      %v2968 = vsub.f32 %v2886, 1.0
      %v2969 = vsub.f32 %v2888, 1.0
      %v2970 = vsub.f32 %v2890, 1.0
      %v2971 = vrcp.pop %v2924
      %v2972 = vmul.f32 %v2924, %v2971
      %v2973 = vsub.f32 1.0, %v2972
      %v2974 = vmul.f32 %v2971, %v2973
      %v2975 = vadd.f32 %v2971, %v2974
      %vm2976 = vweird.f32 %v2924
      %vm2977 = vweird.f32 %v2971
      %vm2978 = vmor %vm2976, %vm2977
      %v2979 = vsel %vm2978, %v2971, %v2975
      %v2980 = vand.u32 2147483647, %v2924
      %vm2981 = vcmp.eq.f32.partialorder %v2980, 8.507059e+37
      %v2982 = vand.u32 %v2924, 2147483648
      %v2983 = vor.u32 1.1754944e-38, %v2982
      %v2984 = vsel %vm2981, %v2983, %v2979
      %v2985 = vmul.f32 %v2955, %v2984
      %v2986 = vrcp.pop %v2926
      %v2987 = vmul.f32 %v2926, %v2986
      %v2988 = vsub.f32 1.0, %v2987
      %v2989 = vmul.f32 %v2986, %v2988
      %v2990 = vadd.f32 %v2986, %v2989
      %vm2991 = vweird.f32 %v2926
      %vm2992 = vweird.f32 %v2986
      %vm2993 = vmor %vm2991, %vm2992
      %v2994 = vsel %vm2993, %v2986, %v2990
      %v2995 = vand.u32 2147483647, %v2926
      %vm2996 = vcmp.eq.f32.partialorder %v2995, 8.507059e+37
      %v2997 = vand.u32 %v2926, 2147483648
      %v2998 = vor.u32 1.1754944e-38, %v2997
      %v2999 = vsel %vm2996, %v2998, %v2994
      %v3000 = vmul.f32 %v2956, %v2999
      %v3001 = vrcp.pop %v2928
      %v3002 = vmul.f32 %v2928, %v3001
      %v3003 = vsub.f32 1.0, %v3002
      %v3004 = vmul.f32 %v3001, %v3003
      %v3005 = vadd.f32 %v3001, %v3004
      %vm3006 = vweird.f32 %v2928
      %vm3007 = vweird.f32 %v3001
      %vm3008 = vmor %vm3006, %vm3007
      %v3009 = vsel %vm3008, %v3001, %v3005
      %v3010 = vand.u32 2147483647, %v2928
      %vm3011 = vcmp.eq.f32.partialorder %v3010, 8.507059e+37
      %v3012 = vand.u32 %v2928, 2147483648
      %v3013 = vor.u32 1.1754944e-38, %v3012
      %v3014 = vsel %vm3011, %v3013, %v3009
      %v3015 = vmul.f32 %v2957, %v3014
      %v3016 = vrcp.pop %v2930
      %v3017 = vmul.f32 %v2930, %v3016
      %v3018 = vsub.f32 1.0, %v3017
      %v3019 = vmul.f32 %v3016, %v3018
      %v3020 = vadd.f32 %v3016, %v3019
      %vm3021 = vweird.f32 %v2930
      %vm3022 = vweird.f32 %v3016
      %vm3023 = vmor %vm3021, %vm3022
      %v3024 = vsel %vm3023, %v3016, %v3020
      %v3025 = vand.u32 2147483647, %v2930
      %vm3026 = vcmp.eq.f32.partialorder %v3025, 8.507059e+37
      %v3027 = vand.u32 %v2930, 2147483648
      %v3028 = vor.u32 1.1754944e-38, %v3027
      %v3029 = vsel %vm3026, %v3028, %v3024
      %v3030 = vmul.f32 %v2958, %v3029
      %v3031 = vrcp.pop %v2932
      %v3032 = vmul.f32 %v2932, %v3031
      %v3033 = vsub.f32 1.0, %v3032
      %v3034 = vmul.f32 %v3031, %v3033
      %v3035 = vadd.f32 %v3031, %v3034
      %vm3036 = vweird.f32 %v2932
      %vm3037 = vweird.f32 %v3031
      %vm3038 = vmor %vm3036, %vm3037
      %v3039 = vsel %vm3038, %v3031, %v3035
      %v3040 = vand.u32 2147483647, %v2932
      %vm3041 = vcmp.eq.f32.partialorder %v3040, 8.507059e+37
      %v3042 = vand.u32 %v2932, 2147483648
      %v3043 = vor.u32 1.1754944e-38, %v3042
      %v3044 = vsel %vm3041, %v3043, %v3039
      %v3045 = vmul.f32 %v2959, %v3044
      %v3046 = vrcp.pop %v2934
      %v3047 = vmul.f32 %v2934, %v3046
      %v3048 = vsub.f32 1.0, %v3047
      %v3049 = vmul.f32 %v3046, %v3048
      %v3050 = vadd.f32 %v3046, %v3049
      %vm3051 = vweird.f32 %v2934
      %vm3052 = vweird.f32 %v3046
      %vm3053 = vmor %vm3051, %vm3052
      %v3054 = vsel %vm3053, %v3046, %v3050
      %v3055 = vand.u32 2147483647, %v2934
      %vm3056 = vcmp.eq.f32.partialorder %v3055, 8.507059e+37
      %v3057 = vand.u32 %v2934, 2147483648
      %v3058 = vor.u32 1.1754944e-38, %v3057
      %v3059 = vsel %vm3056, %v3058, %v3054
      %v3060 = vmul.f32 %v2960, %v3059
      %v3061 = vrcp.pop %v2936
      %v3062 = vmul.f32 %v2936, %v3061
      %v3063 = vsub.f32 1.0, %v3062
      %v3064 = vmul.f32 %v3061, %v3063
      %v3065 = vadd.f32 %v3061, %v3064
      %vm3066 = vweird.f32 %v2936
      %vm3067 = vweird.f32 %v3061
      %vm3068 = vmor %vm3066, %vm3067
      %v3069 = vsel %vm3068, %v3061, %v3065
      %v3070 = vand.u32 2147483647, %v2936
      %vm3071 = vcmp.eq.f32.partialorder %v3070, 8.507059e+37
      %v3072 = vand.u32 %v2936, 2147483648
      %v3073 = vor.u32 1.1754944e-38, %v3072
      %v3074 = vsel %vm3071, %v3073, %v3069
      %v3075 = vmul.f32 %v2961, %v3074
      %v3076 = vrcp.pop %v2938
      %v3077 = vmul.f32 %v2938, %v3076
      %v3078 = vsub.f32 1.0, %v3077
      %v3079 = vmul.f32 %v3076, %v3078
      %v3080 = vadd.f32 %v3076, %v3079
      %vm3081 = vweird.f32 %v2938
      %vm3082 = vweird.f32 %v3076
      %vm3083 = vmor %vm3081, %vm3082
      %v3084 = vsel %vm3083, %v3076, %v3080
      %v3085 = vand.u32 2147483647, %v2938
      %vm3086 = vcmp.eq.f32.partialorder %v3085, 8.507059e+37
      %v3087 = vand.u32 %v2938, 2147483648
      %v3088 = vor.u32 1.1754944e-38, %v3087
      %v3089 = vsel %vm3086, %v3088, %v3084
      %v3090 = vmul.f32 %v2962, %v3089
      %v3091 = vrcp.pop %v2940
      %v3092 = vmul.f32 %v2940, %v3091
      %v3093 = vsub.f32 1.0, %v3092
      %v3094 = vmul.f32 %v3091, %v3093
      %v3095 = vadd.f32 %v3091, %v3094
      %vm3096 = vweird.f32 %v2940
      %vm3097 = vweird.f32 %v3091
      %vm3098 = vmor %vm3096, %vm3097
      %v3099 = vsel %vm3098, %v3091, %v3095
      %v3100 = vand.u32 2147483647, %v2940
      %vm3101 = vcmp.eq.f32.partialorder %v3100, 8.507059e+37
      %v3102 = vand.u32 %v2940, 2147483648
      %v3103 = vor.u32 1.1754944e-38, %v3102
      %v3104 = vsel %vm3101, %v3103, %v3099
      %v3105 = vmul.f32 %v2963, %v3104
      %v3106 = vrcp.pop %v2942
      %v3107 = vmul.f32 %v2942, %v3106
      %v3108 = vsub.f32 1.0, %v3107
      %v3109 = vmul.f32 %v3106, %v3108
      %v3110 = vadd.f32 %v3106, %v3109
      %vm3111 = vweird.f32 %v2942
      %vm3112 = vweird.f32 %v3106
      %vm3113 = vmor %vm3111, %vm3112
      %v3114 = vsel %vm3113, %v3106, %v3110
      %v3115 = vand.u32 2147483647, %v2942
      %vm3116 = vcmp.eq.f32.partialorder %v3115, 8.507059e+37
      %v3117 = vand.u32 %v2942, 2147483648
      %v3118 = vor.u32 1.1754944e-38, %v3117
      %v3119 = vsel %vm3116, %v3118, %v3114
      %v3120 = vmul.f32 %v2964, %v3119
      %v3121 = vrcp.pop %v2944
      %v3122 = vmul.f32 %v2944, %v3121
      %v3123 = vsub.f32 1.0, %v3122
      %v3124 = vmul.f32 %v3121, %v3123
      %v3125 = vadd.f32 %v3121, %v3124
      %vm3126 = vweird.f32 %v2944
      %vm3127 = vweird.f32 %v3121
      %vm3128 = vmor %vm3126, %vm3127
      %v3129 = vsel %vm3128, %v3121, %v3125
      %v3130 = vand.u32 2147483647, %v2944
      %vm3131 = vcmp.eq.f32.partialorder %v3130, 8.507059e+37
      %v3132 = vand.u32 %v2944, 2147483648
      %v3133 = vor.u32 1.1754944e-38, %v3132
      %v3134 = vsel %vm3131, %v3133, %v3129
      %v3135 = vmul.f32 %v2965, %v3134
      %v3136 = vrcp.pop %v2946
      %v3137 = vmul.f32 %v2946, %v3136
      %v3138 = vsub.f32 1.0, %v3137
      %v3139 = vmul.f32 %v3136, %v3138
      %v3140 = vadd.f32 %v3136, %v3139
      %vm3141 = vweird.f32 %v2946
      %vm3142 = vweird.f32 %v3136
      %vm3143 = vmor %vm3141, %vm3142
      %v3144 = vsel %vm3143, %v3136, %v3140
      %v3145 = vand.u32 2147483647, %v2946
      %vm3146 = vcmp.eq.f32.partialorder %v3145, 8.507059e+37
      %v3147 = vand.u32 %v2946, 2147483648
      %v3148 = vor.u32 1.1754944e-38, %v3147
      %v3149 = vsel %vm3146, %v3148, %v3144
      %v3150 = vmul.f32 %v2966, %v3149
      %v3151 = vrcp.pop %v2948
      %v3152 = vmul.f32 %v2948, %v3151
      %v3153 = vsub.f32 1.0, %v3152
      %v3154 = vmul.f32 %v3151, %v3153
      %v3155 = vadd.f32 %v3151, %v3154
      %vm3156 = vweird.f32 %v2948
      %vm3157 = vweird.f32 %v3151
      %vm3158 = vmor %vm3156, %vm3157
      %v3159 = vsel %vm3158, %v3151, %v3155
      %v3160 = vand.u32 2147483647, %v2948
      %vm3161 = vcmp.eq.f32.partialorder %v3160, 8.507059e+37
      %v3162 = vand.u32 %v2948, 2147483648
      %v3163 = vor.u32 1.1754944e-38, %v3162
      %v3164 = vsel %vm3161, %v3163, %v3159
      %v3165 = vmul.f32 %v2967, %v3164
      %v3166 = vrcp.pop %v2950
      %v3167 = vmul.f32 %v2950, %v3166
      %v3168 = vsub.f32 1.0, %v3167
      %v3169 = vmul.f32 %v3166, %v3168
      %v3170 = vadd.f32 %v3166, %v3169
      %vm3171 = vweird.f32 %v2950
      %vm3172 = vweird.f32 %v3166
      %vm3173 = vmor %vm3171, %vm3172
      %v3174 = vsel %vm3173, %v3166, %v3170
      %v3175 = vand.u32 2147483647, %v2950
      %vm3176 = vcmp.eq.f32.partialorder %v3175, 8.507059e+37
      %v3177 = vand.u32 %v2950, 2147483648
      %v3178 = vor.u32 1.1754944e-38, %v3177
      %v3179 = vsel %vm3176, %v3178, %v3174
      %v3180 = vmul.f32 %v2968, %v3179
      %v3181 = vrcp.pop %v2952
      %v3182 = vmul.f32 %v2952, %v3181
      %v3183 = vsub.f32 1.0, %v3182
      %v3184 = vmul.f32 %v3181, %v3183
      %v3185 = vadd.f32 %v3181, %v3184
      %vm3186 = vweird.f32 %v2952
      %vm3187 = vweird.f32 %v3181
      %vm3188 = vmor %vm3186, %vm3187
      %v3189 = vsel %vm3188, %v3181, %v3185
      %v3190 = vand.u32 2147483647, %v2952
      %vm3191 = vcmp.eq.f32.partialorder %v3190, 8.507059e+37
      %v3192 = vand.u32 %v2952, 2147483648
      %v3193 = vor.u32 1.1754944e-38, %v3192
      %v3194 = vsel %vm3191, %v3193, %v3189
      %v3195 = vmul.f32 %v2969, %v3194
      %v3196 = vrcp.pop %v2954
      %v3197 = vmul.f32 %v2954, %v3196
      %v3198 = vsub.f32 1.0, %v3197
      %v3199 = vmul.f32 %v3196, %v3198
      %v3200 = vadd.f32 %v3196, %v3199
      %vm3201 = vweird.f32 %v2954
      %vm3202 = vweird.f32 %v3196
      %vm3203 = vmor %vm3201, %vm3202
      %v3204 = vsel %vm3203, %v3196, %v3200
      %v3205 = vand.u32 2147483647, %v2954
      %vm3206 = vcmp.eq.f32.partialorder %v3205, 8.507059e+37
      %v3207 = vand.u32 %v2954, 2147483648
      %v3208 = vor.u32 1.1754944e-38, %v3207
      %v3209 = vsel %vm3206, %v3208, %v3204
      %v3210 = vmul.f32 %v2970, %v3209
      %v3211 = vadd.f32 %v2811, %v2985
      %v3212 = vadd.f32 %v2812, %v3000
      %v3213 = vadd.f32 %v2813, %v3015
      %v3214 = vadd.f32 %v2814, %v3030
      %v3215 = vadd.f32 %v2815, %v3045
      %v3216 = vadd.f32 %v2816, %v3060
      %v3217 = vadd.f32 %v2817, %v3075
      %v3218 = vadd.f32 %v2818, %v3090
      %v3219 = vadd.f32 %v2819, %v3105
      %v3220 = vadd.f32 %v2820, %v3120
      %v3221 = vadd.f32 %v2821, %v3135
      %v3222 = vadd.f32 %v2822, %v3150
      %v3223 = vadd.f32 %v2823, %v3165
      %v3224 = vadd.f32 %v2824, %v3180
      %v3225 = vadd.f32 %v2825, %v3195
      %v3226 = vadd.f32 %v2826, %v3210
      %v3227 = vsub.f32 %v539, %v3211
      %v3228 = vsub.f32 %v540, %v3212
      %v3229 = vsub.f32 %v541, %v3213
      %v3230 = vsub.f32 %v542, %v3214
      %v3231 = vsub.f32 %v543, %v3215
      %v3232 = vsub.f32 %v544, %v3216
      %v3233 = vsub.f32 %v545, %v3217
      %v3234 = vsub.f32 %v546, %v3218
      %v3235 = vsub.f32 %v547, %v3219
      %v3236 = vsub.f32 %v548, %v3220
      %v3237 = vsub.f32 %v549, %v3221
      %v3238 = vsub.f32 %v550, %v3222
      %v3239 = vsub.f32 %v551, %v3223
      %v3240 = vsub.f32 %v552, %v3224
      %v3241 = vsub.f32 %v553, %v3225
      %v3242 = vsub.f32 %v554, %v3226
      %v3243 = vmax.f32 %v3227, 0.0
      %v3244 = vmax.f32 %v3228, 0.0
      %v3245 = vmax.f32 %v3229, 0.0
      %v3246 = vmax.f32 %v3230, 0.0
      %v3247 = vmax.f32 %v3231, 0.0
      %v3248 = vmax.f32 %v3232, 0.0
      %v3249 = vmax.f32 %v3233, 0.0
      %v3250 = vmax.f32 %v3234, 0.0
      %v3251 = vmax.f32 %v3235, 0.0
      %v3252 = vmax.f32 %v3236, 0.0
      %v3253 = vmax.f32 %v3237, 0.0
      %v3254 = vmax.f32 %v3238, 0.0
      %v3255 = vmax.f32 %v3239, 0.0
      %v3256 = vmax.f32 %v3240, 0.0
      %v3257 = vmax.f32 %v3241, 0.0
      %v3258 = vmax.f32 %v3242, 0.0
      %s3259 = scalar_lea.vmem %s209, %s335
      %v3260 = vld [vmem:[%s3259] sm:$0xff]
      %v3261 = vld [vmem:[%s3259 + $0x8] sm:$0xff]
      %3262 = vmatpush.xpose.msra.mxu0 %v3258
      %3263 = vmatpush.xpose.msra.mxu0 %v3257
      %3264 = vmatpush.xpose.msra.mxu0 %v3256
      %3265 = vmatpush.xpose.msra.mxu0 %v3255
      %3266 = vmatpush.xpose.msra.mxu0 %v3254
      %3267 = vmatpush.xpose.msra.mxu0 %v3253
      %3268 = vmatpush.xpose.msra.mxu0 %v3252
      %3269 = vmatpush.xpose.msra.mxu0 %v3251
      %3270 = vmatpush.xpose.msra.mxu0 %v3250
      %3271 = vmatpush.xpose.msra.mxu0 %v3249
      %3272 = vmatpush.xpose.msra.mxu0 %v3248
      %3273 = vmatpush.xpose.msra.mxu0 %v3247
      %3274 = vmatpush.xpose.msra.mxu0 %v3246
      %3275 = vmatpush.xpose.msra.mxu0 %v3245
      %3276 = vmatpush.xpose.msra.mxu0 %v3244
      %3277 = vmatpush.xpose.msra.mxu0 %v3243
      %3278 = vmatmul.f32.gmra.mxu0 %v340
      %v3279 = vpop.f32.mrf.mxu0
      %v3280 = vadd.f32 %v3260, %v3279
      %3281 = vmatmul.f32.gmra.mxu0 %v341
      %v3282 = vpop.f32.mrf.mxu0
      %v3283 = vadd.f32 %v3261, %v3282
      %3284 = vdwg.mxu0
      %3285 = vst [vmem:[%s217] sm:$0xff] %v3280
      %3286 = vst [vmem:[%s217 + $0x8] sm:$0xff] %v3283
      %p3287 = scmp.lt.s32.totalorder %s19, 1
      %s3288 = scalar_select %p3287, %s19, 1
      %p3289 = scmp.lt.s32.totalorder %s20, 0
      %s3290 = scalar_select %p3289, %s20, 0
      %s3291 = smul.addr %s3288, 2
      %s3292 = sadd.s32 %s3290, %s3291
      %s3293 = smul.addr %s3292, 8
      %s3294 = scalar_lea.vmem %s4, %s3293
      // Predicated region
      $region41: #{hspa_forward.1} parent=35 // pred_check
        %p3295 = pneg %p136
      $region42: #{hspa_forward.1} parent=35 // pred_check_branch
        %3297 = sbr.rel (%p3295) target = $region44
      $region43: #{hspa_forward.1} parent=35 // pred_region
        _
      $region44: #{hspa_forward.1} parent=35 // pred_fallthru
        _
    $region36: #{hspa_forward.1} parent=5 // pred_fallthru
      _
    %p3298 = scmp.le.s32.totalorder 2, %s10
    // Predicated region
    $region45: #{hspa_forward.1} parent=5 // pred_check
      %p3299 = pneg %p3298
    $region46: #{hspa_forward.1} parent=5 // pred_check_branch
      %3301 = sbr.rel (%p3299) target = $region48
    $region47: #{hspa_forward.1} parent=5 // pred_region
      %s3302 = ssub.s32 %s10, 2
      // Predicated region
      $region49: #{hspa_forward.1} parent=47 // pred_check
        %p3303 = pneg %p142
      $region50: #{hspa_forward.1} parent=47 // pred_check_branch
        %3305 = sbr.rel (%p3303) target = $region52
      $region51: #{hspa_forward.1} parent=47 // pred_region
        %p3306 = scmp.lt.s32.totalorder %s21, 1
        %s3307 = scalar_select %p3306, %s21, 1
        %p3308 = scmp.lt.s32.totalorder %s22, 0
        %s3309 = scalar_select %p3308, %s22, 0
        %s3310 = smul.addr %s3307, 2
        %s3311 = sadd.s32 %s3309, %s3310
        %s3312 = smul.addr %s3311, 8
        %s3313 = scalar_lea.vmem %s4, %s3312
      $region52: #{hspa_forward.1} parent=47 // pred_fallthru
        _
    $region48: #{hspa_forward.1} parent=5 // pred_fallthru
      _
  $region6: #{hspa_forward.1} parent=0 // loop_footer
    %s14 = sadd.s32 1, %s10
  $region7: #{hspa_forward.1} parent=0 // loop_footer_branch
    %9 = sbr.rel target = $region3
  $region8: #{hspa_forward.1} parent=0 // loop_exit
    _

</llo_original>
